<compile_context>
chip_gen: v6e
topology: v6e:2x2x1
jax: 0.10.0
libtpu: 0.0.40
codegen_flags: <defaults>
</compile_context>

<pallas_src>
import jax
import jax.numpy as jnp
from jax.experimental import pallas as pl
from jax.experimental.pallas import tpu as pltpu


def _gcn_normalize_pooled(adj, n):
    """PyG DenseGCNConv(add_loop=True, improved=True) normalization of the pooled adj:
       diag := 2, deg = rowsum.clamp(min=1), A_hat = D^-1/2 A D^-1/2.
       Diag-matmuls apply D^-1/2 on both sides (avoids an in-kernel vector transpose)."""
    row = jax.lax.broadcasted_iota(jnp.int32, (n, n), 0)
    col = jax.lax.broadcasted_iota(jnp.int32, (n, n), 1)
    eye = row == col
    adj_loop = jnp.where(eye, 2.0, adj)
    deg = jnp.maximum(jnp.sum(adj_loop, axis=-1, keepdims=True), 1.0)   # (n, 1)
    dinv = jax.lax.rsqrt(deg)                                           # (n, 1)
    d_mat = jnp.where(eye, 1.0, 0.0) * dinv                             # diag(dinv)
    return jnp.dot(jnp.dot(d_mat, adj_loop, preferred_element_type=jnp.float32),
                   d_mat, preferred_element_type=jnp.float32)


def baseline_pool_kernel(x_ref, adjnt_ref, adj_ref,
                         w1p_ref, b1p_ref,
                         w1e_ref, b1e_ref,
                         w2e_ref, b2e_ref,
                         wl1_ref, bl1_ref,
                         wl2_ref, bl2_ref,
                         o_ref, feat_ref):
    tb = x_ref.shape[0]            # graphs in this batch tile
    c = w1p_ref.shape[1]           # cluster_num
    h = w1e_ref.shape[1]           # hidden_channels

    adjnt = adjnt_ref[...]         # (N, N) transposed GCN-normalized adjacency (shared)
    adj = adj_ref[...]             # (N, N) raw adjacency (diff-pool uses it unnormalized)
    w1p = w1p_ref[...]; b1p = b1p_ref[...]
    w1e = w1e_ref[...]; b1e = b1e_ref[...]
    w2e = w2e_ref[...]; b2e = b2e_ref[...]

    # Shared conv1 propagation.  F_in == 1, so A_hat @ (x W) == (A_hat @ x) W.
    # One (TB, N) @ (N, N) matmul for the whole tile: zT[b, :] = (A_hat @ x_b)^T.
    zT = jnp.dot(x_ref[...], adjnt, preferred_element_type=jnp.float32)      # (TB, N)

    for b in range(tb):
        zb = zT[b:b + 1, :]                                                  # (1, N)

        # Rank-1 outer products (A_hat x_b) w^T for conv1_pool / conv1_embed.
        s = jax.lax.dot_general(zb, w1p, (((0,), (0,)), ((), ())),
                                preferred_element_type=jnp.float32) + b1p    # (N, C)
        hf = jax.lax.dot_general(zb, w1e, (((0,), (0,)), ((), ())),
                                 preferred_element_type=jnp.float32) + b1e   # (N, H)
        hf = jnp.maximum(hf, 0.0)

        # dense_diff_pool: softmax over clusters; uses the RAW adjacency.
        m = jnp.max(s, axis=-1, keepdims=True)
        e = jnp.exp(s - m)
        s_soft = e * pl.reciprocal(jnp.sum(e, axis=-1, keepdims=True), approx=True)

        xp = jax.lax.dot_general(s_soft, hf, (((0,), (0,)), ((), ())),
                                 preferred_element_type=jnp.float32)         # (C, H)
        sa = jax.lax.dot_general(s_soft, adj, (((0,), (0,)), ((), ())),
                                 preferred_element_type=jnp.float32)         # (C, N)
        adjp = jnp.dot(sa, s_soft, preferred_element_type=jnp.float32)       # (C, C)

        # conv2_embed on the pooled graph (pooled adj differs per graph -> stays in-kernel).
        adjp_n = _gcn_normalize_pooled(adjp, c)
        x2 = jnp.dot(adjp_n,
                     jnp.dot(xp, w2e, preferred_element_type=jnp.float32),
                     preferred_element_type=jnp.float32) + b2e
        x2 = jnp.maximum(x2, 0.0)                                            # (C, H)

        # Row-major flatten (C, H) -> row b of the (TB, C*H) lin1 input scratch.
        for cc in range(c):
            feat_ref[b:b + 1, cc * h:(cc + 1) * h] = x2[cc:cc + 1, :]

    # Fused MLP head for the whole tile: ONE K = C*H matmul on a lane-dense 1024 width.
    rows = feat_ref[...]                                                     # (TB, C*H)
    y = jnp.dot(rows, wl1_ref[...], preferred_element_type=jnp.float32) + bl1_ref[...]
    y = jnp.maximum(y, 0.0)
    # TODO(synk): F.dropout after lin1 omitted — inference (eval) semantics.
    out = jnp.dot(y, wl2_ref[...], preferred_element_type=jnp.float32) + bl2_ref[...]
    o_ref[...] = jnp.clip(out, 0.0, 110.0)


def baseline_model_pool_forward(x_dense, adj, params, *, max_batch_tile=8, lin1_pad=1024):
    """x_dense: (B, N, 1) dense node features; adj: (N, N) shared dense adjacency."""
    B, N, F = x_dense.shape
    assert F == 1, "BaselineModelPool uses 1-dim node features"
    w1p, b1p, w1e, b1e, w2e, b2e, wl1, bl1, wl2, bl2 = params
    C = w1p.shape[1]
    H = w1e.shape[1]
    OUT = wl2.shape[1]
    CH = C * H
    L = wl1.shape[1]                       # 1000
    assert lin1_pad >= L

    # --- hoisted: GCN normalization of the shared adjacency (improved=True: diag := 2).
    adj = adj.astype(jnp.float32)
    eye = jnp.eye(N, dtype=bool)
    adj_loop = jnp.where(eye, 2.0, adj)
    deg = jnp.maximum(jnp.sum(adj_loop, axis=-1), 1.0)
    dinv = jax.lax.rsqrt(deg)
    adj_norm_t = (adj_loop * dinv[:, None] * dinv[None, :]).T     # pass A_hat^T

    # --- pad lin1/lin2 to a lane-dense width (1000 -> 1024); exact (zero padding).
    # (bf16 weight storage would further halve the wl1 DMA; kept f32 for exact semantics.)
    wl1_p = jnp.zeros((CH, lin1_pad), jnp.float32).at[:, :L].set(wl1)
    bl1_p = jnp.zeros((1, lin1_pad), jnp.float32).at[:, :L].set(bl1)
    wl2_p = jnp.zeros((lin1_pad, OUT), jnp.float32).at[:L, :].set(wl2)

    # --- batch tiling: whole batch in one step when small, else tiles of `max_batch_tile`.
    TB = B if B <= max_batch_tile else max_batch_tile
    B_pad = ((B + TB - 1) // TB) * TB
    x2d = x_dense[..., 0].astype(jnp.float32)                     # (B, N)
    if B_pad != B:
        x2d = jnp.concatenate([x2d, jnp.zeros((B_pad - B, N), jnp.float32)], axis=0)

    out = pl.pallas_call(
        baseline_pool_kernel,
        out_shape=jax.ShapeDtypeStruct((B_pad, OUT), jnp.float32),
        grid=(B_pad // TB,),
        in_specs=[
            pl.BlockSpec((TB, N), lambda i: (i, 0)),              # x (batch tile)
            pl.BlockSpec((N, N), lambda i: (0, 0)),               # A_hat^T (shared, hoisted)
            pl.BlockSpec((N, N), lambda i: (0, 0)),               # raw adjacency (shared)
            pl.BlockSpec((1, C), lambda i: (0, 0)),               # conv1_pool W
            pl.BlockSpec((1, C), lambda i: (0, 0)),               # conv1_pool b
            pl.BlockSpec((1, H), lambda i: (0, 0)),               # conv1_embed W
            pl.BlockSpec((1, H), lambda i: (0, 0)),               # conv1_embed b
            pl.BlockSpec((H, H), lambda i: (0, 0)),               # conv2_embed W
            pl.BlockSpec((1, H), lambda i: (0, 0)),               # conv2_embed b
            pl.BlockSpec((CH, lin1_pad), lambda i: (0, 0)),       # lin1 W (padded to 1024)
            pl.BlockSpec((1, lin1_pad), lambda i: (0, 0)),        # lin1 b (padded)
            pl.BlockSpec((lin1_pad, OUT), lambda i: (0, 0)),      # lin2 W (padded)
            pl.BlockSpec((1, OUT), lambda i: (0, 0)),             # lin2 b
        ],
        out_specs=pl.BlockSpec((TB, OUT), lambda i: (i, 0)),
        scratch_shapes=[pltpu.VMEM((TB, CH), jnp.float32)],       # flattened lin1 features
        compiler_params=pltpu.CompilerParams(
            dimension_semantics=("parallel",)),                   # v7x: shard tiles over 2 TCs
    )(x2d, adj_norm_t, adj, w1p, b1p, w1e, b1e, w2e, b2e, wl1_p, bl1_p, wl2_p, bl2)

    # torch.squeeze on the [B, out_size] result (padded rows dropped).
    return jnp.squeeze(out[:B])


if __name__ == "__main__":
    # module hyperparams (small): hidden_channels=32, input_size=16,
    # out_size=4, cluster_num=8, final_pool='None'; batch of 2 graphs.
    B, N, H, C, OUT = 2, 16, 32, 8, 4
    key = jax.random.PRNGKey(0)
    ks = jax.random.split(key, 16)

    # ---- synthetic PyG-style graph inputs ----
    E = 24                                                 # edges per graph
    src = jax.random.randint(ks[0], (E,), 0, N)
    dst = jax.random.randint(ks[1], (E,), 0, N)
    edge_index = jnp.concatenate(
        [jnp.stack([src + b * N, dst + b * N]) for b in range(B)], axis=1)  # (2, B*E)
    edge_attr = jax.random.uniform(ks[2], (B * E, 1), jnp.float32)
    batch = jnp.repeat(jnp.arange(B), N)                   # (B*N,)
    x_nodes = jax.random.normal(ks[3], (B * N, 1), jnp.float32)

    # ---- glue replicating the PyTorch adjacency / dense-batch construction ----
    num_graphs = int(batch.max()) + 1
    keep_e = edge_index.shape[1] // num_graphs
    ei = edge_index[:, :keep_e]                            # first graph's edge slice
    ea = jnp.squeeze(edge_attr[: edge_attr.shape[0] // num_graphs])
    adj = jnp.zeros((N, N), jnp.float32).at[ei[0], ei[1]].add(ea)   # to_dense_adj
    x_dense = x_nodes.reshape(B, N, 1)                     # to_dense_batch (full graphs)

    # ---- deterministic synthetic parameters ----
    def p(k, shape, scale=0.1):
        return scale * jax.random.normal(k, shape, jnp.float32)

    w1p, b1p = p(ks[4], (1, C)), p(ks[5], (1, C))          # DenseGCNConv(1, C)
    w1e, b1e = p(ks[6], (1, H)), p(ks[7], (1, H))          # DenseGCNConv(1, H)
    w2e, b2e = p(ks[8], (H, H)), p(ks[9], (1, H))          # DenseGCNConv(H, H)
    wl1 = p(ks[10], (C * H, 1000))                         # Linear(C*H, 1000) weight [in,out]
    bl1 = p(ks[11], (1, 1000))
    wl2 = p(ks[12], (1000, OUT))                           # Linear(1000, OUT)
    bl2 = p(ks[13], (1, OUT))

    out = baseline_model_pool_forward(
        x_dense, adj, (w1p, b1p, w1e, b1e, w2e, b2e, wl1, bl1, wl2, bl2))
    jax.block_until_ready(out)
    print("KERNEL_OK")
</pallas_src>

<mosaic_0001>
module attributes {stable_mosaic.version = 11 : i64} {
  func.func @baseline_pool_kernel(%arg0: i32, %arg1: memref<2x16xf32, #tpu.memory_space<vmem>>, %arg2: memref<16x16xf32, #tpu.memory_space<vmem>>, %arg3: memref<16x16xf32, #tpu.memory_space<vmem>>, %arg4: memref<1x8xf32, #tpu.memory_space<vmem>>, %arg5: memref<1x8xf32, #tpu.memory_space<vmem>>, %arg6: memref<1x32xf32, #tpu.memory_space<vmem>>, %arg7: memref<1x32xf32, #tpu.memory_space<vmem>>, %arg8: memref<32x32xf32, #tpu.memory_space<vmem>>, %arg9: memref<1x32xf32, #tpu.memory_space<vmem>>, %arg10: memref<256x1024xf32, #tpu.memory_space<vmem>>, %arg11: memref<1x1024xf32, #tpu.memory_space<vmem>>, %arg12: memref<1024x4xf32, #tpu.memory_space<vmem>>, %arg13: memref<1x4xf32, #tpu.memory_space<vmem>>, %arg14: memref<2x4xf32, #tpu.memory_space<vmem>>, %arg15: memref<2x256xf32, #tpu.memory_space<vmem>>) attributes {dimension_semantics = [#tpu.dimension_semantics<parallel>], iteration_bounds = array<i64: 1>, scalar_prefetch = 0 : i64, scratch_operands = 1 : i64, tpu.core_type = #tpu.core_type<tc>, window_params = [{transform_indices = @transform_0, window_bounds = array<i64: 2, 16>}, {pipeline_mode = #tpu.pipeline_mode<synchronous>, transform_indices = @transform_1, window_bounds = array<i64: 16, 16>}, {pipeline_mode = #tpu.pipeline_mode<synchronous>, transform_indices = @transform_2, window_bounds = array<i64: 16, 16>}, {pipeline_mode = #tpu.pipeline_mode<synchronous>, transform_indices = @transform_3, window_bounds = array<i64: 1, 8>}, {pipeline_mode = #tpu.pipeline_mode<synchronous>, transform_indices = @transform_4, window_bounds = array<i64: 1, 8>}, {pipeline_mode = #tpu.pipeline_mode<synchronous>, transform_indices = @transform_5, window_bounds = array<i64: 1, 32>}, {pipeline_mode = #tpu.pipeline_mode<synchronous>, transform_indices = @transform_6, window_bounds = array<i64: 1, 32>}, {pipeline_mode = #tpu.pipeline_mode<synchronous>, transform_indices = @transform_7, window_bounds = array<i64: 32, 32>}, {pipeline_mode = #tpu.pipeline_mode<synchronous>, transform_indices = @transform_8, window_bounds = array<i64: 1, 32>}, {pipeline_mode = #tpu.pipeline_mode<synchronous>, transform_indices = @transform_9, window_bounds = array<i64: 256, 1024>}, {pipeline_mode = #tpu.pipeline_mode<synchronous>, transform_indices = @transform_10, window_bounds = array<i64: 1, 1024>}, {pipeline_mode = #tpu.pipeline_mode<synchronous>, transform_indices = @transform_11, window_bounds = array<i64: 1024, 4>}, {pipeline_mode = #tpu.pipeline_mode<synchronous>, transform_indices = @transform_12, window_bounds = array<i64: 1, 4>}, {transform_indices = @transform_13, window_bounds = array<i64: 2, 4>}]} {
    %c0 = arith.constant 0 : index
    %c0_0 = arith.constant 0 : index
    %0 = vector.load %arg2[%c0, %c0_0] : memref<16x16xf32, #tpu.memory_space<vmem>>, vector<16x16xf32>
    %c0_1 = arith.constant 0 : index
    %c0_2 = arith.constant 0 : index
    %1 = vector.load %arg3[%c0_1, %c0_2] : memref<16x16xf32, #tpu.memory_space<vmem>>, vector<16x16xf32>
    %c0_3 = arith.constant 0 : index
    %c0_4 = arith.constant 0 : index
    %2 = vector.load %arg4[%c0_3, %c0_4] : memref<1x8xf32, #tpu.memory_space<vmem>>, vector<1x8xf32>
    %c0_5 = arith.constant 0 : index
    %c0_6 = arith.constant 0 : index
    %3 = vector.load %arg5[%c0_5, %c0_6] : memref<1x8xf32, #tpu.memory_space<vmem>>, vector<1x8xf32>
    %c0_7 = arith.constant 0 : index
    %c0_8 = arith.constant 0 : index
    %4 = vector.load %arg6[%c0_7, %c0_8] : memref<1x32xf32, #tpu.memory_space<vmem>>, vector<1x32xf32>
    %c0_9 = arith.constant 0 : index
    %c0_10 = arith.constant 0 : index
    %5 = vector.load %arg7[%c0_9, %c0_10] : memref<1x32xf32, #tpu.memory_space<vmem>>, vector<1x32xf32>
    %c0_11 = arith.constant 0 : index
    %c0_12 = arith.constant 0 : index
    %6 = vector.load %arg8[%c0_11, %c0_12] : memref<32x32xf32, #tpu.memory_space<vmem>>, vector<32x32xf32>
    %c0_13 = arith.constant 0 : index
    %c0_14 = arith.constant 0 : index
    %7 = vector.load %arg9[%c0_13, %c0_14] : memref<1x32xf32, #tpu.memory_space<vmem>>, vector<1x32xf32>
    %c0_15 = arith.constant 0 : index
    %c0_16 = arith.constant 0 : index
    %8 = vector.load %arg1[%c0_15, %c0_16] : memref<2x16xf32, #tpu.memory_space<vmem>>, vector<2x16xf32>
    %cst = arith.constant dense<0.000000e+00> : vector<2x16xf32>
    %9 = tpu.matmul %8, %0, %cst {dimension_numbers = #tpu.dot_dimension_numbers<[1], [0], [0], [1], [0, 0, 1, 1], [], []>} : vector<2x16xf32>, vector<16x16xf32>, vector<2x16xf32> -> vector<2x16xf32>
    %10 = vector.extract_strided_slice %9 {offsets = [0, 0], sizes = [1, 16], strides = [1, 1]} : vector<2x16xf32> to vector<1x16xf32>
    %cst_17 = arith.constant dense<0.000000e+00> : vector<16x8xf32>
    %11 = tpu.matmul %10, %2, %cst_17 {dimension_numbers = #tpu.dot_dimension_numbers<[0], [0], [1], [1], [0, 1, 1, 1], [], []>} : vector<1x16xf32>, vector<1x8xf32>, vector<16x8xf32> -> vector<16x8xf32>
    %12 = vector.broadcast %3 : vector<1x8xf32> to vector<16x8xf32>
    %13 = arith.addf %11, %12 : vector<16x8xf32>
    %cst_18 = arith.constant dense<0.000000e+00> : vector<16x32xf32>
    %14 = tpu.matmul %10, %4, %cst_18 {dimension_numbers = #tpu.dot_dimension_numbers<[0], [0], [1], [1], [0, 1, 1, 1], [], []>} : vector<1x16xf32>, vector<1x32xf32>, vector<16x32xf32> -> vector<16x32xf32>
    %15 = vector.broadcast %5 : vector<1x32xf32> to vector<16x32xf32>
    %16 = arith.addf %14, %15 : vector<16x32xf32>
    %cst_19 = arith.constant 0.000000e+00 : f32
    %17 = vector.broadcast %cst_19 : f32 to vector<16x32xf32>
    %18 = arith.maximumf %16, %17 : vector<16x32xf32>
    %cst_20 = arith.constant dense<0xFF800000> : vector<16xf32>
    %19 = vector.multi_reduction <maximumf>, %13, %cst_20 [1] : vector<16x8xf32> to vector<16xf32>
    %20 = vector.shape_cast %19 : vector<16xf32> to vector<16x1xf32>
    %21 = vector.broadcast %20 : vector<16x1xf32> to vector<16x8xf32>
    %22 = arith.subf %13, %21 : vector<16x8xf32>
    %23 = math.exp %22 : vector<16x8xf32>
    %cst_21 = arith.constant dense<0.000000e+00> : vector<16xf32>
    %24 = vector.multi_reduction <add>, %23, %cst_21 [1] : vector<16x8xf32> to vector<16xf32>
    %25 = vector.shape_cast %24 : vector<16xf32> to vector<16x1xf32>
    %26 = tpu.reciprocal %25 {approx = true} : vector<16x1xf32> -> vector<16x1xf32>
    %27 = vector.broadcast %26 : vector<16x1xf32> to vector<16x8xf32>
    %28 = arith.mulf %23, %27 : vector<16x8xf32>
    %cst_22 = arith.constant dense<0.000000e+00> : vector<8x32xf32>
    %29 = tpu.matmul %28, %18, %cst_22 {dimension_numbers = #tpu.dot_dimension_numbers<[0], [0], [1], [1], [0, 1, 1, 1], [], []>} : vector<16x8xf32>, vector<16x32xf32>, vector<8x32xf32> -> vector<8x32xf32>
    %cst_23 = arith.constant dense<0.000000e+00> : vector<8x16xf32>
    %30 = tpu.matmul %28, %1, %cst_23 {dimension_numbers = #tpu.dot_dimension_numbers<[0], [0], [1], [1], [0, 1, 1, 1], [], []>} : vector<16x8xf32>, vector<16x16xf32>, vector<8x16xf32> -> vector<8x16xf32>
    %cst_24 = arith.constant dense<0.000000e+00> : vector<8x8xf32>
    %31 = tpu.matmul %30, %28, %cst_24 {dimension_numbers = #tpu.dot_dimension_numbers<[1], [0], [0], [1], [0, 0, 1, 1], [], []>} : vector<8x16xf32>, vector<16x8xf32>, vector<8x8xf32> -> vector<8x8xf32>
    %32 = tpu.iota {dimensions = array<i32: 0>} : vector<8x8xi32>
    %33 = tpu.iota {dimensions = array<i32: 1>} : vector<8x8xi32>
    %34 = arith.cmpi eq, %32, %33 : vector<8x8xi32>
    %cst_25 = arith.constant 2.000000e+00 : f32
    %35 = vector.broadcast %cst_25 : f32 to vector<8x8xf32>
    %36 = arith.select %34, %35, %31 : vector<8x8xi1>, vector<8x8xf32>
    %cst_26 = arith.constant dense<0.000000e+00> : vector<8xf32>
    %37 = vector.multi_reduction <add>, %36, %cst_26 [1] : vector<8x8xf32> to vector<8xf32>
    %38 = vector.shape_cast %37 : vector<8xf32> to vector<8x1xf32>
    %cst_27 = arith.constant 1.000000e+00 : f32
    %39 = vector.broadcast %cst_27 : f32 to vector<8x1xf32>
    %40 = arith.maximumf %38, %39 : vector<8x1xf32>
    %41 = math.rsqrt %40 : vector<8x1xf32>
    %cst_28 = arith.constant 1.000000e+00 : f32
    %cst_29 = arith.constant 0.000000e+00 : f32
    %42 = vector.broadcast %cst_28 : f32 to vector<8x8xf32>
    %43 = vector.broadcast %cst_29 : f32 to vector<8x8xf32>
    %44 = arith.select %34, %42, %43 : vector<8x8xi1>, vector<8x8xf32>
    %45 = vector.broadcast %41 : vector<8x1xf32> to vector<8x8xf32>
    %46 = arith.mulf %44, %45 : vector<8x8xf32>
    %cst_30 = arith.constant dense<0.000000e+00> : vector<8x8xf32>
    %47 = tpu.matmul %46, %36, %cst_30 {dimension_numbers = #tpu.dot_dimension_numbers<[1], [0], [0], [1], [0, 0, 1, 1], [], []>} : vector<8x8xf32>, vector<8x8xf32>, vector<8x8xf32> -> vector<8x8xf32>
    %cst_31 = arith.constant dense<0.000000e+00> : vector<8x8xf32>
    %48 = tpu.matmul %47, %46, %cst_31 {dimension_numbers = #tpu.dot_dimension_numbers<[1], [0], [0], [1], [0, 0, 1, 1], [], []>} : vector<8x8xf32>, vector<8x8xf32>, vector<8x8xf32> -> vector<8x8xf32>
    %cst_32 = arith.constant dense<0.000000e+00> : vector<8x32xf32>
    %49 = tpu.matmul %29, %6, %cst_32 {dimension_numbers = #tpu.dot_dimension_numbers<[1], [0], [0], [1], [0, 0, 1, 1], [], []>} : vector<8x32xf32>, vector<32x32xf32>, vector<8x32xf32> -> vector<8x32xf32>
    %cst_33 = arith.constant dense<0.000000e+00> : vector<8x32xf32>
    %50 = tpu.matmul %48, %49, %cst_33 {dimension_numbers = #tpu.dot_dimension_numbers<[1], [0], [0], [1], [0, 0, 1, 1], [], []>} : vector<8x8xf32>, vector<8x32xf32>, vector<8x32xf32> -> vector<8x32xf32>
    %51 = vector.broadcast %7 : vector<1x32xf32> to vector<8x32xf32>
    %52 = arith.addf %50, %51 : vector<8x32xf32>
    %cst_34 = arith.constant 0.000000e+00 : f32
    %53 = vector.broadcast %cst_34 : f32 to vector<8x32xf32>
    %54 = arith.maximumf %52, %53 : vector<8x32xf32>
    %55 = vector.extract_strided_slice %54 {offsets = [0, 0], sizes = [1, 32], strides = [1, 1]} : vector<8x32xf32> to vector<1x32xf32>
    %c0_35 = arith.constant 0 : index
    %c0_36 = arith.constant 0 : index
    %56 = vector.load %arg15[%c0_35, %c0_36] : memref<2x256xf32, #tpu.memory_space<vmem>>, vector<1x32xf32>
    tpu.vector_store %arg15[%c0_35, %c0_36], %55 {strides = array<i32>} : memref<2x256xf32, #tpu.memory_space<vmem>>, vector<1x32xf32>,
    %57 = vector.extract_strided_slice %54 {offsets = [1, 0], sizes = [1, 32], strides = [1, 1]} : vector<8x32xf32> to vector<1x32xf32>
    %c0_37 = arith.constant 0 : index
    %c32 = arith.constant 32 : index
    %58 = vector.load %arg15[%c0_37, %c32] : memref<2x256xf32, #tpu.memory_space<vmem>>, vector<1x32xf32>
    tpu.vector_store %arg15[%c0_37, %c32], %57 {strides = array<i32>} : memref<2x256xf32, #tpu.memory_space<vmem>>, vector<1x32xf32>,
    %59 = vector.extract_strided_slice %54 {offsets = [2, 0], sizes = [1, 32], strides = [1, 1]} : vector<8x32xf32> to vector<1x32xf32>
    %c0_38 = arith.constant 0 : index
    %c64 = arith.constant 64 : index
    %60 = vector.load %arg15[%c0_38, %c64] : memref<2x256xf32, #tpu.memory_space<vmem>>, vector<1x32xf32>
    tpu.vector_store %arg15[%c0_38, %c64], %59 {strides = array<i32>} : memref<2x256xf32, #tpu.memory_space<vmem>>, vector<1x32xf32>,
    %61 = vector.extract_strided_slice %54 {offsets = [3, 0], sizes = [1, 32], strides = [1, 1]} : vector<8x32xf32> to vector<1x32xf32>
    %c0_39 = arith.constant 0 : index
    %c96 = arith.constant 96 : index
    %62 = vector.load %arg15[%c0_39, %c96] : memref<2x256xf32, #tpu.memory_space<vmem>>, vector<1x32xf32>
    tpu.vector_store %arg15[%c0_39, %c96], %61 {strides = array<i32>} : memref<2x256xf32, #tpu.memory_space<vmem>>, vector<1x32xf32>,
    %63 = vector.extract_strided_slice %54 {offsets = [4, 0], sizes = [1, 32], strides = [1, 1]} : vector<8x32xf32> to vector<1x32xf32>
    %c0_40 = arith.constant 0 : index
    %c128 = arith.constant 128 : index
    %64 = vector.load %arg15[%c0_40, %c128] : memref<2x256xf32, #tpu.memory_space<vmem>>, vector<1x32xf32>
    tpu.vector_store %arg15[%c0_40, %c128], %63 {strides = array<i32>} : memref<2x256xf32, #tpu.memory_space<vmem>>, vector<1x32xf32>,
    %65 = vector.extract_strided_slice %54 {offsets = [5, 0], sizes = [1, 32], strides = [1, 1]} : vector<8x32xf32> to vector<1x32xf32>
    %c0_41 = arith.constant 0 : index
    %c160 = arith.constant 160 : index
    %66 = vector.load %arg15[%c0_41, %c160] : memref<2x256xf32, #tpu.memory_space<vmem>>, vector<1x32xf32>
    tpu.vector_store %arg15[%c0_41, %c160], %65 {strides = array<i32>} : memref<2x256xf32, #tpu.memory_space<vmem>>, vector<1x32xf32>,
    %67 = vector.extract_strided_slice %54 {offsets = [6, 0], sizes = [1, 32], strides = [1, 1]} : vector<8x32xf32> to vector<1x32xf32>
    %c0_42 = arith.constant 0 : index
    %c192 = arith.constant 192 : index
    %68 = vector.load %arg15[%c0_42, %c192] : memref<2x256xf32, #tpu.memory_space<vmem>>, vector<1x32xf32>
    tpu.vector_store %arg15[%c0_42, %c192], %67 {strides = array<i32>} : memref<2x256xf32, #tpu.memory_space<vmem>>, vector<1x32xf32>,
    %69 = vector.extract_strided_slice %54 {offsets = [7, 0], sizes = [1, 32], strides = [1, 1]} : vector<8x32xf32> to vector<1x32xf32>
    %c0_43 = arith.constant 0 : index
    %c224 = arith.constant 224 : index
    %70 = vector.load %arg15[%c0_43, %c224] : memref<2x256xf32, #tpu.memory_space<vmem>>, vector<1x32xf32>
    tpu.vector_store %arg15[%c0_43, %c224], %69 {strides = array<i32>} : memref<2x256xf32, #tpu.memory_space<vmem>>, vector<1x32xf32>,
    %71 = vector.extract_strided_slice %9 {offsets = [1, 0], sizes = [1, 16], strides = [1, 1]} : vector<2x16xf32> to vector<1x16xf32>
    %cst_44 = arith.constant dense<0.000000e+00> : vector<16x8xf32>
    %72 = tpu.matmul %71, %2, %cst_44 {dimension_numbers = #tpu.dot_dimension_numbers<[0], [0], [1], [1], [0, 1, 1, 1], [], []>} : vector<1x16xf32>, vector<1x8xf32>, vector<16x8xf32> -> vector<16x8xf32>
    %73 = vector.broadcast %3 : vector<1x8xf32> to vector<16x8xf32>
    %74 = arith.addf %72, %73 : vector<16x8xf32>
    %cst_45 = arith.constant dense<0.000000e+00> : vector<16x32xf32>
    %75 = tpu.matmul %71, %4, %cst_45 {dimension_numbers = #tpu.dot_dimension_numbers<[0], [0], [1], [1], [0, 1, 1, 1], [], []>} : vector<1x16xf32>, vector<1x32xf32>, vector<16x32xf32> -> vector<16x32xf32>
    %76 = vector.broadcast %5 : vector<1x32xf32> to vector<16x32xf32>
    %77 = arith.addf %75, %76 : vector<16x32xf32>
    %cst_46 = arith.constant 0.000000e+00 : f32
    %78 = vector.broadcast %cst_46 : f32 to vector<16x32xf32>
    %79 = arith.maximumf %77, %78 : vector<16x32xf32>
    %cst_47 = arith.constant dense<0xFF800000> : vector<16xf32>
    %80 = vector.multi_reduction <maximumf>, %74, %cst_47 [1] : vector<16x8xf32> to vector<16xf32>
    %81 = vector.shape_cast %80 : vector<16xf32> to vector<16x1xf32>
    %82 = vector.broadcast %81 : vector<16x1xf32> to vector<16x8xf32>
    %83 = arith.subf %74, %82 : vector<16x8xf32>
    %84 = math.exp %83 : vector<16x8xf32>
    %cst_48 = arith.constant dense<0.000000e+00> : vector<16xf32>
    %85 = vector.multi_reduction <add>, %84, %cst_48 [1] : vector<16x8xf32> to vector<16xf32>
    %86 = vector.shape_cast %85 : vector<16xf32> to vector<16x1xf32>
    %87 = tpu.reciprocal %86 {approx = true} : vector<16x1xf32> -> vector<16x1xf32>
    %88 = vector.broadcast %87 : vector<16x1xf32> to vector<16x8xf32>
    %89 = arith.mulf %84, %88 : vector<16x8xf32>
    %cst_49 = arith.constant dense<0.000000e+00> : vector<8x32xf32>
    %90 = tpu.matmul %89, %79, %cst_49 {dimension_numbers = #tpu.dot_dimension_numbers<[0], [0], [1], [1], [0, 1, 1, 1], [], []>} : vector<16x8xf32>, vector<16x32xf32>, vector<8x32xf32> -> vector<8x32xf32>
    %cst_50 = arith.constant dense<0.000000e+00> : vector<8x16xf32>
    %91 = tpu.matmul %89, %1, %cst_50 {dimension_numbers = #tpu.dot_dimension_numbers<[0], [0], [1], [1], [0, 1, 1, 1], [], []>} : vector<16x8xf32>, vector<16x16xf32>, vector<8x16xf32> -> vector<8x16xf32>
    %cst_51 = arith.constant dense<0.000000e+00> : vector<8x8xf32>
    %92 = tpu.matmul %91, %89, %cst_51 {dimension_numbers = #tpu.dot_dimension_numbers<[1], [0], [0], [1], [0, 0, 1, 1], [], []>} : vector<8x16xf32>, vector<16x8xf32>, vector<8x8xf32> -> vector<8x8xf32>
    %93 = tpu.iota {dimensions = array<i32: 0>} : vector<8x8xi32>
    %94 = tpu.iota {dimensions = array<i32: 1>} : vector<8x8xi32>
    %95 = arith.cmpi eq, %93, %94 : vector<8x8xi32>
    %cst_52 = arith.constant 2.000000e+00 : f32
    %96 = vector.broadcast %cst_52 : f32 to vector<8x8xf32>
    %97 = arith.select %95, %96, %92 : vector<8x8xi1>, vector<8x8xf32>
    %cst_53 = arith.constant dense<0.000000e+00> : vector<8xf32>
    %98 = vector.multi_reduction <add>, %97, %cst_53 [1] : vector<8x8xf32> to vector<8xf32>
    %99 = vector.shape_cast %98 : vector<8xf32> to vector<8x1xf32>
    %cst_54 = arith.constant 1.000000e+00 : f32
    %100 = vector.broadcast %cst_54 : f32 to vector<8x1xf32>
    %101 = arith.maximumf %99, %100 : vector<8x1xf32>
    %102 = math.rsqrt %101 : vector<8x1xf32>
    %cst_55 = arith.constant 1.000000e+00 : f32
    %cst_56 = arith.constant 0.000000e+00 : f32
    %103 = vector.broadcast %cst_55 : f32 to vector<8x8xf32>
    %104 = vector.broadcast %cst_56 : f32 to vector<8x8xf32>
    %105 = arith.select %95, %103, %104 : vector<8x8xi1>, vector<8x8xf32>
    %106 = vector.broadcast %102 : vector<8x1xf32> to vector<8x8xf32>
    %107 = arith.mulf %105, %106 : vector<8x8xf32>
    %cst_57 = arith.constant dense<0.000000e+00> : vector<8x8xf32>
    %108 = tpu.matmul %107, %97, %cst_57 {dimension_numbers = #tpu.dot_dimension_numbers<[1], [0], [0], [1], [0, 0, 1, 1], [], []>} : vector<8x8xf32>, vector<8x8xf32>, vector<8x8xf32> -> vector<8x8xf32>
    %cst_58 = arith.constant dense<0.000000e+00> : vector<8x8xf32>
    %109 = tpu.matmul %108, %107, %cst_58 {dimension_numbers = #tpu.dot_dimension_numbers<[1], [0], [0], [1], [0, 0, 1, 1], [], []>} : vector<8x8xf32>, vector<8x8xf32>, vector<8x8xf32> -> vector<8x8xf32>
    %cst_59 = arith.constant dense<0.000000e+00> : vector<8x32xf32>
    %110 = tpu.matmul %90, %6, %cst_59 {dimension_numbers = #tpu.dot_dimension_numbers<[1], [0], [0], [1], [0, 0, 1, 1], [], []>} : vector<8x32xf32>, vector<32x32xf32>, vector<8x32xf32> -> vector<8x32xf32>
    %cst_60 = arith.constant dense<0.000000e+00> : vector<8x32xf32>
    %111 = tpu.matmul %109, %110, %cst_60 {dimension_numbers = #tpu.dot_dimension_numbers<[1], [0], [0], [1], [0, 0, 1, 1], [], []>} : vector<8x8xf32>, vector<8x32xf32>, vector<8x32xf32> -> vector<8x32xf32>
    %112 = vector.broadcast %7 : vector<1x32xf32> to vector<8x32xf32>
    %113 = arith.addf %111, %112 : vector<8x32xf32>
    %cst_61 = arith.constant 0.000000e+00 : f32
    %114 = vector.broadcast %cst_61 : f32 to vector<8x32xf32>
    %115 = arith.maximumf %113, %114 : vector<8x32xf32>
    %116 = vector.extract_strided_slice %115 {offsets = [0, 0], sizes = [1, 32], strides = [1, 1]} : vector<8x32xf32> to vector<1x32xf32>
    %c1 = arith.constant 1 : index
    %c0_62 = arith.constant 0 : index
    %117 = vector.load %arg15[%c1, %c0_62] : memref<2x256xf32, #tpu.memory_space<vmem>>, vector<1x32xf32>
    tpu.vector_store %arg15[%c1, %c0_62], %116 {strides = array<i32>} : memref<2x256xf32, #tpu.memory_space<vmem>>, vector<1x32xf32>,
    %118 = vector.extract_strided_slice %115 {offsets = [1, 0], sizes = [1, 32], strides = [1, 1]} : vector<8x32xf32> to vector<1x32xf32>
    %c1_63 = arith.constant 1 : index
    %c32_64 = arith.constant 32 : index
    %119 = vector.load %arg15[%c1_63, %c32_64] : memref<2x256xf32, #tpu.memory_space<vmem>>, vector<1x32xf32>
    tpu.vector_store %arg15[%c1_63, %c32_64], %118 {strides = array<i32>} : memref<2x256xf32, #tpu.memory_space<vmem>>, vector<1x32xf32>,
    %120 = vector.extract_strided_slice %115 {offsets = [2, 0], sizes = [1, 32], strides = [1, 1]} : vector<8x32xf32> to vector<1x32xf32>
    %c1_65 = arith.constant 1 : index
    %c64_66 = arith.constant 64 : index
    %121 = vector.load %arg15[%c1_65, %c64_66] : memref<2x256xf32, #tpu.memory_space<vmem>>, vector<1x32xf32>
    tpu.vector_store %arg15[%c1_65, %c64_66], %120 {strides = array<i32>} : memref<2x256xf32, #tpu.memory_space<vmem>>, vector<1x32xf32>,
    %122 = vector.extract_strided_slice %115 {offsets = [3, 0], sizes = [1, 32], strides = [1, 1]} : vector<8x32xf32> to vector<1x32xf32>
    %c1_67 = arith.constant 1 : index
    %c96_68 = arith.constant 96 : index
    %123 = vector.load %arg15[%c1_67, %c96_68] : memref<2x256xf32, #tpu.memory_space<vmem>>, vector<1x32xf32>
    tpu.vector_store %arg15[%c1_67, %c96_68], %122 {strides = array<i32>} : memref<2x256xf32, #tpu.memory_space<vmem>>, vector<1x32xf32>,
    %124 = vector.extract_strided_slice %115 {offsets = [4, 0], sizes = [1, 32], strides = [1, 1]} : vector<8x32xf32> to vector<1x32xf32>
    %c1_69 = arith.constant 1 : index
    %c128_70 = arith.constant 128 : index
    %125 = vector.load %arg15[%c1_69, %c128_70] : memref<2x256xf32, #tpu.memory_space<vmem>>, vector<1x32xf32>
    tpu.vector_store %arg15[%c1_69, %c128_70], %124 {strides = array<i32>} : memref<2x256xf32, #tpu.memory_space<vmem>>, vector<1x32xf32>,
    %126 = vector.extract_strided_slice %115 {offsets = [5, 0], sizes = [1, 32], strides = [1, 1]} : vector<8x32xf32> to vector<1x32xf32>
    %c1_71 = arith.constant 1 : index
    %c160_72 = arith.constant 160 : index
    %127 = vector.load %arg15[%c1_71, %c160_72] : memref<2x256xf32, #tpu.memory_space<vmem>>, vector<1x32xf32>
    tpu.vector_store %arg15[%c1_71, %c160_72], %126 {strides = array<i32>} : memref<2x256xf32, #tpu.memory_space<vmem>>, vector<1x32xf32>,
    %128 = vector.extract_strided_slice %115 {offsets = [6, 0], sizes = [1, 32], strides = [1, 1]} : vector<8x32xf32> to vector<1x32xf32>
    %c1_73 = arith.constant 1 : index
    %c192_74 = arith.constant 192 : index
    %129 = vector.load %arg15[%c1_73, %c192_74] : memref<2x256xf32, #tpu.memory_space<vmem>>, vector<1x32xf32>
    tpu.vector_store %arg15[%c1_73, %c192_74], %128 {strides = array<i32>} : memref<2x256xf32, #tpu.memory_space<vmem>>, vector<1x32xf32>,
    %130 = vector.extract_strided_slice %115 {offsets = [7, 0], sizes = [1, 32], strides = [1, 1]} : vector<8x32xf32> to vector<1x32xf32>
    %c1_75 = arith.constant 1 : index
    %c224_76 = arith.constant 224 : index
    %131 = vector.load %arg15[%c1_75, %c224_76] : memref<2x256xf32, #tpu.memory_space<vmem>>, vector<1x32xf32>
    tpu.vector_store %arg15[%c1_75, %c224_76], %130 {strides = array<i32>} : memref<2x256xf32, #tpu.memory_space<vmem>>, vector<1x32xf32>,
    %c0_77 = arith.constant 0 : index
    %c0_78 = arith.constant 0 : index
    %132 = vector.load %arg15[%c0_77, %c0_78] : memref<2x256xf32, #tpu.memory_space<vmem>>, vector<2x256xf32>
    %c0_79 = arith.constant 0 : index
    %c0_80 = arith.constant 0 : index
    %133 = vector.load %arg10[%c0_79, %c0_80] : memref<256x1024xf32, #tpu.memory_space<vmem>>, vector<256x1024xf32>
    %cst_81 = arith.constant dense<0.000000e+00> : vector<2x1024xf32>
    %134 = tpu.matmul %132, %133, %cst_81 {dimension_numbers = #tpu.dot_dimension_numbers<[1], [0], [0], [1], [0, 0, 1, 1], [], []>} : vector<2x256xf32>, vector<256x1024xf32>, vector<2x1024xf32> -> vector<2x1024xf32>
    %c0_82 = arith.constant 0 : index
    %c0_83 = arith.constant 0 : index
    %135 = vector.load %arg11[%c0_82, %c0_83] : memref<1x1024xf32, #tpu.memory_space<vmem>>, vector<1x1024xf32>
    %136 = vector.broadcast %135 : vector<1x1024xf32> to vector<2x1024xf32>
    %137 = arith.addf %134, %136 : vector<2x1024xf32>
    %cst_84 = arith.constant 0.000000e+00 : f32
    %138 = vector.broadcast %cst_84 : f32 to vector<2x1024xf32>
    %139 = arith.maximumf %137, %138 : vector<2x1024xf32>
    %c0_85 = arith.constant 0 : index
    %c0_86 = arith.constant 0 : index
    %140 = vector.load %arg12[%c0_85, %c0_86] : memref<1024x4xf32, #tpu.memory_space<vmem>>, vector<1024x4xf32>
    %cst_87 = arith.constant dense<0.000000e+00> : vector<2x4xf32>
    %141 = tpu.matmul %139, %140, %cst_87 {dimension_numbers = #tpu.dot_dimension_numbers<[1], [0], [0], [1], [0, 0, 1, 1], [], []>} : vector<2x1024xf32>, vector<1024x4xf32>, vector<2x4xf32> -> vector<2x4xf32>
    %c0_88 = arith.constant 0 : index
    %c0_89 = arith.constant 0 : index
    %142 = vector.load %arg13[%c0_88, %c0_89] : memref<1x4xf32, #tpu.memory_space<vmem>>, vector<1x4xf32>
    %143 = vector.broadcast %142 : vector<1x4xf32> to vector<2x4xf32>
    %144 = arith.addf %141, %143 : vector<2x4xf32>
    %cst_90 = arith.constant 0.000000e+00 : f32
    %cst_91 = arith.constant 1.100000e+02 : f32
    %145 = vector.broadcast %cst_90 : f32 to vector<2x4xf32>
    %146 = arith.maximumf %145, %144 : vector<2x4xf32>
    %147 = vector.broadcast %cst_91 : f32 to vector<2x4xf32>
    %148 = arith.minimumf %147, %146 : vector<2x4xf32>
    %c0_92 = arith.constant 0 : index
    %c0_93 = arith.constant 0 : index
    %149 = vector.load %arg14[%c0_92, %c0_93] : memref<2x4xf32, #tpu.memory_space<vmem>>, vector<2x4xf32>
    tpu.vector_store %arg14[%c0_92, %c0_93], %148 {strides = array<i32>} : memref<2x4xf32, #tpu.memory_space<vmem>>, vector<2x4xf32>,
    return
  }
  func.func @transform_0(%arg0: i32) -> (i32, i32) {
    %c0_i32 = arith.constant 0 : i32
    %c0_i32_0 = arith.constant 0 : i32
    return %arg0, %c0_i32 : i32, i32
  }
  func.func @transform_1(%arg0: i32) -> (i32, i32) {
    %c0_i32 = arith.constant 0 : i32
    %c0_i32_0 = arith.constant 0 : i32
    %c0_i32_1 = arith.constant 0 : i32
    return %c0_i32, %c0_i32_0 : i32, i32
  }
  func.func @transform_2(%arg0: i32) -> (i32, i32) {
    %c0_i32 = arith.constant 0 : i32
    %c0_i32_0 = arith.constant 0 : i32
    %c0_i32_1 = arith.constant 0 : i32
    return %c0_i32, %c0_i32_0 : i32, i32
  }
  func.func @transform_3(%arg0: i32) -> (i32, i32) {
    %c0_i32 = arith.constant 0 : i32
    %c0_i32_0 = arith.constant 0 : i32
    %c0_i32_1 = arith.constant 0 : i32
    return %c0_i32, %c0_i32_0 : i32, i32
  }
  func.func @transform_4(%arg0: i32) -> (i32, i32) {
    %c0_i32 = arith.constant 0 : i32
    %c0_i32_0 = arith.constant 0 : i32
    %c0_i32_1 = arith.constant 0 : i32
    return %c0_i32, %c0_i32_0 : i32, i32
  }
  func.func @transform_5(%arg0: i32) -> (i32, i32) {
    %c0_i32 = arith.constant 0 : i32
    %c0_i32_0 = arith.constant 0 : i32
    %c0_i32_1 = arith.constant 0 : i32
    return %c0_i32, %c0_i32_0 : i32, i32
  }
  func.func @transform_6(%arg0: i32) -> (i32, i32) {
    %c0_i32 = arith.constant 0 : i32
    %c0_i32_0 = arith.constant 0 : i32
    %c0_i32_1 = arith.constant 0 : i32
    return %c0_i32, %c0_i32_0 : i32, i32
  }
  func.func @transform_7(%arg0: i32) -> (i32, i32) {
    %c0_i32 = arith.constant 0 : i32
    %c0_i32_0 = arith.constant 0 : i32
    %c0_i32_1 = arith.constant 0 : i32
    return %c0_i32, %c0_i32_0 : i32, i32
  }
  func.func @transform_8(%arg0: i32) -> (i32, i32) {
    %c0_i32 = arith.constant 0 : i32
    %c0_i32_0 = arith.constant 0 : i32
    %c0_i32_1 = arith.constant 0 : i32
    return %c0_i32, %c0_i32_0 : i32, i32
  }
  func.func @transform_9(%arg0: i32) -> (i32, i32) {
    %c0_i32 = arith.constant 0 : i32
    %c0_i32_0 = arith.constant 0 : i32
    %c0_i32_1 = arith.constant 0 : i32
    return %c0_i32, %c0_i32_0 : i32, i32
  }
  func.func @transform_10(%arg0: i32) -> (i32, i32) {
    %c0_i32 = arith.constant 0 : i32
    %c0_i32_0 = arith.constant 0 : i32
    %c0_i32_1 = arith.constant 0 : i32
    return %c0_i32, %c0_i32_0 : i32, i32
  }
  func.func @transform_11(%arg0: i32) -> (i32, i32) {
    %c0_i32 = arith.constant 0 : i32
    %c0_i32_0 = arith.constant 0 : i32
    %c0_i32_1 = arith.constant 0 : i32
    return %c0_i32, %c0_i32_0 : i32, i32
  }
  func.func @transform_12(%arg0: i32) -> (i32, i32) {
    %c0_i32 = arith.constant 0 : i32
    %c0_i32_0 = arith.constant 0 : i32
    %c0_i32_1 = arith.constant 0 : i32
    return %c0_i32, %c0_i32_0 : i32, i32
  }
  func.func @transform_13(%arg0: i32) -> (i32, i32) {
    %c0_i32 = arith.constant 0 : i32
    %c0_i32_0 = arith.constant 0 : i32
    return %arg0, %c0_i32 : i32, i32
  }
}

</mosaic_0001>

<llo_original>
// kernel: tpu_custom_call.1
$region0: #{tpu_custom_call.1}
  #allocation0 [shape = 'u32[]', space=smem, size = 0x4, offset = 0x4, fixed_abs, tag = 'smem constant byte address 0x4 - core index']
  #allocation1 [shape = 'u32[144,128]{1,0:T(1,128)}', space=vmem, size = 0x12000, scoped, tag = 'internal scratch']
  #allocation2 [shape = 'f32[2,256]{1,0:T(2,128)}', space=vmem, size = 0x800, scoped, tag = 'scratch operand']
  %s0 = inlined_call_operand.vmem [shape: f32[2,16], index: 0, kind: input, shape index: {}]
  %s1 = inlined_call_operand.vmem [shape: f32[16,16], index: 1, kind: input, shape index: {}]
  %s2 = inlined_call_operand.vmem [shape: f32[16,16], index: 2, kind: input, shape index: {}]
  %s3 = inlined_call_operand.vmem [shape: f32[1,8], index: 3, kind: input, shape index: {}]
  %s4 = inlined_call_operand.vmem [shape: f32[1,8], index: 4, kind: input, shape index: {}]
  %s5 = inlined_call_operand.vmem [shape: f32[1,32], index: 5, kind: input, shape index: {}]
  %s6 = inlined_call_operand.vmem [shape: f32[1,32], index: 6, kind: input, shape index: {}]
  %s7 = inlined_call_operand.vmem [shape: f32[32,32], index: 7, kind: input, shape index: {}]
  %s8 = inlined_call_operand.vmem [shape: f32[1,32], index: 8, kind: input, shape index: {}]
  %s9 = inlined_call_operand.hbm [shape: f32[256,1024], index: 9, kind: input, shape index: {}]
  %s10 = inlined_call_operand.vmem [shape: f32[1,1024], index: 10, kind: input, shape index: {}]
  %s11 = inlined_call_operand.vmem [shape: f32[1024,4], index: 11, kind: input, shape index: {}]
  %s12 = inlined_call_operand.vmem [shape: f32[1,4], index: 12, kind: input, shape index: {}]
  %s13 = inlined_call_operand.hbm [shape: f32[2,4], index: 13, kind: output, shape index: {}]
  %s14 = sld [smem:[#allocation0]]
  $region66: #{tpu_custom_call.1} parent=0
    _
  %s16 = ssub.s32 1, %s14
  %s17 = scalar_select 0, %s16, %s14
  $region1: #{tpu_custom_call.1} parent=0
    #allocation3 [shape = 'u8[1048576]{0}', space=vmem, size = 0x100000, scoped, tag = 'input window, operand 9, single buffered']
    #allocation4 [shape = 's32[1]{0}', space=sflag, size = 0x4, scoped, tag = 'scoped memory for tpu_custom_call.1']
    #allocation5 [shape = 's32[1]{0}', space=sflag, size = 0x4, scoped, tag = 'scoped memory for tpu_custom_call.1']
    #allocation6 [shape = 'u8[1024]{0}', space=vmem, size = 0x400, scoped, tag = 'output window, operand 0, single buffered']
    %18 = vsyncpa [#allocation4], 0
    %19 = vsyncpa [#allocation5], 0
    // Predicated region
    $region2: #{tpu_custom_call.1} parent=1 // pred_check
      _
    $region3: #{tpu_custom_call.1} parent=1 // pred_check_branch
      %21 = sbr.rel (0) target = $region5
    $region4: #{tpu_custom_call.1} parent=1 // pred_region
      _
    $region5: #{tpu_custom_call.1} parent=1 // pred_fallthru
      _
    // Predicated region
    $region6: #{tpu_custom_call.1} parent=1 // pred_check
      _
    $region7: #{tpu_custom_call.1} parent=1 // pred_check_branch
      %23 = sbr.rel (0) target = $region9
    $region8: #{tpu_custom_call.1} parent=1 // pred_region
      _
    $region9: #{tpu_custom_call.1} parent=1 // pred_fallthru
      _
    // Predicated region
    $region10: #{tpu_custom_call.1} parent=1 // pred_check
      _
    $region11: #{tpu_custom_call.1} parent=1 // pred_check_branch
      %25 = sbr.rel (0) target = $region13
    $region12: #{tpu_custom_call.1} parent=1 // pred_region
      _
    $region13: #{tpu_custom_call.1} parent=1 // pred_fallthru
      _
    // Predicated region
    $region14: #{tpu_custom_call.1} parent=1 // pred_check
      _
    $region15: #{tpu_custom_call.1} parent=1 // pred_check_branch
      %27 = sbr.rel (0) target = $region17
    $region16: #{tpu_custom_call.1} parent=1 // pred_region
      _
    $region17: #{tpu_custom_call.1} parent=1 // pred_fallthru
      _
    // Predicated region
    $region18: #{tpu_custom_call.1} parent=1 // pred_check
      _
    $region19: #{tpu_custom_call.1} parent=1 // pred_check_branch
      %29 = sbr.rel (0) target = $region21
    $region20: #{tpu_custom_call.1} parent=1 // pred_region
      _
    $region21: #{tpu_custom_call.1} parent=1 // pred_fallthru
      _
    // Predicated region
    $region22: #{tpu_custom_call.1} parent=1 // pred_check
      _
    $region23: #{tpu_custom_call.1} parent=1 // pred_check_branch
      %31 = sbr.rel (0) target = $region25
    $region24: #{tpu_custom_call.1} parent=1 // pred_region
      _
    $region25: #{tpu_custom_call.1} parent=1 // pred_fallthru
      _
    // Predicated region
    $region26: #{tpu_custom_call.1} parent=1 // pred_check
      _
    $region27: #{tpu_custom_call.1} parent=1 // pred_check_branch
      %33 = sbr.rel (0) target = $region29
    $region28: #{tpu_custom_call.1} parent=1 // pred_region
      _
    $region29: #{tpu_custom_call.1} parent=1 // pred_fallthru
      _
    // Predicated region
    $region30: #{tpu_custom_call.1} parent=1 // pred_check
      _
    $region31: #{tpu_custom_call.1} parent=1 // pred_check_branch
      %35 = sbr.rel (0) target = $region33
    $region32: #{tpu_custom_call.1} parent=1 // pred_region
      _
    $region33: #{tpu_custom_call.1} parent=1 // pred_fallthru
      _
    // Predicated region
    $region34: #{tpu_custom_call.1} parent=1 // pred_check
      _
    $region35: #{tpu_custom_call.1} parent=1 // pred_check_branch
      %37 = sbr.rel (0) target = $region37
    $region36: #{tpu_custom_call.1} parent=1 // pred_region
      _
    $region37: #{tpu_custom_call.1} parent=1 // pred_fallthru
      _
    // Predicated region
    $region38: #{tpu_custom_call.1} parent=1 // pred_check
      _
    $region39: #{tpu_custom_call.1} parent=1 // pred_check_branch
      %39 = sbr.rel (0) target = $region41
    $region40: #{tpu_custom_call.1} parent=1 // pred_region
      %s41 = ssub.s32 32768, 32768
      %42 = vsyncadd [#allocation4], %s41
      %s43 = sshll.u32 [#allocation3], 4
      %s44 = int_to_ptr.vmem [resolvable:$true] %s43
      %49 = dma.hbm_to_vmem [thread:$0]  %s9, 32768, %s44, [#allocation4], 1024, 1024, 64
    $region41: #{tpu_custom_call.1} parent=1 // pred_fallthru
      _
    // Predicated region
    $region42: #{tpu_custom_call.1} parent=1 // pred_check
      _
    $region43: #{tpu_custom_call.1} parent=1 // pred_check_branch
      %51 = sbr.rel (0) target = $region45
    $region44: #{tpu_custom_call.1} parent=1 // pred_region
      _
    $region45: #{tpu_custom_call.1} parent=1 // pred_fallthru
      _
    // Predicated region
    $region46: #{tpu_custom_call.1} parent=1 // pred_check
      _
    $region47: #{tpu_custom_call.1} parent=1 // pred_check_branch
      %53 = sbr.rel (0) target = $region49
    $region48: #{tpu_custom_call.1} parent=1 // pred_region
      _
    $region49: #{tpu_custom_call.1} parent=1 // pred_fallthru
      _
    // Predicated region
    $region50: #{tpu_custom_call.1} parent=1 // pred_check
      _
    $region51: #{tpu_custom_call.1} parent=1 // pred_check_branch
      %55 = sbr.rel (0) target = $region53
    $region52: #{tpu_custom_call.1} parent=1 // pred_region
      _
    $region53: #{tpu_custom_call.1} parent=1 // pred_fallthru
      _
    // Predicated region
    $region54: #{tpu_custom_call.1} parent=1 // pred_check
      _
    $region55: #{tpu_custom_call.1} parent=1 // pred_check_branch
      %57 = sbr.rel (0) target = $region57
    $region56: #{tpu_custom_call.1} parent=1 // pred_region
      %58 = dma.done [#allocation4], 32768
    $region57: #{tpu_custom_call.1} parent=1 // pred_fallthru
      _
    %v59 = vld [vmem:[%s1] sm:$0xff]
    %v60 = vld [vmem:[%s1 + $0x8] sm:$0xff]
    %v61 = vld [vmem:[%s2] sm:$0xff]
    %v62 = vld [vmem:[%s2 + $0x8] sm:$0xff]
    %v63 = vld [vmem:[%s3] sm:$0x1]
    %v64 = vld [vmem:[%s4] sm:$0x1]
    %v65 = vld [vmem:[%s5] sm:$0x1]
    %v66 = vld [vmem:[%s6] sm:$0x1]
    %v67 = vld [vmem:[%s7] sm:$0xff]
    %v68 = vld [vmem:[%s7 + $0x8] sm:$0xff]
    %v69 = vld [vmem:[%s7 + $0x10] sm:$0xff]
    %v70 = vld [vmem:[%s7 + $0x18] sm:$0xff]
    %v71 = vld [vmem:[%s8] sm:$0x1]
    %v72 = vld [vmem:[%s0] sm:$0x3]
    %vm73 = vcmask 130048
    %v75 = vsel %vm73, %v72, 0
    %77 = vmatprep.subr.mxu0 0.0
    %78 = vmatpush1.msra.mxu0 0.0
    %79 = vmatprep.subr.mxu0 0.0
    %80 = vmatpush1.msra.mxu0 0.0
    %81 = vmatprep.subr.mxu0 0.0
    %82 = vmatpush1.msra.mxu0 0.0
    %83 = vmatprep.subr.mxu0 0.0
    %84 = vmatpush1.msra.mxu0 0.0
    %85 = vmatprep.subr.mxu0 0.0
    %86 = vmatpush1.msra.mxu0 0.0
    %87 = vmatprep.subr.mxu0 0.0
    %88 = vmatpush1.msra.mxu0 0.0
    %89 = vmatprep.subr.mxu0 0.0
    %90 = vmatpush1.msra.mxu0 0.0
    %91 = vmatprep.subr.mxu0 0.0
    %92 = vmatpush1.msra.mxu0 0.0
    %93 = vmatprep.subr.mxu0 0.0
    %94 = vmatpush1.msra.mxu0 0.0
    %95 = vmatprep.subr.mxu0 0.0
    %96 = vmatpush1.msra.mxu0 0.0
    %97 = vmatprep.subr.mxu0 0.0
    %98 = vmatpush1.msra.mxu0 0.0
    %99 = vmatprep.subr.mxu0 0.0
    %100 = vmatpush1.msra.mxu0 0.0
    %101 = vmatprep.subr.mxu0 0.0
    %102 = vmatpush1.msra.mxu0 0.0
    %103 = vmatprep.subr.mxu0 0.0
    %104 = vmatpush1.msra.mxu0 0.0
    %105 = vmatprep.subr.mxu0 0.0
    %106 = vmatpush1.msra.mxu0 %v60
    %107 = vmatprep.subr.mxu0 0.0
    %108 = vmatpush1.msra.mxu0 %v59
    %109 = vmatprep.subr.mxu0 0.0
    %110 = vmatpush2.msra.mxu0 0.0
    %111 = vmatprep.subr.mxu0 0.0
    %112 = vmatpush2.msra.mxu0 0.0
    %113 = vmatprep.subr.mxu0 0.0
    %114 = vmatpush2.msra.mxu0 0.0
    %115 = vmatprep.subr.mxu0 0.0
    %116 = vmatpush2.msra.mxu0 0.0
    %117 = vmatprep.subr.mxu0 0.0
    %118 = vmatpush2.msra.mxu0 0.0
    %119 = vmatprep.subr.mxu0 0.0
    %120 = vmatpush2.msra.mxu0 0.0
    %121 = vmatprep.subr.mxu0 0.0
    %122 = vmatpush2.msra.mxu0 0.0
    %123 = vmatprep.subr.mxu0 0.0
    %124 = vmatpush2.msra.mxu0 0.0
    %125 = vmatprep.subr.mxu0 0.0
    %126 = vmatpush2.msra.mxu0 0.0
    %127 = vmatprep.subr.mxu0 0.0
    %128 = vmatpush2.msra.mxu0 0.0
    %129 = vmatprep.subr.mxu0 0.0
    %130 = vmatpush2.msra.mxu0 0.0
    %131 = vmatprep.subr.mxu0 0.0
    %132 = vmatpush2.msra.mxu0 0.0
    %133 = vmatprep.subr.mxu0 0.0
    %134 = vmatpush2.msra.mxu0 0.0
    %135 = vmatprep.subr.mxu0 0.0
    %136 = vmatpush2.msra.mxu0 0.0
    %137 = vmatprep.subr.mxu0 0.0
    %138 = vmatpush2.msra.mxu0 0.0
    %139 = vmatprep.subr.mxu0 0.0
    %140 = vmatpush2.msra.mxu0 0.0
    %141 = vmatprep.mubr.f32.mxu0 0.0
    %142 = vmatmul.mubr.f32.gmra.mxu0 %v75
    %v143 = vpop.f32.mrf.mxu0
    %v144 = vadd.f32 0.0, %v143
    %v145 = vpop.f32.mrf.mxu0
    %146 = vdwg.mxu0
    %v148 = vlaneseq
    %v149 = vshrl.u32 %v148, 7
    %v150 = vsub.s32 0, %v149
    %v151 = vrot.slane %v64, %v150
    %153 = vxpose.xlu0.b32.start [1/16] %v144, 128
    %154 = vxpose.xlu0.b32.cont [2/16] 0.0, 128
    %155 = vxpose.xlu0.b32.cont [3/16] 0.0, 128
    %156 = vxpose.xlu0.b32.cont [4/16] 0.0, 128
    %157 = vxpose.xlu0.b32.cont [5/16] 0.0, 128
    %158 = vxpose.xlu0.b32.cont [6/16] 0.0, 128
    %159 = vxpose.xlu0.b32.cont [7/16] 0.0, 128
    %160 = vxpose.xlu0.b32.cont [8/16] 0.0, 128
    %161 = vxpose.xlu0.b32.cont [9/16] 0.0, 128
    %162 = vxpose.xlu0.b32.cont [10/16] 0.0, 128
    %163 = vxpose.xlu0.b32.cont [11/16] 0.0, 128
    %164 = vxpose.xlu0.b32.cont [12/16] 0.0, 128
    %165 = vxpose.xlu0.b32.cont [13/16] 0.0, 128
    %166 = vxpose.xlu0.b32.cont [14/16] 0.0, 128
    %167 = vxpose.xlu0.b32.cont [15/16] 0.0, 128
    %168 = vxpose.xlu0.b32.end [16/16] 0.0, 128
    %v169 = vpop.trf.xlu0
    %v170 = vpop.trf.xlu0
    %v171 = vpop.trf.xlu0
    %v172 = vpop.trf.xlu0
    %v173 = vpop.trf.xlu0
    %v174 = vpop.trf.xlu0
    %v175 = vpop.trf.xlu0
    %v176 = vpop.trf.xlu0
    %v177 = vpop.trf.xlu0
    %v178 = vpop.trf.xlu0
    %v179 = vpop.trf.xlu0
    %v180 = vpop.trf.xlu0
    %v181 = vpop.trf.xlu0
    %v182 = vpop.trf.xlu0
    %v183 = vpop.trf.xlu0
    %v184 = vpop.trf.xlu0
    %vm185 = vcmask 7168
    %v187 = vsel %vm185, %v169, 0
    %v190 = vsel %vm185, %v170, 0
    %vm192 = vcmask 1040384
    %v194 = vsel %vm192, %v63, 0
    %196 = vmatprep.subr.mxu0 0.0
    %197 = vmatpush1.msra.mxu0 0.0
    %198 = vmatprep.subr.mxu0 0.0
    %199 = vmatpush1.msra.mxu0 0.0
    %200 = vmatprep.subr.mxu0 0.0
    %201 = vmatpush1.msra.mxu0 0.0
    %202 = vmatprep.subr.mxu0 0.0
    %203 = vmatpush1.msra.mxu0 0.0
    %204 = vmatprep.subr.mxu0 0.0
    %205 = vmatpush1.msra.mxu0 0.0
    %206 = vmatprep.subr.mxu0 0.0
    %207 = vmatpush1.msra.mxu0 0.0
    %208 = vmatprep.subr.mxu0 0.0
    %209 = vmatpush1.msra.mxu0 0.0
    %210 = vmatprep.subr.mxu0 0.0
    %211 = vmatpush1.msra.mxu0 0.0
    %212 = vmatprep.subr.mxu0 0.0
    %213 = vmatpush1.msra.mxu0 0.0
    %214 = vmatprep.subr.mxu0 0.0
    %215 = vmatpush1.msra.mxu0 0.0
    %216 = vmatprep.subr.mxu0 0.0
    %217 = vmatpush1.msra.mxu0 0.0
    %218 = vmatprep.subr.mxu0 0.0
    %219 = vmatpush1.msra.mxu0 0.0
    %220 = vmatprep.subr.mxu0 0.0
    %221 = vmatpush1.msra.mxu0 0.0
    %222 = vmatprep.subr.mxu0 0.0
    %223 = vmatpush1.msra.mxu0 0.0
    %224 = vmatprep.subr.mxu0 0.0
    %225 = vmatpush1.msra.mxu0 0.0
    %226 = vmatprep.subr.mxu0 0.0
    %227 = vmatpush1.msra.mxu0 %v194
    %228 = vmatprep.subr.mxu0 0.0
    %229 = vmatpush2.msra.mxu0 0.0
    %230 = vmatprep.subr.mxu0 0.0
    %231 = vmatpush2.msra.mxu0 0.0
    %232 = vmatprep.subr.mxu0 0.0
    %233 = vmatpush2.msra.mxu0 0.0
    %234 = vmatprep.subr.mxu0 0.0
    %235 = vmatpush2.msra.mxu0 0.0
    %236 = vmatprep.subr.mxu0 0.0
    %237 = vmatpush2.msra.mxu0 0.0
    %238 = vmatprep.subr.mxu0 0.0
    %239 = vmatpush2.msra.mxu0 0.0
    %240 = vmatprep.subr.mxu0 0.0
    %241 = vmatpush2.msra.mxu0 0.0
    %242 = vmatprep.subr.mxu0 0.0
    %243 = vmatpush2.msra.mxu0 0.0
    %244 = vmatprep.subr.mxu0 0.0
    %245 = vmatpush2.msra.mxu0 0.0
    %246 = vmatprep.subr.mxu0 0.0
    %247 = vmatpush2.msra.mxu0 0.0
    %248 = vmatprep.subr.mxu0 0.0
    %249 = vmatpush2.msra.mxu0 0.0
    %250 = vmatprep.subr.mxu0 0.0
    %251 = vmatpush2.msra.mxu0 0.0
    %252 = vmatprep.subr.mxu0 0.0
    %253 = vmatpush2.msra.mxu0 0.0
    %254 = vmatprep.subr.mxu0 0.0
    %255 = vmatpush2.msra.mxu0 0.0
    %256 = vmatprep.subr.mxu0 0.0
    %257 = vmatpush2.msra.mxu0 0.0
    %258 = vmatprep.subr.mxu0 0.0
    %259 = vmatpush2.msra.mxu0 0.0
    %260 = vmatprep.mubr.f32.mxu0 0.0
    %261 = vmatmul.mubr.f32.gmra.mxu0 %v187
    %v262 = vpop.f32.mrf.mxu0
    %v263 = vadd.f32 %v151, %v262
    %v264 = vpop.f32.mrf.mxu0
    %265 = vmatprep.mubr.f32.mxu0 0.0
    %266 = vmatmul.mubr.f32.gmra.mxu0 %v190
    %v267 = vpop.f32.mrf.mxu0
    %v268 = vadd.f32 %v151, %v267
    %v269 = vpop.f32.mrf.mxu0
    %270 = vdwg.mxu0
    %v272 = vlaneseq
    %v273 = vshrl.u32 %v272, 7
    %v274 = vsub.s32 0, %v273
    %v275 = vrot.slane %v66, %v274
    %v278 = vsel %vm192, %v65, 0
    %280 = vmatprep.subr.mxu0 0.0
    %281 = vmatpush1.msra.mxu0 0.0
    %282 = vmatprep.subr.mxu0 0.0
    %283 = vmatpush1.msra.mxu0 0.0
    %284 = vmatprep.subr.mxu0 0.0
    %285 = vmatpush1.msra.mxu0 0.0
    %286 = vmatprep.subr.mxu0 0.0
    %287 = vmatpush1.msra.mxu0 0.0
    %288 = vmatprep.subr.mxu0 0.0
    %289 = vmatpush1.msra.mxu0 0.0
    %290 = vmatprep.subr.mxu0 0.0
    %291 = vmatpush1.msra.mxu0 0.0
    %292 = vmatprep.subr.mxu0 0.0
    %293 = vmatpush1.msra.mxu0 0.0
    %294 = vmatprep.subr.mxu0 0.0
    %295 = vmatpush1.msra.mxu0 0.0
    %296 = vmatprep.subr.mxu0 0.0
    %297 = vmatpush1.msra.mxu0 0.0
    %298 = vmatprep.subr.mxu0 0.0
    %299 = vmatpush1.msra.mxu0 0.0
    %300 = vmatprep.subr.mxu0 0.0
    %301 = vmatpush1.msra.mxu0 0.0
    %302 = vmatprep.subr.mxu0 0.0
    %303 = vmatpush1.msra.mxu0 0.0
    %304 = vmatprep.subr.mxu0 0.0
    %305 = vmatpush1.msra.mxu0 0.0
    %306 = vmatprep.subr.mxu0 0.0
    %307 = vmatpush1.msra.mxu0 0.0
    %308 = vmatprep.subr.mxu0 0.0
    %309 = vmatpush1.msra.mxu0 0.0
    %310 = vmatprep.subr.mxu0 0.0
    %311 = vmatpush1.msra.mxu0 %v278
    %312 = vmatprep.subr.mxu0 0.0
    %313 = vmatpush2.msra.mxu0 0.0
    %314 = vmatprep.subr.mxu0 0.0
    %315 = vmatpush2.msra.mxu0 0.0
    %316 = vmatprep.subr.mxu0 0.0
    %317 = vmatpush2.msra.mxu0 0.0
    %318 = vmatprep.subr.mxu0 0.0
    %319 = vmatpush2.msra.mxu0 0.0
    %320 = vmatprep.subr.mxu0 0.0
    %321 = vmatpush2.msra.mxu0 0.0
    %322 = vmatprep.subr.mxu0 0.0
    %323 = vmatpush2.msra.mxu0 0.0
    %324 = vmatprep.subr.mxu0 0.0
    %325 = vmatpush2.msra.mxu0 0.0
    %326 = vmatprep.subr.mxu0 0.0
    %327 = vmatpush2.msra.mxu0 0.0
    %328 = vmatprep.subr.mxu0 0.0
    %329 = vmatpush2.msra.mxu0 0.0
    %330 = vmatprep.subr.mxu0 0.0
    %331 = vmatpush2.msra.mxu0 0.0
    %332 = vmatprep.subr.mxu0 0.0
    %333 = vmatpush2.msra.mxu0 0.0
    %334 = vmatprep.subr.mxu0 0.0
    %335 = vmatpush2.msra.mxu0 0.0
    %336 = vmatprep.subr.mxu0 0.0
    %337 = vmatpush2.msra.mxu0 0.0
    %338 = vmatprep.subr.mxu0 0.0
    %339 = vmatpush2.msra.mxu0 0.0
    %340 = vmatprep.subr.mxu0 0.0
    %341 = vmatpush2.msra.mxu0 0.0
    %342 = vmatprep.subr.mxu0 0.0
    %343 = vmatpush2.msra.mxu0 0.0
    %344 = vmatprep.mubr.f32.mxu0 0.0
    %345 = vmatmul.mubr.f32.gmra.mxu0 %v187
    %v346 = vpop.f32.mrf.mxu0
    %v347 = vadd.f32 %v275, %v346
    %v348 = vpop.f32.mrf.mxu0
    %349 = vmatprep.mubr.f32.mxu0 0.0
    %350 = vmatmul.mubr.f32.gmra.mxu0 %v190
    %v351 = vpop.f32.mrf.mxu0
    %v352 = vadd.f32 %v275, %v351
    %v353 = vpop.f32.mrf.mxu0
    %354 = vdwg.mxu0
    %v355 = vmax.f32 %v347, 0.0
    %v356 = vmax.f32 %v352, 0.0
    %vm357 = vcmask 64512
    %v358 = vsel %vm357, %v263, -inf
    %359 = vmax.xlane.f32.xlu0 %v358
    %v360 = vpop.xlane.xlu0 %359
    %v361 = vsel %vm357, %v268, -inf
    %362 = vmax.xlane.f32.xlu0 %v361
    %v363 = vpop.xlane.xlu0 %362
    %v364 = vsub.f32 %v263, %v360
    %v365 = vsub.f32 %v268, %v363
    %v366 = vmul.f32 %v364, 1.442695
    %v367 = vpow.pop %v366
    %v368 = vmul.f32 %v365, 1.442695
    %v369 = vpow.pop %v368
    %v370 = vsel %vm357, %v367, 0.0
    %371 = vadd.xlane.f32.xlu0 %v370
    %v372 = vpop.xlane.xlu0 %371
    %v373 = vsel %vm357, %v369, 0.0
    %374 = vadd.xlane.f32.xlu0 %v373
    %v375 = vpop.xlane.xlu0 %374
    %v376 = vrcp.pop %v372
    %v377 = vrcp.pop %v375
    %v378 = vmul.f32 %v367, %v376
    %v379 = vmul.f32 %v369, %v377
    %380 = vxpose.xlu0.b32.start [1/16] %v378, 128
    %381 = vxpose.xlu0.b32.cont [2/16] %v379, 128
    %382 = vxpose.xlu0.b32.cont [3/16] 0.0, 128
    %383 = vxpose.xlu0.b32.cont [4/16] 0.0, 128
    %384 = vxpose.xlu0.b32.cont [5/16] 0.0, 128
    %385 = vxpose.xlu0.b32.cont [6/16] 0.0, 128
    %386 = vxpose.xlu0.b32.cont [7/16] 0.0, 128
    %387 = vxpose.xlu0.b32.cont [8/16] 0.0, 128
    %388 = vxpose.xlu0.b32.cont [9/16] 0.0, 128
    %389 = vxpose.xlu0.b32.cont [10/16] 0.0, 128
    %390 = vxpose.xlu0.b32.cont [11/16] 0.0, 128
    %391 = vxpose.xlu0.b32.cont [12/16] 0.0, 128
    %392 = vxpose.xlu0.b32.cont [13/16] 0.0, 128
    %393 = vxpose.xlu0.b32.cont [14/16] 0.0, 128
    %394 = vxpose.xlu0.b32.cont [15/16] 0.0, 128
    %395 = vxpose.xlu0.b32.end [16/16] 0.0, 128
    %v396 = vpop.trf.xlu0
    %v397 = vpop.trf.xlu0
    %v398 = vpop.trf.xlu0
    %v399 = vpop.trf.xlu0
    %v400 = vpop.trf.xlu0
    %v401 = vpop.trf.xlu0
    %v402 = vpop.trf.xlu0
    %v403 = vpop.trf.xlu0
    %v404 = vpop.trf.xlu0
    %v405 = vpop.trf.xlu0
    %v406 = vpop.trf.xlu0
    %v407 = vpop.trf.xlu0
    %v408 = vpop.trf.xlu0
    %v409 = vpop.trf.xlu0
    %v410 = vpop.trf.xlu0
    %v411 = vpop.trf.xlu0
    %v413 = vsel %vm73, %v396, 0
    %415 = vmatprep.subr.mxu0 0.0
    %416 = vmatpush1.msra.mxu0 0.0
    %417 = vmatprep.subr.mxu0 0.0
    %418 = vmatpush1.msra.mxu0 0.0
    %419 = vmatprep.subr.mxu0 0.0
    %420 = vmatpush1.msra.mxu0 0.0
    %421 = vmatprep.subr.mxu0 0.0
    %422 = vmatpush1.msra.mxu0 0.0
    %423 = vmatprep.subr.mxu0 0.0
    %424 = vmatpush1.msra.mxu0 0.0
    %425 = vmatprep.subr.mxu0 0.0
    %426 = vmatpush1.msra.mxu0 0.0
    %427 = vmatprep.subr.mxu0 0.0
    %428 = vmatpush1.msra.mxu0 0.0
    %429 = vmatprep.subr.mxu0 0.0
    %430 = vmatpush1.msra.mxu0 0.0
    %431 = vmatprep.subr.mxu0 0.0
    %432 = vmatpush1.msra.mxu0 0.0
    %433 = vmatprep.subr.mxu0 0.0
    %434 = vmatpush1.msra.mxu0 0.0
    %435 = vmatprep.subr.mxu0 0.0
    %436 = vmatpush1.msra.mxu0 0.0
    %437 = vmatprep.subr.mxu0 0.0
    %438 = vmatpush1.msra.mxu0 0.0
    %439 = vmatprep.subr.mxu0 0.0
    %440 = vmatpush1.msra.mxu0 0.0
    %441 = vmatprep.subr.mxu0 0.0
    %442 = vmatpush1.msra.mxu0 0.0
    %443 = vmatprep.subr.mxu0 0.0
    %444 = vmatpush1.msra.mxu0 %v356
    %445 = vmatprep.subr.mxu0 0.0
    %446 = vmatpush1.msra.mxu0 %v355
    %447 = vmatprep.subr.mxu0 0.0
    %448 = vmatpush2.msra.mxu0 0.0
    %449 = vmatprep.subr.mxu0 0.0
    %450 = vmatpush2.msra.mxu0 0.0
    %451 = vmatprep.subr.mxu0 0.0
    %452 = vmatpush2.msra.mxu0 0.0
    %453 = vmatprep.subr.mxu0 0.0
    %454 = vmatpush2.msra.mxu0 0.0
    %455 = vmatprep.subr.mxu0 0.0
    %456 = vmatpush2.msra.mxu0 0.0
    %457 = vmatprep.subr.mxu0 0.0
    %458 = vmatpush2.msra.mxu0 0.0
    %459 = vmatprep.subr.mxu0 0.0
    %460 = vmatpush2.msra.mxu0 0.0
    %461 = vmatprep.subr.mxu0 0.0
    %462 = vmatpush2.msra.mxu0 0.0
    %463 = vmatprep.subr.mxu0 0.0
    %464 = vmatpush2.msra.mxu0 0.0
    %465 = vmatprep.subr.mxu0 0.0
    %466 = vmatpush2.msra.mxu0 0.0
    %467 = vmatprep.subr.mxu0 0.0
    %468 = vmatpush2.msra.mxu0 0.0
    %469 = vmatprep.subr.mxu0 0.0
    %470 = vmatpush2.msra.mxu0 0.0
    %471 = vmatprep.subr.mxu0 0.0
    %472 = vmatpush2.msra.mxu0 0.0
    %473 = vmatprep.subr.mxu0 0.0
    %474 = vmatpush2.msra.mxu0 0.0
    %475 = vmatprep.subr.mxu0 0.0
    %476 = vmatpush2.msra.mxu0 0.0
    %477 = vmatprep.subr.mxu0 0.0
    %478 = vmatpush2.msra.mxu0 0.0
    %479 = vmatprep.mubr.f32.mxu0 0.0
    %480 = vmatmul.mubr.f32.gmra.mxu0 %v413
    %v481 = vpop.f32.mrf.mxu0
    %v482 = vadd.f32 0.0, %v481
    %v483 = vpop.f32.mrf.mxu0
    %484 = vdwg.mxu0
    %485 = vmatprep.subr.mxu0 0.0
    %486 = vmatpush1.msra.mxu0 0.0
    %487 = vmatprep.subr.mxu0 0.0
    %488 = vmatpush1.msra.mxu0 0.0
    %489 = vmatprep.subr.mxu0 0.0
    %490 = vmatpush1.msra.mxu0 0.0
    %491 = vmatprep.subr.mxu0 0.0
    %492 = vmatpush1.msra.mxu0 0.0
    %493 = vmatprep.subr.mxu0 0.0
    %494 = vmatpush1.msra.mxu0 0.0
    %495 = vmatprep.subr.mxu0 0.0
    %496 = vmatpush1.msra.mxu0 0.0
    %497 = vmatprep.subr.mxu0 0.0
    %498 = vmatpush1.msra.mxu0 0.0
    %499 = vmatprep.subr.mxu0 0.0
    %500 = vmatpush1.msra.mxu0 0.0
    %501 = vmatprep.subr.mxu0 0.0
    %502 = vmatpush1.msra.mxu0 0.0
    %503 = vmatprep.subr.mxu0 0.0
    %504 = vmatpush1.msra.mxu0 0.0
    %505 = vmatprep.subr.mxu0 0.0
    %506 = vmatpush1.msra.mxu0 0.0
    %507 = vmatprep.subr.mxu0 0.0
    %508 = vmatpush1.msra.mxu0 0.0
    %509 = vmatprep.subr.mxu0 0.0
    %510 = vmatpush1.msra.mxu0 0.0
    %511 = vmatprep.subr.mxu0 0.0
    %512 = vmatpush1.msra.mxu0 0.0
    %513 = vmatprep.subr.mxu0 0.0
    %514 = vmatpush1.msra.mxu0 %v62
    %515 = vmatprep.subr.mxu0 0.0
    %516 = vmatpush1.msra.mxu0 %v61
    %517 = vmatprep.subr.mxu0 0.0
    %518 = vmatpush2.msra.mxu0 0.0
    %519 = vmatprep.subr.mxu0 0.0
    %520 = vmatpush2.msra.mxu0 0.0
    %521 = vmatprep.subr.mxu0 0.0
    %522 = vmatpush2.msra.mxu0 0.0
    %523 = vmatprep.subr.mxu0 0.0
    %524 = vmatpush2.msra.mxu0 0.0
    %525 = vmatprep.subr.mxu0 0.0
    %526 = vmatpush2.msra.mxu0 0.0
    %527 = vmatprep.subr.mxu0 0.0
    %528 = vmatpush2.msra.mxu0 0.0
    %529 = vmatprep.subr.mxu0 0.0
    %530 = vmatpush2.msra.mxu0 0.0
    %531 = vmatprep.subr.mxu0 0.0
    %532 = vmatpush2.msra.mxu0 0.0
    %533 = vmatprep.subr.mxu0 0.0
    %534 = vmatpush2.msra.mxu0 0.0
    %535 = vmatprep.subr.mxu0 0.0
    %536 = vmatpush2.msra.mxu0 0.0
    %537 = vmatprep.subr.mxu0 0.0
    %538 = vmatpush2.msra.mxu0 0.0
    %539 = vmatprep.subr.mxu0 0.0
    %540 = vmatpush2.msra.mxu0 0.0
    %541 = vmatprep.subr.mxu0 0.0
    %542 = vmatpush2.msra.mxu0 0.0
    %543 = vmatprep.subr.mxu0 0.0
    %544 = vmatpush2.msra.mxu0 0.0
    %545 = vmatprep.subr.mxu0 0.0
    %546 = vmatpush2.msra.mxu0 0.0
    %547 = vmatprep.subr.mxu0 0.0
    %548 = vmatpush2.msra.mxu0 0.0
    %549 = vmatprep.mubr.f32.mxu0 0.0
    %550 = vmatmul.mubr.f32.gmra.mxu0 %v413
    %v551 = vpop.f32.mrf.mxu0
    %v552 = vadd.f32 0.0, %v551
    %v553 = vpop.f32.mrf.mxu0
    %554 = vdwg.mxu0
    %v556 = vsel %vm73, %v552, 0
    %558 = vmatprep.subr.mxu0 0.0
    %559 = vmatpush1.msra.mxu0 0.0
    %560 = vmatprep.subr.mxu0 0.0
    %561 = vmatpush1.msra.mxu0 0.0
    %562 = vmatprep.subr.mxu0 0.0
    %563 = vmatpush1.msra.mxu0 0.0
    %564 = vmatprep.subr.mxu0 0.0
    %565 = vmatpush1.msra.mxu0 0.0
    %566 = vmatprep.subr.mxu0 0.0
    %567 = vmatpush1.msra.mxu0 0.0
    %568 = vmatprep.subr.mxu0 0.0
    %569 = vmatpush1.msra.mxu0 0.0
    %570 = vmatprep.subr.mxu0 0.0
    %571 = vmatpush1.msra.mxu0 0.0
    %572 = vmatprep.subr.mxu0 0.0
    %573 = vmatpush1.msra.mxu0 0.0
    %574 = vmatprep.subr.mxu0 0.0
    %575 = vmatpush1.msra.mxu0 0.0
    %576 = vmatprep.subr.mxu0 0.0
    %577 = vmatpush1.msra.mxu0 0.0
    %578 = vmatprep.subr.mxu0 0.0
    %579 = vmatpush1.msra.mxu0 0.0
    %580 = vmatprep.subr.mxu0 0.0
    %581 = vmatpush1.msra.mxu0 0.0
    %582 = vmatprep.subr.mxu0 0.0
    %583 = vmatpush1.msra.mxu0 0.0
    %584 = vmatprep.subr.mxu0 0.0
    %585 = vmatpush1.msra.mxu0 0.0
    %586 = vmatprep.subr.mxu0 0.0
    %587 = vmatpush1.msra.mxu0 %v379
    %588 = vmatprep.subr.mxu0 0.0
    %589 = vmatpush1.msra.mxu0 %v378
    %590 = vmatprep.subr.mxu0 0.0
    %591 = vmatpush2.msra.mxu0 0.0
    %592 = vmatprep.subr.mxu0 0.0
    %593 = vmatpush2.msra.mxu0 0.0
    %594 = vmatprep.subr.mxu0 0.0
    %595 = vmatpush2.msra.mxu0 0.0
    %596 = vmatprep.subr.mxu0 0.0
    %597 = vmatpush2.msra.mxu0 0.0
    %598 = vmatprep.subr.mxu0 0.0
    %599 = vmatpush2.msra.mxu0 0.0
    %600 = vmatprep.subr.mxu0 0.0
    %601 = vmatpush2.msra.mxu0 0.0
    %602 = vmatprep.subr.mxu0 0.0
    %603 = vmatpush2.msra.mxu0 0.0
    %604 = vmatprep.subr.mxu0 0.0
    %605 = vmatpush2.msra.mxu0 0.0
    %606 = vmatprep.subr.mxu0 0.0
    %607 = vmatpush2.msra.mxu0 0.0
    %608 = vmatprep.subr.mxu0 0.0
    %609 = vmatpush2.msra.mxu0 0.0
    %610 = vmatprep.subr.mxu0 0.0
    %611 = vmatpush2.msra.mxu0 0.0
    %612 = vmatprep.subr.mxu0 0.0
    %613 = vmatpush2.msra.mxu0 0.0
    %614 = vmatprep.subr.mxu0 0.0
    %615 = vmatpush2.msra.mxu0 0.0
    %616 = vmatprep.subr.mxu0 0.0
    %617 = vmatpush2.msra.mxu0 0.0
    %618 = vmatprep.subr.mxu0 0.0
    %619 = vmatpush2.msra.mxu0 0.0
    %620 = vmatprep.subr.mxu0 0.0
    %621 = vmatpush2.msra.mxu0 0.0
    %622 = vmatprep.mubr.f32.mxu0 0.0
    %623 = vmatmul.mubr.f32.gmra.mxu0 %v556
    %v624 = vpop.f32.mrf.mxu0
    %v625 = vadd.f32 0.0, %v624
    %v626 = vpop.f32.mrf.mxu0
    %627 = vdwg.mxu0
    %v628 = vlaneseq
    %v629 = vshrl.u32 %v628, 7
    %v630 = vlaneseq
    %v631 = vand.u32 %v630, 127
    %vm632 = vcmp.eq.s32.totalorder %v629, %v631
    %v633 = vsel %vm632, 2.0, %v625
    %v634 = vsel %vm357, %v633, 0.0
    %635 = vadd.xlane.f32.xlu0 %v634
    %v636 = vpop.xlane.xlu0 %635
    %v637 = vmax.f32 %v636, 1.0
    %v638 = vrsqrt.pop %v637
    %v639 = vsel %vm632, 1.0, 0.0
    %v640 = vmul.f32 %v639, %v638
    %v642 = vsel %vm357, %v640, 0
    %644 = vmatprep.subr.mxu0 0.0
    %645 = vmatpush1.msra.mxu0 0.0
    %646 = vmatprep.subr.mxu0 0.0
    %647 = vmatpush1.msra.mxu0 0.0
    %648 = vmatprep.subr.mxu0 0.0
    %649 = vmatpush1.msra.mxu0 0.0
    %650 = vmatprep.subr.mxu0 0.0
    %651 = vmatpush1.msra.mxu0 0.0
    %652 = vmatprep.subr.mxu0 0.0
    %653 = vmatpush1.msra.mxu0 0.0
    %654 = vmatprep.subr.mxu0 0.0
    %655 = vmatpush1.msra.mxu0 0.0
    %656 = vmatprep.subr.mxu0 0.0
    %657 = vmatpush1.msra.mxu0 0.0
    %658 = vmatprep.subr.mxu0 0.0
    %659 = vmatpush1.msra.mxu0 0.0
    %660 = vmatprep.subr.mxu0 0.0
    %661 = vmatpush1.msra.mxu0 0.0
    %662 = vmatprep.subr.mxu0 0.0
    %663 = vmatpush1.msra.mxu0 0.0
    %664 = vmatprep.subr.mxu0 0.0
    %665 = vmatpush1.msra.mxu0 0.0
    %666 = vmatprep.subr.mxu0 0.0
    %667 = vmatpush1.msra.mxu0 0.0
    %668 = vmatprep.subr.mxu0 0.0
    %669 = vmatpush1.msra.mxu0 0.0
    %670 = vmatprep.subr.mxu0 0.0
    %671 = vmatpush1.msra.mxu0 0.0
    %672 = vmatprep.subr.mxu0 0.0
    %673 = vmatpush1.msra.mxu0 0.0
    %674 = vmatprep.subr.mxu0 0.0
    %675 = vmatpush1.msra.mxu0 %v633
    %676 = vmatprep.subr.mxu0 0.0
    %677 = vmatpush2.msra.mxu0 0.0
    %678 = vmatprep.subr.mxu0 0.0
    %679 = vmatpush2.msra.mxu0 0.0
    %680 = vmatprep.subr.mxu0 0.0
    %681 = vmatpush2.msra.mxu0 0.0
    %682 = vmatprep.subr.mxu0 0.0
    %683 = vmatpush2.msra.mxu0 0.0
    %684 = vmatprep.subr.mxu0 0.0
    %685 = vmatpush2.msra.mxu0 0.0
    %686 = vmatprep.subr.mxu0 0.0
    %687 = vmatpush2.msra.mxu0 0.0
    %688 = vmatprep.subr.mxu0 0.0
    %689 = vmatpush2.msra.mxu0 0.0
    %690 = vmatprep.subr.mxu0 0.0
    %691 = vmatpush2.msra.mxu0 0.0
    %692 = vmatprep.subr.mxu0 0.0
    %693 = vmatpush2.msra.mxu0 0.0
    %694 = vmatprep.subr.mxu0 0.0
    %695 = vmatpush2.msra.mxu0 0.0
    %696 = vmatprep.subr.mxu0 0.0
    %697 = vmatpush2.msra.mxu0 0.0
    %698 = vmatprep.subr.mxu0 0.0
    %699 = vmatpush2.msra.mxu0 0.0
    %700 = vmatprep.subr.mxu0 0.0
    %701 = vmatpush2.msra.mxu0 0.0
    %702 = vmatprep.subr.mxu0 0.0
    %703 = vmatpush2.msra.mxu0 0.0
    %704 = vmatprep.subr.mxu0 0.0
    %705 = vmatpush2.msra.mxu0 0.0
    %706 = vmatprep.subr.mxu0 0.0
    %707 = vmatpush2.msra.mxu0 0.0
    %708 = vmatprep.mubr.f32.mxu0 0.0
    %709 = vmatmul.mubr.f32.gmra.mxu0 %v642
    %v710 = vpop.f32.mrf.mxu0
    %v711 = vadd.f32 0.0, %v710
    %v712 = vpop.f32.mrf.mxu0
    %713 = vdwg.mxu0
    %v715 = vsel %vm357, %v711, 0
    %717 = vmatprep.subr.mxu0 0.0
    %718 = vmatpush1.msra.mxu0 0.0
    %719 = vmatprep.subr.mxu0 0.0
    %720 = vmatpush1.msra.mxu0 0.0
    %721 = vmatprep.subr.mxu0 0.0
    %722 = vmatpush1.msra.mxu0 0.0
    %723 = vmatprep.subr.mxu0 0.0
    %724 = vmatpush1.msra.mxu0 0.0
    %725 = vmatprep.subr.mxu0 0.0
    %726 = vmatpush1.msra.mxu0 0.0
    %727 = vmatprep.subr.mxu0 0.0
    %728 = vmatpush1.msra.mxu0 0.0
    %729 = vmatprep.subr.mxu0 0.0
    %730 = vmatpush1.msra.mxu0 0.0
    %731 = vmatprep.subr.mxu0 0.0
    %732 = vmatpush1.msra.mxu0 0.0
    %733 = vmatprep.subr.mxu0 0.0
    %734 = vmatpush1.msra.mxu0 0.0
    %735 = vmatprep.subr.mxu0 0.0
    %736 = vmatpush1.msra.mxu0 0.0
    %737 = vmatprep.subr.mxu0 0.0
    %738 = vmatpush1.msra.mxu0 0.0
    %739 = vmatprep.subr.mxu0 0.0
    %740 = vmatpush1.msra.mxu0 0.0
    %741 = vmatprep.subr.mxu0 0.0
    %742 = vmatpush1.msra.mxu0 0.0
    %743 = vmatprep.subr.mxu0 0.0
    %744 = vmatpush1.msra.mxu0 0.0
    %745 = vmatprep.subr.mxu0 0.0
    %746 = vmatpush1.msra.mxu0 0.0
    %747 = vmatprep.subr.mxu0 0.0
    %748 = vmatpush1.msra.mxu0 %v640
    %749 = vmatprep.subr.mxu0 0.0
    %750 = vmatpush2.msra.mxu0 0.0
    %751 = vmatprep.subr.mxu0 0.0
    %752 = vmatpush2.msra.mxu0 0.0
    %753 = vmatprep.subr.mxu0 0.0
    %754 = vmatpush2.msra.mxu0 0.0
    %755 = vmatprep.subr.mxu0 0.0
    %756 = vmatpush2.msra.mxu0 0.0
    %757 = vmatprep.subr.mxu0 0.0
    %758 = vmatpush2.msra.mxu0 0.0
    %759 = vmatprep.subr.mxu0 0.0
    %760 = vmatpush2.msra.mxu0 0.0
    %761 = vmatprep.subr.mxu0 0.0
    %762 = vmatpush2.msra.mxu0 0.0
    %763 = vmatprep.subr.mxu0 0.0
    %764 = vmatpush2.msra.mxu0 0.0
    %765 = vmatprep.subr.mxu0 0.0
    %766 = vmatpush2.msra.mxu0 0.0
    %767 = vmatprep.subr.mxu0 0.0
    %768 = vmatpush2.msra.mxu0 0.0
    %769 = vmatprep.subr.mxu0 0.0
    %770 = vmatpush2.msra.mxu0 0.0
    %771 = vmatprep.subr.mxu0 0.0
    %772 = vmatpush2.msra.mxu0 0.0
    %773 = vmatprep.subr.mxu0 0.0
    %774 = vmatpush2.msra.mxu0 0.0
    %775 = vmatprep.subr.mxu0 0.0
    %776 = vmatpush2.msra.mxu0 0.0
    %777 = vmatprep.subr.mxu0 0.0
    %778 = vmatpush2.msra.mxu0 0.0
    %779 = vmatprep.subr.mxu0 0.0
    %780 = vmatpush2.msra.mxu0 0.0
    %781 = vmatprep.mubr.f32.mxu0 0.0
    %782 = vmatmul.mubr.f32.gmra.mxu0 %v715
    %v783 = vpop.f32.mrf.mxu0
    %v784 = vadd.f32 0.0, %v783
    %v785 = vpop.f32.mrf.mxu0
    %786 = vdwg.mxu0
    %vm787 = vcmask 261120
    %v789 = vsel %vm787, %v482, 0
    %791 = vmatprep.subr.mxu0 0.0
    %792 = vmatpush1.msra.mxu0 0.0
    %793 = vmatprep.subr.mxu0 0.0
    %794 = vmatpush1.msra.mxu0 0.0
    %795 = vmatprep.subr.mxu0 0.0
    %796 = vmatpush1.msra.mxu0 0.0
    %797 = vmatprep.subr.mxu0 0.0
    %798 = vmatpush1.msra.mxu0 0.0
    %799 = vmatprep.subr.mxu0 0.0
    %800 = vmatpush1.msra.mxu0 0.0
    %801 = vmatprep.subr.mxu0 0.0
    %802 = vmatpush1.msra.mxu0 0.0
    %803 = vmatprep.subr.mxu0 0.0
    %804 = vmatpush1.msra.mxu0 0.0
    %805 = vmatprep.subr.mxu0 0.0
    %806 = vmatpush1.msra.mxu0 0.0
    %807 = vmatprep.subr.mxu0 0.0
    %808 = vmatpush1.msra.mxu0 0.0
    %809 = vmatprep.subr.mxu0 0.0
    %810 = vmatpush1.msra.mxu0 0.0
    %811 = vmatprep.subr.mxu0 0.0
    %812 = vmatpush1.msra.mxu0 0.0
    %813 = vmatprep.subr.mxu0 0.0
    %814 = vmatpush1.msra.mxu0 0.0
    %815 = vmatprep.subr.mxu0 0.0
    %816 = vmatpush1.msra.mxu0 %v70
    %817 = vmatprep.subr.mxu0 0.0
    %818 = vmatpush1.msra.mxu0 %v69
    %819 = vmatprep.subr.mxu0 0.0
    %820 = vmatpush1.msra.mxu0 %v68
    %821 = vmatprep.subr.mxu0 0.0
    %822 = vmatpush1.msra.mxu0 %v67
    %823 = vmatprep.subr.mxu0 0.0
    %824 = vmatpush2.msra.mxu0 0.0
    %825 = vmatprep.subr.mxu0 0.0
    %826 = vmatpush2.msra.mxu0 0.0
    %827 = vmatprep.subr.mxu0 0.0
    %828 = vmatpush2.msra.mxu0 0.0
    %829 = vmatprep.subr.mxu0 0.0
    %830 = vmatpush2.msra.mxu0 0.0
    %831 = vmatprep.subr.mxu0 0.0
    %832 = vmatpush2.msra.mxu0 0.0
    %833 = vmatprep.subr.mxu0 0.0
    %834 = vmatpush2.msra.mxu0 0.0
    %835 = vmatprep.subr.mxu0 0.0
    %836 = vmatpush2.msra.mxu0 0.0
    %837 = vmatprep.subr.mxu0 0.0
    %838 = vmatpush2.msra.mxu0 0.0
    %839 = vmatprep.subr.mxu0 0.0
    %840 = vmatpush2.msra.mxu0 0.0
    %841 = vmatprep.subr.mxu0 0.0
    %842 = vmatpush2.msra.mxu0 0.0
    %843 = vmatprep.subr.mxu0 0.0
    %844 = vmatpush2.msra.mxu0 0.0
    %845 = vmatprep.subr.mxu0 0.0
    %846 = vmatpush2.msra.mxu0 0.0
    %847 = vmatprep.subr.mxu0 0.0
    %848 = vmatpush2.msra.mxu0 0.0
    %849 = vmatprep.subr.mxu0 0.0
    %850 = vmatpush2.msra.mxu0 0.0
    %851 = vmatprep.subr.mxu0 0.0
    %852 = vmatpush2.msra.mxu0 0.0
    %853 = vmatprep.subr.mxu0 0.0
    %854 = vmatpush2.msra.mxu0 0.0
    %855 = vmatprep.mubr.f32.mxu0 0.0
    %856 = vmatmul.mubr.f32.gmra.mxu0 %v789
    %v857 = vpop.f32.mrf.mxu0
    %v858 = vadd.f32 0.0, %v857
    %v859 = vpop.f32.mrf.mxu0
    %860 = vdwg.mxu0
    %v862 = vlaneseq
    %v863 = vshrl.u32 %v862, 7
    %v864 = vsub.s32 0, %v863
    %v865 = vrot.slane %v71, %v864
    %v868 = vsel %vm357, %v784, 0
    %870 = vmatprep.subr.mxu0 0.0
    %871 = vmatpush1.msra.mxu0 0.0
    %872 = vmatprep.subr.mxu0 0.0
    %873 = vmatpush1.msra.mxu0 0.0
    %874 = vmatprep.subr.mxu0 0.0
    %875 = vmatpush1.msra.mxu0 0.0
    %876 = vmatprep.subr.mxu0 0.0
    %877 = vmatpush1.msra.mxu0 0.0
    %878 = vmatprep.subr.mxu0 0.0
    %879 = vmatpush1.msra.mxu0 0.0
    %880 = vmatprep.subr.mxu0 0.0
    %881 = vmatpush1.msra.mxu0 0.0
    %882 = vmatprep.subr.mxu0 0.0
    %883 = vmatpush1.msra.mxu0 0.0
    %884 = vmatprep.subr.mxu0 0.0
    %885 = vmatpush1.msra.mxu0 0.0
    %886 = vmatprep.subr.mxu0 0.0
    %887 = vmatpush1.msra.mxu0 0.0
    %888 = vmatprep.subr.mxu0 0.0
    %889 = vmatpush1.msra.mxu0 0.0
    %890 = vmatprep.subr.mxu0 0.0
    %891 = vmatpush1.msra.mxu0 0.0
    %892 = vmatprep.subr.mxu0 0.0
    %893 = vmatpush1.msra.mxu0 0.0
    %894 = vmatprep.subr.mxu0 0.0
    %895 = vmatpush1.msra.mxu0 0.0
    %896 = vmatprep.subr.mxu0 0.0
    %897 = vmatpush1.msra.mxu0 0.0
    %898 = vmatprep.subr.mxu0 0.0
    %899 = vmatpush1.msra.mxu0 0.0
    %900 = vmatprep.subr.mxu0 0.0
    %901 = vmatpush1.msra.mxu0 %v858
    %902 = vmatprep.subr.mxu0 0.0
    %903 = vmatpush2.msra.mxu0 0.0
    %904 = vmatprep.subr.mxu0 0.0
    %905 = vmatpush2.msra.mxu0 0.0
    %906 = vmatprep.subr.mxu0 0.0
    %907 = vmatpush2.msra.mxu0 0.0
    %908 = vmatprep.subr.mxu0 0.0
    %909 = vmatpush2.msra.mxu0 0.0
    %910 = vmatprep.subr.mxu0 0.0
    %911 = vmatpush2.msra.mxu0 0.0
    %912 = vmatprep.subr.mxu0 0.0
    %913 = vmatpush2.msra.mxu0 0.0
    %914 = vmatprep.subr.mxu0 0.0
    %915 = vmatpush2.msra.mxu0 0.0
    %916 = vmatprep.subr.mxu0 0.0
    %917 = vmatpush2.msra.mxu0 0.0
    %918 = vmatprep.subr.mxu0 0.0
    %919 = vmatpush2.msra.mxu0 0.0
    %920 = vmatprep.subr.mxu0 0.0
    %921 = vmatpush2.msra.mxu0 0.0
    %922 = vmatprep.subr.mxu0 0.0
    %923 = vmatpush2.msra.mxu0 0.0
    %924 = vmatprep.subr.mxu0 0.0
    %925 = vmatpush2.msra.mxu0 0.0
    %926 = vmatprep.subr.mxu0 0.0
    %927 = vmatpush2.msra.mxu0 0.0
    %928 = vmatprep.subr.mxu0 0.0
    %929 = vmatpush2.msra.mxu0 0.0
    %930 = vmatprep.subr.mxu0 0.0
    %931 = vmatpush2.msra.mxu0 0.0
    %932 = vmatprep.subr.mxu0 0.0
    %933 = vmatpush2.msra.mxu0 0.0
    %934 = vmatprep.mubr.f32.mxu0 0.0
    %935 = vmatmul.mubr.f32.gmra.mxu0 %v868
    %v936 = vpop.f32.mrf.mxu0
    %v937 = vadd.f32 %v865, %v936
    %v938 = vpop.f32.mrf.mxu0
    %939 = vdwg.mxu0
    %v940 = vmax.f32 %v937, 0.0
    %vm941 = vcmask 253952
    %942 = vst.msk [vmem:[#allocation2] sm:$0x1] %vm941, %v940
    %v945 = vunpack.c.l.s4 1983009808
    %v946 = vunpack.c.0.s8 %v945
    %v947 = vlaneseq
    %v948 = vshrl.u32 %v947, 7
    %v949 = vsub.s32 %v946, %v948
    %v950 = vrot.slane %v940, %v949
    %v951 = vrot.slane %v950, 7
    %v952 = vrot.slane %v951, 2
    %953 = vrot.lane.b32.xlu0 %v952, 32
    %v954 = vpop.permute.xlu0 %953
    %vm956 = vcmask 516352
    %957 = vst.msk [vmem:[#allocation2] sm:$0x1] %vm956, %v954
    %v958 = vcombine.high %v950, %v950
    %959 = vrot.lane.b32.xlu0 %v958, 64
    %v960 = vpop.permute.xlu0 %959
    %vm962 = vcmask 778752
    %963 = vst.msk [vmem:[#allocation2] sm:$0x1] %vm962, %v960
    %v964 = vrot.slane %v958, 7
    %v965 = vrot.slane %v964, 2
    %966 = vrot.lane.b32.xlu0 %v965, 96
    %v967 = vpop.permute.xlu0 %966
    %vm969 = vcmask 1041152
    %970 = vst.msk [vmem:[#allocation2] sm:$0x1] %vm969, %v967
    %v971 = vcombine.high %v940, %v940
    %v973 = vunpack.c.l.s4 1983009808
    %v974 = vunpack.c.0.s8 %v973
    %v975 = vlaneseq
    %v976 = vshrl.u32 %v975, 7
    %v977 = vsub.s32 %v974, %v976
    %v978 = vrot.slane %v971, %v977
    %980 = vst.msk [vmem:[#allocation2 + $0x2] sm:$0x1] %vm941, %v978
    %v981 = vrot.slane %v978, 7
    %v982 = vrot.slane %v981, 2
    %983 = vrot.lane.b32.xlu0 %v982, 32
    %v984 = vpop.permute.xlu0 %983
    %986 = vst.msk [vmem:[#allocation2 + $0x2] sm:$0x1] %vm956, %v984
    %v987 = vcombine.high %v978, %v978
    %988 = vrot.lane.b32.xlu0 %v987, 64
    %v989 = vpop.permute.xlu0 %988
    %991 = vst.msk [vmem:[#allocation2 + $0x2] sm:$0x1] %vm962, %v989
    %v992 = vrot.slane %v987, 7
    %v993 = vrot.slane %v992, 2
    %994 = vrot.lane.b32.xlu0 %v993, 96
    %v995 = vpop.permute.xlu0 %994
    %997 = vst.msk [vmem:[#allocation2 + $0x2] sm:$0x1] %vm969, %v995
    %v999 = vrot.slane %v144, 1
    %1001 = vxpose.xlu0.b32.start [1/16] %v999, 128
    %1002 = vxpose.xlu0.b32.cont [2/16] 0.0, 128
    %1003 = vxpose.xlu0.b32.cont [3/16] 0.0, 128
    %1004 = vxpose.xlu0.b32.cont [4/16] 0.0, 128
    %1005 = vxpose.xlu0.b32.cont [5/16] 0.0, 128
    %1006 = vxpose.xlu0.b32.cont [6/16] 0.0, 128
    %1007 = vxpose.xlu0.b32.cont [7/16] 0.0, 128
    %1008 = vxpose.xlu0.b32.cont [8/16] 0.0, 128
    %1009 = vxpose.xlu0.b32.cont [9/16] 0.0, 128
    %1010 = vxpose.xlu0.b32.cont [10/16] 0.0, 128
    %1011 = vxpose.xlu0.b32.cont [11/16] 0.0, 128
    %1012 = vxpose.xlu0.b32.cont [12/16] 0.0, 128
    %1013 = vxpose.xlu0.b32.cont [13/16] 0.0, 128
    %1014 = vxpose.xlu0.b32.cont [14/16] 0.0, 128
    %1015 = vxpose.xlu0.b32.cont [15/16] 0.0, 128
    %1016 = vxpose.xlu0.b32.end [16/16] 0.0, 128
    %v1017 = vpop.trf.xlu0
    %v1018 = vpop.trf.xlu0
    %v1019 = vpop.trf.xlu0
    %v1020 = vpop.trf.xlu0
    %v1021 = vpop.trf.xlu0
    %v1022 = vpop.trf.xlu0
    %v1023 = vpop.trf.xlu0
    %v1024 = vpop.trf.xlu0
    %v1025 = vpop.trf.xlu0
    %v1026 = vpop.trf.xlu0
    %v1027 = vpop.trf.xlu0
    %v1028 = vpop.trf.xlu0
    %v1029 = vpop.trf.xlu0
    %v1030 = vpop.trf.xlu0
    %v1031 = vpop.trf.xlu0
    %v1032 = vpop.trf.xlu0
    %v1034 = vsel %vm185, %v1017, 0
    %v1037 = vsel %vm185, %v1018, 0
    %1039 = vmatprep.subr.mxu0 0.0
    %1040 = vmatpush1.msra.mxu0 0.0
    %1041 = vmatprep.subr.mxu0 0.0
    %1042 = vmatpush1.msra.mxu0 0.0
    %1043 = vmatprep.subr.mxu0 0.0
    %1044 = vmatpush1.msra.mxu0 0.0
    %1045 = vmatprep.subr.mxu0 0.0
    %1046 = vmatpush1.msra.mxu0 0.0
    %1047 = vmatprep.subr.mxu0 0.0
    %1048 = vmatpush1.msra.mxu0 0.0
    %1049 = vmatprep.subr.mxu0 0.0
    %1050 = vmatpush1.msra.mxu0 0.0
    %1051 = vmatprep.subr.mxu0 0.0
    %1052 = vmatpush1.msra.mxu0 0.0
    %1053 = vmatprep.subr.mxu0 0.0
    %1054 = vmatpush1.msra.mxu0 0.0
    %1055 = vmatprep.subr.mxu0 0.0
    %1056 = vmatpush1.msra.mxu0 0.0
    %1057 = vmatprep.subr.mxu0 0.0
    %1058 = vmatpush1.msra.mxu0 0.0
    %1059 = vmatprep.subr.mxu0 0.0
    %1060 = vmatpush1.msra.mxu0 0.0
    %1061 = vmatprep.subr.mxu0 0.0
    %1062 = vmatpush1.msra.mxu0 0.0
    %1063 = vmatprep.subr.mxu0 0.0
    %1064 = vmatpush1.msra.mxu0 0.0
    %1065 = vmatprep.subr.mxu0 0.0
    %1066 = vmatpush1.msra.mxu0 0.0
    %1067 = vmatprep.subr.mxu0 0.0
    %1068 = vmatpush1.msra.mxu0 0.0
    %1069 = vmatprep.subr.mxu0 0.0
    %1070 = vmatpush1.msra.mxu0 %v194
    %1071 = vmatprep.subr.mxu0 0.0
    %1072 = vmatpush2.msra.mxu0 0.0
    %1073 = vmatprep.subr.mxu0 0.0
    %1074 = vmatpush2.msra.mxu0 0.0
    %1075 = vmatprep.subr.mxu0 0.0
    %1076 = vmatpush2.msra.mxu0 0.0
    %1077 = vmatprep.subr.mxu0 0.0
    %1078 = vmatpush2.msra.mxu0 0.0
    %1079 = vmatprep.subr.mxu0 0.0
    %1080 = vmatpush2.msra.mxu0 0.0
    %1081 = vmatprep.subr.mxu0 0.0
    %1082 = vmatpush2.msra.mxu0 0.0
    %1083 = vmatprep.subr.mxu0 0.0
    %1084 = vmatpush2.msra.mxu0 0.0
    %1085 = vmatprep.subr.mxu0 0.0
    %1086 = vmatpush2.msra.mxu0 0.0
    %1087 = vmatprep.subr.mxu0 0.0
    %1088 = vmatpush2.msra.mxu0 0.0
    %1089 = vmatprep.subr.mxu0 0.0
    %1090 = vmatpush2.msra.mxu0 0.0
    %1091 = vmatprep.subr.mxu0 0.0
    %1092 = vmatpush2.msra.mxu0 0.0
    %1093 = vmatprep.subr.mxu0 0.0
    %1094 = vmatpush2.msra.mxu0 0.0
    %1095 = vmatprep.subr.mxu0 0.0
    %1096 = vmatpush2.msra.mxu0 0.0
    %1097 = vmatprep.subr.mxu0 0.0
    %1098 = vmatpush2.msra.mxu0 0.0
    %1099 = vmatprep.subr.mxu0 0.0
    %1100 = vmatpush2.msra.mxu0 0.0
    %1101 = vmatprep.subr.mxu0 0.0
    %1102 = vmatpush2.msra.mxu0 0.0
    %1103 = vmatprep.mubr.f32.mxu0 0.0
    %1104 = vmatmul.mubr.f32.gmra.mxu0 %v1034
    %v1105 = vpop.f32.mrf.mxu0
    %v1106 = vadd.f32 %v151, %v1105
    %v1107 = vpop.f32.mrf.mxu0
    %1108 = vmatprep.mubr.f32.mxu0 0.0
    %1109 = vmatmul.mubr.f32.gmra.mxu0 %v1037
    %v1110 = vpop.f32.mrf.mxu0
    %v1111 = vadd.f32 %v151, %v1110
    %v1112 = vpop.f32.mrf.mxu0
    %1113 = vdwg.mxu0
    %1114 = vmatprep.subr.mxu0 0.0
    %1115 = vmatpush1.msra.mxu0 0.0
    %1116 = vmatprep.subr.mxu0 0.0
    %1117 = vmatpush1.msra.mxu0 0.0
    %1118 = vmatprep.subr.mxu0 0.0
    %1119 = vmatpush1.msra.mxu0 0.0
    %1120 = vmatprep.subr.mxu0 0.0
    %1121 = vmatpush1.msra.mxu0 0.0
    %1122 = vmatprep.subr.mxu0 0.0
    %1123 = vmatpush1.msra.mxu0 0.0
    %1124 = vmatprep.subr.mxu0 0.0
    %1125 = vmatpush1.msra.mxu0 0.0
    %1126 = vmatprep.subr.mxu0 0.0
    %1127 = vmatpush1.msra.mxu0 0.0
    %1128 = vmatprep.subr.mxu0 0.0
    %1129 = vmatpush1.msra.mxu0 0.0
    %1130 = vmatprep.subr.mxu0 0.0
    %1131 = vmatpush1.msra.mxu0 0.0
    %1132 = vmatprep.subr.mxu0 0.0
    %1133 = vmatpush1.msra.mxu0 0.0
    %1134 = vmatprep.subr.mxu0 0.0
    %1135 = vmatpush1.msra.mxu0 0.0
    %1136 = vmatprep.subr.mxu0 0.0
    %1137 = vmatpush1.msra.mxu0 0.0
    %1138 = vmatprep.subr.mxu0 0.0
    %1139 = vmatpush1.msra.mxu0 0.0
    %1140 = vmatprep.subr.mxu0 0.0
    %1141 = vmatpush1.msra.mxu0 0.0
    %1142 = vmatprep.subr.mxu0 0.0
    %1143 = vmatpush1.msra.mxu0 0.0
    %1144 = vmatprep.subr.mxu0 0.0
    %1145 = vmatpush1.msra.mxu0 %v278
    %1146 = vmatprep.subr.mxu0 0.0
    %1147 = vmatpush2.msra.mxu0 0.0
    %1148 = vmatprep.subr.mxu0 0.0
    %1149 = vmatpush2.msra.mxu0 0.0
    %1150 = vmatprep.subr.mxu0 0.0
    %1151 = vmatpush2.msra.mxu0 0.0
    %1152 = vmatprep.subr.mxu0 0.0
    %1153 = vmatpush2.msra.mxu0 0.0
    %1154 = vmatprep.subr.mxu0 0.0
    %1155 = vmatpush2.msra.mxu0 0.0
    %1156 = vmatprep.subr.mxu0 0.0
    %1157 = vmatpush2.msra.mxu0 0.0
    %1158 = vmatprep.subr.mxu0 0.0
    %1159 = vmatpush2.msra.mxu0 0.0
    %1160 = vmatprep.subr.mxu0 0.0
    %1161 = vmatpush2.msra.mxu0 0.0
    %1162 = vmatprep.subr.mxu0 0.0
    %1163 = vmatpush2.msra.mxu0 0.0
    %1164 = vmatprep.subr.mxu0 0.0
    %1165 = vmatpush2.msra.mxu0 0.0
    %1166 = vmatprep.subr.mxu0 0.0
    %1167 = vmatpush2.msra.mxu0 0.0
    %1168 = vmatprep.subr.mxu0 0.0
    %1169 = vmatpush2.msra.mxu0 0.0
    %1170 = vmatprep.subr.mxu0 0.0
    %1171 = vmatpush2.msra.mxu0 0.0
    %1172 = vmatprep.subr.mxu0 0.0
    %1173 = vmatpush2.msra.mxu0 0.0
    %1174 = vmatprep.subr.mxu0 0.0
    %1175 = vmatpush2.msra.mxu0 0.0
    %1176 = vmatprep.subr.mxu0 0.0
    %1177 = vmatpush2.msra.mxu0 0.0
    %1178 = vmatprep.mubr.f32.mxu0 0.0
    %1179 = vmatmul.mubr.f32.gmra.mxu0 %v1034
    %v1180 = vpop.f32.mrf.mxu0
    %v1181 = vadd.f32 %v275, %v1180
    %v1182 = vpop.f32.mrf.mxu0
    %1183 = vmatprep.mubr.f32.mxu0 0.0
    %1184 = vmatmul.mubr.f32.gmra.mxu0 %v1037
    %v1185 = vpop.f32.mrf.mxu0
    %v1186 = vadd.f32 %v275, %v1185
    %v1187 = vpop.f32.mrf.mxu0
    %1188 = vdwg.mxu0
    %v1189 = vmax.f32 %v1181, 0.0
    %v1190 = vmax.f32 %v1186, 0.0
    %v1191 = vsel %vm357, %v1106, -inf
    %1192 = vmax.xlane.f32.xlu0 %v1191
    %v1193 = vpop.xlane.xlu0 %1192
    %v1194 = vsel %vm357, %v1111, -inf
    %1195 = vmax.xlane.f32.xlu0 %v1194
    %v1196 = vpop.xlane.xlu0 %1195
    %v1197 = vsub.f32 %v1106, %v1193
    %v1198 = vsub.f32 %v1111, %v1196
    %v1199 = vmul.f32 %v1197, 1.442695
    %v1200 = vpow.pop %v1199
    %v1201 = vmul.f32 %v1198, 1.442695
    %v1202 = vpow.pop %v1201
    %v1203 = vsel %vm357, %v1200, 0.0
    %1204 = vadd.xlane.f32.xlu0 %v1203
    %v1205 = vpop.xlane.xlu0 %1204
    %v1206 = vsel %vm357, %v1202, 0.0
    %1207 = vadd.xlane.f32.xlu0 %v1206
    %v1208 = vpop.xlane.xlu0 %1207
    %v1209 = vrcp.pop %v1205
    %v1210 = vrcp.pop %v1208
    %v1211 = vmul.f32 %v1200, %v1209
    %v1212 = vmul.f32 %v1202, %v1210
    %1213 = vxpose.xlu0.b32.start [1/16] %v1211, 128
    %1214 = vxpose.xlu0.b32.cont [2/16] %v1212, 128
    %1215 = vxpose.xlu0.b32.cont [3/16] 0.0, 128
    %1216 = vxpose.xlu0.b32.cont [4/16] 0.0, 128
    %1217 = vxpose.xlu0.b32.cont [5/16] 0.0, 128
    %1218 = vxpose.xlu0.b32.cont [6/16] 0.0, 128
    %1219 = vxpose.xlu0.b32.cont [7/16] 0.0, 128
    %1220 = vxpose.xlu0.b32.cont [8/16] 0.0, 128
    %1221 = vxpose.xlu0.b32.cont [9/16] 0.0, 128
    %1222 = vxpose.xlu0.b32.cont [10/16] 0.0, 128
    %1223 = vxpose.xlu0.b32.cont [11/16] 0.0, 128
    %1224 = vxpose.xlu0.b32.cont [12/16] 0.0, 128
    %1225 = vxpose.xlu0.b32.cont [13/16] 0.0, 128
    %1226 = vxpose.xlu0.b32.cont [14/16] 0.0, 128
    %1227 = vxpose.xlu0.b32.cont [15/16] 0.0, 128
    %1228 = vxpose.xlu0.b32.end [16/16] 0.0, 128
    %v1229 = vpop.trf.xlu0
    %v1230 = vpop.trf.xlu0
    %v1231 = vpop.trf.xlu0
    %v1232 = vpop.trf.xlu0
    %v1233 = vpop.trf.xlu0
    %v1234 = vpop.trf.xlu0
    %v1235 = vpop.trf.xlu0
    %v1236 = vpop.trf.xlu0
    %v1237 = vpop.trf.xlu0
    %v1238 = vpop.trf.xlu0
    %v1239 = vpop.trf.xlu0
    %v1240 = vpop.trf.xlu0
    %v1241 = vpop.trf.xlu0
    %v1242 = vpop.trf.xlu0
    %v1243 = vpop.trf.xlu0
    %v1244 = vpop.trf.xlu0
    %v1246 = vsel %vm73, %v1229, 0
    %1248 = vmatprep.subr.mxu0 0.0
    %1249 = vmatpush1.msra.mxu0 0.0
    %1250 = vmatprep.subr.mxu0 0.0
    %1251 = vmatpush1.msra.mxu0 0.0
    %1252 = vmatprep.subr.mxu0 0.0
    %1253 = vmatpush1.msra.mxu0 0.0
    %1254 = vmatprep.subr.mxu0 0.0
    %1255 = vmatpush1.msra.mxu0 0.0
    %1256 = vmatprep.subr.mxu0 0.0
    %1257 = vmatpush1.msra.mxu0 0.0
    %1258 = vmatprep.subr.mxu0 0.0
    %1259 = vmatpush1.msra.mxu0 0.0
    %1260 = vmatprep.subr.mxu0 0.0
    %1261 = vmatpush1.msra.mxu0 0.0
    %1262 = vmatprep.subr.mxu0 0.0
    %1263 = vmatpush1.msra.mxu0 0.0
    %1264 = vmatprep.subr.mxu0 0.0
    %1265 = vmatpush1.msra.mxu0 0.0
    %1266 = vmatprep.subr.mxu0 0.0
    %1267 = vmatpush1.msra.mxu0 0.0
    %1268 = vmatprep.subr.mxu0 0.0
    %1269 = vmatpush1.msra.mxu0 0.0
    %1270 = vmatprep.subr.mxu0 0.0
    %1271 = vmatpush1.msra.mxu0 0.0
    %1272 = vmatprep.subr.mxu0 0.0
    %1273 = vmatpush1.msra.mxu0 0.0
    %1274 = vmatprep.subr.mxu0 0.0
    %1275 = vmatpush1.msra.mxu0 0.0
    %1276 = vmatprep.subr.mxu0 0.0
    %1277 = vmatpush1.msra.mxu0 %v1190
    %1278 = vmatprep.subr.mxu0 0.0
    %1279 = vmatpush1.msra.mxu0 %v1189
    %1280 = vmatprep.subr.mxu0 0.0
    %1281 = vmatpush2.msra.mxu0 0.0
    %1282 = vmatprep.subr.mxu0 0.0
    %1283 = vmatpush2.msra.mxu0 0.0
    %1284 = vmatprep.subr.mxu0 0.0
    %1285 = vmatpush2.msra.mxu0 0.0
    %1286 = vmatprep.subr.mxu0 0.0
    %1287 = vmatpush2.msra.mxu0 0.0
    %1288 = vmatprep.subr.mxu0 0.0
    %1289 = vmatpush2.msra.mxu0 0.0
    %1290 = vmatprep.subr.mxu0 0.0
    %1291 = vmatpush2.msra.mxu0 0.0
    %1292 = vmatprep.subr.mxu0 0.0
    %1293 = vmatpush2.msra.mxu0 0.0
    %1294 = vmatprep.subr.mxu0 0.0
    %1295 = vmatpush2.msra.mxu0 0.0
    %1296 = vmatprep.subr.mxu0 0.0
    %1297 = vmatpush2.msra.mxu0 0.0
    %1298 = vmatprep.subr.mxu0 0.0
    %1299 = vmatpush2.msra.mxu0 0.0
    %1300 = vmatprep.subr.mxu0 0.0
    %1301 = vmatpush2.msra.mxu0 0.0
    %1302 = vmatprep.subr.mxu0 0.0
    %1303 = vmatpush2.msra.mxu0 0.0
    %1304 = vmatprep.subr.mxu0 0.0
    %1305 = vmatpush2.msra.mxu0 0.0
    %1306 = vmatprep.subr.mxu0 0.0
    %1307 = vmatpush2.msra.mxu0 0.0
    %1308 = vmatprep.subr.mxu0 0.0
    %1309 = vmatpush2.msra.mxu0 0.0
    %1310 = vmatprep.subr.mxu0 0.0
    %1311 = vmatpush2.msra.mxu0 0.0
    %1312 = vmatprep.mubr.f32.mxu0 0.0
    %1313 = vmatmul.mubr.f32.gmra.mxu0 %v1246
    %v1314 = vpop.f32.mrf.mxu0
    %v1315 = vadd.f32 0.0, %v1314
    %v1316 = vpop.f32.mrf.mxu0
    %1317 = vdwg.mxu0
    %1318 = vmatprep.subr.mxu0 0.0
    %1319 = vmatpush1.msra.mxu0 0.0
    %1320 = vmatprep.subr.mxu0 0.0
    %1321 = vmatpush1.msra.mxu0 0.0
    %1322 = vmatprep.subr.mxu0 0.0
    %1323 = vmatpush1.msra.mxu0 0.0
    %1324 = vmatprep.subr.mxu0 0.0
    %1325 = vmatpush1.msra.mxu0 0.0
    %1326 = vmatprep.subr.mxu0 0.0
    %1327 = vmatpush1.msra.mxu0 0.0
    %1328 = vmatprep.subr.mxu0 0.0
    %1329 = vmatpush1.msra.mxu0 0.0
    %1330 = vmatprep.subr.mxu0 0.0
    %1331 = vmatpush1.msra.mxu0 0.0
    %1332 = vmatprep.subr.mxu0 0.0
    %1333 = vmatpush1.msra.mxu0 0.0
    %1334 = vmatprep.subr.mxu0 0.0
    %1335 = vmatpush1.msra.mxu0 0.0
    %1336 = vmatprep.subr.mxu0 0.0
    %1337 = vmatpush1.msra.mxu0 0.0
    %1338 = vmatprep.subr.mxu0 0.0
    %1339 = vmatpush1.msra.mxu0 0.0
    %1340 = vmatprep.subr.mxu0 0.0
    %1341 = vmatpush1.msra.mxu0 0.0
    %1342 = vmatprep.subr.mxu0 0.0
    %1343 = vmatpush1.msra.mxu0 0.0
    %1344 = vmatprep.subr.mxu0 0.0
    %1345 = vmatpush1.msra.mxu0 0.0
    %1346 = vmatprep.subr.mxu0 0.0
    %1347 = vmatpush1.msra.mxu0 %v62
    %1348 = vmatprep.subr.mxu0 0.0
    %1349 = vmatpush1.msra.mxu0 %v61
    %1350 = vmatprep.subr.mxu0 0.0
    %1351 = vmatpush2.msra.mxu0 0.0
    %1352 = vmatprep.subr.mxu0 0.0
    %1353 = vmatpush2.msra.mxu0 0.0
    %1354 = vmatprep.subr.mxu0 0.0
    %1355 = vmatpush2.msra.mxu0 0.0
    %1356 = vmatprep.subr.mxu0 0.0
    %1357 = vmatpush2.msra.mxu0 0.0
    %1358 = vmatprep.subr.mxu0 0.0
    %1359 = vmatpush2.msra.mxu0 0.0
    %1360 = vmatprep.subr.mxu0 0.0
    %1361 = vmatpush2.msra.mxu0 0.0
    %1362 = vmatprep.subr.mxu0 0.0
    %1363 = vmatpush2.msra.mxu0 0.0
    %1364 = vmatprep.subr.mxu0 0.0
    %1365 = vmatpush2.msra.mxu0 0.0
    %1366 = vmatprep.subr.mxu0 0.0
    %1367 = vmatpush2.msra.mxu0 0.0
    %1368 = vmatprep.subr.mxu0 0.0
    %1369 = vmatpush2.msra.mxu0 0.0
    %1370 = vmatprep.subr.mxu0 0.0
    %1371 = vmatpush2.msra.mxu0 0.0
    %1372 = vmatprep.subr.mxu0 0.0
    %1373 = vmatpush2.msra.mxu0 0.0
    %1374 = vmatprep.subr.mxu0 0.0
    %1375 = vmatpush2.msra.mxu0 0.0
    %1376 = vmatprep.subr.mxu0 0.0
    %1377 = vmatpush2.msra.mxu0 0.0
    %1378 = vmatprep.subr.mxu0 0.0
    %1379 = vmatpush2.msra.mxu0 0.0
    %1380 = vmatprep.subr.mxu0 0.0
    %1381 = vmatpush2.msra.mxu0 0.0
    %1382 = vmatprep.mubr.f32.mxu0 0.0
    %1383 = vmatmul.mubr.f32.gmra.mxu0 %v1246
    %v1384 = vpop.f32.mrf.mxu0
    %v1385 = vadd.f32 0.0, %v1384
    %v1386 = vpop.f32.mrf.mxu0
    %1387 = vdwg.mxu0
    %v1389 = vsel %vm73, %v1385, 0
    %1391 = vmatprep.subr.mxu0 0.0
    %1392 = vmatpush1.msra.mxu0 0.0
    %1393 = vmatprep.subr.mxu0 0.0
    %1394 = vmatpush1.msra.mxu0 0.0
    %1395 = vmatprep.subr.mxu0 0.0
    %1396 = vmatpush1.msra.mxu0 0.0
    %1397 = vmatprep.subr.mxu0 0.0
    %1398 = vmatpush1.msra.mxu0 0.0
    %1399 = vmatprep.subr.mxu0 0.0
    %1400 = vmatpush1.msra.mxu0 0.0
    %1401 = vmatprep.subr.mxu0 0.0
    %1402 = vmatpush1.msra.mxu0 0.0
    %1403 = vmatprep.subr.mxu0 0.0
    %1404 = vmatpush1.msra.mxu0 0.0
    %1405 = vmatprep.subr.mxu0 0.0
    %1406 = vmatpush1.msra.mxu0 0.0
    %1407 = vmatprep.subr.mxu0 0.0
    %1408 = vmatpush1.msra.mxu0 0.0
    %1409 = vmatprep.subr.mxu0 0.0
    %1410 = vmatpush1.msra.mxu0 0.0
    %1411 = vmatprep.subr.mxu0 0.0
    %1412 = vmatpush1.msra.mxu0 0.0
    %1413 = vmatprep.subr.mxu0 0.0
    %1414 = vmatpush1.msra.mxu0 0.0
    %1415 = vmatprep.subr.mxu0 0.0
    %1416 = vmatpush1.msra.mxu0 0.0
    %1417 = vmatprep.subr.mxu0 0.0
    %1418 = vmatpush1.msra.mxu0 0.0
    %1419 = vmatprep.subr.mxu0 0.0
    %1420 = vmatpush1.msra.mxu0 %v1212
    %1421 = vmatprep.subr.mxu0 0.0
    %1422 = vmatpush1.msra.mxu0 %v1211
    %1423 = vmatprep.subr.mxu0 0.0
    %1424 = vmatpush2.msra.mxu0 0.0
    %1425 = vmatprep.subr.mxu0 0.0
    %1426 = vmatpush2.msra.mxu0 0.0
    %1427 = vmatprep.subr.mxu0 0.0
    %1428 = vmatpush2.msra.mxu0 0.0
    %1429 = vmatprep.subr.mxu0 0.0
    %1430 = vmatpush2.msra.mxu0 0.0
    %1431 = vmatprep.subr.mxu0 0.0
    %1432 = vmatpush2.msra.mxu0 0.0
    %1433 = vmatprep.subr.mxu0 0.0
    %1434 = vmatpush2.msra.mxu0 0.0
    %1435 = vmatprep.subr.mxu0 0.0
    %1436 = vmatpush2.msra.mxu0 0.0
    %1437 = vmatprep.subr.mxu0 0.0
    %1438 = vmatpush2.msra.mxu0 0.0
    %1439 = vmatprep.subr.mxu0 0.0
    %1440 = vmatpush2.msra.mxu0 0.0
    %1441 = vmatprep.subr.mxu0 0.0
    %1442 = vmatpush2.msra.mxu0 0.0
    %1443 = vmatprep.subr.mxu0 0.0
    %1444 = vmatpush2.msra.mxu0 0.0
    %1445 = vmatprep.subr.mxu0 0.0
    %1446 = vmatpush2.msra.mxu0 0.0
    %1447 = vmatprep.subr.mxu0 0.0
    %1448 = vmatpush2.msra.mxu0 0.0
    %1449 = vmatprep.subr.mxu0 0.0
    %1450 = vmatpush2.msra.mxu0 0.0
    %1451 = vmatprep.subr.mxu0 0.0
    %1452 = vmatpush2.msra.mxu0 0.0
    %1453 = vmatprep.subr.mxu0 0.0
    %1454 = vmatpush2.msra.mxu0 0.0
    %1455 = vmatprep.mubr.f32.mxu0 0.0
    %1456 = vmatmul.mubr.f32.gmra.mxu0 %v1389
    %v1457 = vpop.f32.mrf.mxu0
    %v1458 = vadd.f32 0.0, %v1457
    %v1459 = vpop.f32.mrf.mxu0
    %1460 = vdwg.mxu0
    %v1461 = vsel %vm632, 2.0, %v1458
    %v1462 = vsel %vm357, %v1461, 0.0
    %1463 = vadd.xlane.f32.xlu0 %v1462
    %v1464 = vpop.xlane.xlu0 %1463
    %v1465 = vmax.f32 %v1464, 1.0
    %v1466 = vrsqrt.pop %v1465
    %v1467 = vmul.f32 %v639, %v1466
    %v1469 = vsel %vm357, %v1467, 0
    %1471 = vmatprep.subr.mxu0 0.0
    %1472 = vmatpush1.msra.mxu0 0.0
    %1473 = vmatprep.subr.mxu0 0.0
    %1474 = vmatpush1.msra.mxu0 0.0
    %1475 = vmatprep.subr.mxu0 0.0
    %1476 = vmatpush1.msra.mxu0 0.0
    %1477 = vmatprep.subr.mxu0 0.0
    %1478 = vmatpush1.msra.mxu0 0.0
    %1479 = vmatprep.subr.mxu0 0.0
    %1480 = vmatpush1.msra.mxu0 0.0
    %1481 = vmatprep.subr.mxu0 0.0
    %1482 = vmatpush1.msra.mxu0 0.0
    %1483 = vmatprep.subr.mxu0 0.0
    %1484 = vmatpush1.msra.mxu0 0.0
    %1485 = vmatprep.subr.mxu0 0.0
    %1486 = vmatpush1.msra.mxu0 0.0
    %1487 = vmatprep.subr.mxu0 0.0
    %1488 = vmatpush1.msra.mxu0 0.0
    %1489 = vmatprep.subr.mxu0 0.0
    %1490 = vmatpush1.msra.mxu0 0.0
    %1491 = vmatprep.subr.mxu0 0.0
    %1492 = vmatpush1.msra.mxu0 0.0
    %1493 = vmatprep.subr.mxu0 0.0
    %1494 = vmatpush1.msra.mxu0 0.0
    %1495 = vmatprep.subr.mxu0 0.0
    %1496 = vmatpush1.msra.mxu0 0.0
    %1497 = vmatprep.subr.mxu0 0.0
    %1498 = vmatpush1.msra.mxu0 0.0
    %1499 = vmatprep.subr.mxu0 0.0
    %1500 = vmatpush1.msra.mxu0 0.0
    %1501 = vmatprep.subr.mxu0 0.0
    %1502 = vmatpush1.msra.mxu0 %v1461
    %1503 = vmatprep.subr.mxu0 0.0
    %1504 = vmatpush2.msra.mxu0 0.0
    %1505 = vmatprep.subr.mxu0 0.0
    %1506 = vmatpush2.msra.mxu0 0.0
    %1507 = vmatprep.subr.mxu0 0.0
    %1508 = vmatpush2.msra.mxu0 0.0
    %1509 = vmatprep.subr.mxu0 0.0
    %1510 = vmatpush2.msra.mxu0 0.0
    %1511 = vmatprep.subr.mxu0 0.0
    %1512 = vmatpush2.msra.mxu0 0.0
    %1513 = vmatprep.subr.mxu0 0.0
    %1514 = vmatpush2.msra.mxu0 0.0
    %1515 = vmatprep.subr.mxu0 0.0
    %1516 = vmatpush2.msra.mxu0 0.0
    %1517 = vmatprep.subr.mxu0 0.0
    %1518 = vmatpush2.msra.mxu0 0.0
    %1519 = vmatprep.subr.mxu0 0.0
    %1520 = vmatpush2.msra.mxu0 0.0
    %1521 = vmatprep.subr.mxu0 0.0
    %1522 = vmatpush2.msra.mxu0 0.0
    %1523 = vmatprep.subr.mxu0 0.0
    %1524 = vmatpush2.msra.mxu0 0.0
    %1525 = vmatprep.subr.mxu0 0.0
    %1526 = vmatpush2.msra.mxu0 0.0
    %1527 = vmatprep.subr.mxu0 0.0
    %1528 = vmatpush2.msra.mxu0 0.0
    %1529 = vmatprep.subr.mxu0 0.0
    %1530 = vmatpush2.msra.mxu0 0.0
    %1531 = vmatprep.subr.mxu0 0.0
    %1532 = vmatpush2.msra.mxu0 0.0
    %1533 = vmatprep.subr.mxu0 0.0
    %1534 = vmatpush2.msra.mxu0 0.0
    %1535 = vmatprep.mubr.f32.mxu0 0.0
    %1536 = vmatmul.mubr.f32.gmra.mxu0 %v1469
    %v1537 = vpop.f32.mrf.mxu0
    %v1538 = vadd.f32 0.0, %v1537
    %v1539 = vpop.f32.mrf.mxu0
    %1540 = vdwg.mxu0
    %v1542 = vsel %vm357, %v1538, 0
    %1544 = vmatprep.subr.mxu0 0.0
    %1545 = vmatpush1.msra.mxu0 0.0
    %1546 = vmatprep.subr.mxu0 0.0
    %1547 = vmatpush1.msra.mxu0 0.0
    %1548 = vmatprep.subr.mxu0 0.0
    %1549 = vmatpush1.msra.mxu0 0.0
    %1550 = vmatprep.subr.mxu0 0.0
    %1551 = vmatpush1.msra.mxu0 0.0
    %1552 = vmatprep.subr.mxu0 0.0
    %1553 = vmatpush1.msra.mxu0 0.0
    %1554 = vmatprep.subr.mxu0 0.0
    %1555 = vmatpush1.msra.mxu0 0.0
    %1556 = vmatprep.subr.mxu0 0.0
    %1557 = vmatpush1.msra.mxu0 0.0
    %1558 = vmatprep.subr.mxu0 0.0
    %1559 = vmatpush1.msra.mxu0 0.0
    %1560 = vmatprep.subr.mxu0 0.0
    %1561 = vmatpush1.msra.mxu0 0.0
    %1562 = vmatprep.subr.mxu0 0.0
    %1563 = vmatpush1.msra.mxu0 0.0
    %1564 = vmatprep.subr.mxu0 0.0
    %1565 = vmatpush1.msra.mxu0 0.0
    %1566 = vmatprep.subr.mxu0 0.0
    %1567 = vmatpush1.msra.mxu0 0.0
    %1568 = vmatprep.subr.mxu0 0.0
    %1569 = vmatpush1.msra.mxu0 0.0
    %1570 = vmatprep.subr.mxu0 0.0
    %1571 = vmatpush1.msra.mxu0 0.0
    %1572 = vmatprep.subr.mxu0 0.0
    %1573 = vmatpush1.msra.mxu0 0.0
    %1574 = vmatprep.subr.mxu0 0.0
    %1575 = vmatpush1.msra.mxu0 %v1467
    %1576 = vmatprep.subr.mxu0 0.0
    %1577 = vmatpush2.msra.mxu0 0.0
    %1578 = vmatprep.subr.mxu0 0.0
    %1579 = vmatpush2.msra.mxu0 0.0
    %1580 = vmatprep.subr.mxu0 0.0
    %1581 = vmatpush2.msra.mxu0 0.0
    %1582 = vmatprep.subr.mxu0 0.0
    %1583 = vmatpush2.msra.mxu0 0.0
    %1584 = vmatprep.subr.mxu0 0.0
    %1585 = vmatpush2.msra.mxu0 0.0
    %1586 = vmatprep.subr.mxu0 0.0
    %1587 = vmatpush2.msra.mxu0 0.0
    %1588 = vmatprep.subr.mxu0 0.0
    %1589 = vmatpush2.msra.mxu0 0.0
    %1590 = vmatprep.subr.mxu0 0.0
    %1591 = vmatpush2.msra.mxu0 0.0
    %1592 = vmatprep.subr.mxu0 0.0
    %1593 = vmatpush2.msra.mxu0 0.0
    %1594 = vmatprep.subr.mxu0 0.0
    %1595 = vmatpush2.msra.mxu0 0.0
    %1596 = vmatprep.subr.mxu0 0.0
    %1597 = vmatpush2.msra.mxu0 0.0
    %1598 = vmatprep.subr.mxu0 0.0
    %1599 = vmatpush2.msra.mxu0 0.0
    %1600 = vmatprep.subr.mxu0 0.0
    %1601 = vmatpush2.msra.mxu0 0.0
    %1602 = vmatprep.subr.mxu0 0.0
    %1603 = vmatpush2.msra.mxu0 0.0
    %1604 = vmatprep.subr.mxu0 0.0
    %1605 = vmatpush2.msra.mxu0 0.0
    %1606 = vmatprep.subr.mxu0 0.0
    %1607 = vmatpush2.msra.mxu0 0.0
    %1608 = vmatprep.mubr.f32.mxu0 0.0
    %1609 = vmatmul.mubr.f32.gmra.mxu0 %v1542
    %v1610 = vpop.f32.mrf.mxu0
    %v1611 = vadd.f32 0.0, %v1610
    %v1612 = vpop.f32.mrf.mxu0
    %1613 = vdwg.mxu0
    %v1615 = vsel %vm787, %v1315, 0
    %1617 = vmatprep.subr.mxu0 0.0
    %1618 = vmatpush1.msra.mxu0 0.0
    %1619 = vmatprep.subr.mxu0 0.0
    %1620 = vmatpush1.msra.mxu0 0.0
    %1621 = vmatprep.subr.mxu0 0.0
    %1622 = vmatpush1.msra.mxu0 0.0
    %1623 = vmatprep.subr.mxu0 0.0
    %1624 = vmatpush1.msra.mxu0 0.0
    %1625 = vmatprep.subr.mxu0 0.0
    %1626 = vmatpush1.msra.mxu0 0.0
    %1627 = vmatprep.subr.mxu0 0.0
    %1628 = vmatpush1.msra.mxu0 0.0
    %1629 = vmatprep.subr.mxu0 0.0
    %1630 = vmatpush1.msra.mxu0 0.0
    %1631 = vmatprep.subr.mxu0 0.0
    %1632 = vmatpush1.msra.mxu0 0.0
    %1633 = vmatprep.subr.mxu0 0.0
    %1634 = vmatpush1.msra.mxu0 0.0
    %1635 = vmatprep.subr.mxu0 0.0
    %1636 = vmatpush1.msra.mxu0 0.0
    %1637 = vmatprep.subr.mxu0 0.0
    %1638 = vmatpush1.msra.mxu0 0.0
    %1639 = vmatprep.subr.mxu0 0.0
    %1640 = vmatpush1.msra.mxu0 0.0
    %1641 = vmatprep.subr.mxu0 0.0
    %1642 = vmatpush1.msra.mxu0 %v70
    %1643 = vmatprep.subr.mxu0 0.0
    %1644 = vmatpush1.msra.mxu0 %v69
    %1645 = vmatprep.subr.mxu0 0.0
    %1646 = vmatpush1.msra.mxu0 %v68
    %1647 = vmatprep.subr.mxu0 0.0
    %1648 = vmatpush1.msra.mxu0 %v67
    %1649 = vmatprep.subr.mxu0 0.0
    %1650 = vmatpush2.msra.mxu0 0.0
    %1651 = vmatprep.subr.mxu0 0.0
    %1652 = vmatpush2.msra.mxu0 0.0
    %1653 = vmatprep.subr.mxu0 0.0
    %1654 = vmatpush2.msra.mxu0 0.0
    %1655 = vmatprep.subr.mxu0 0.0
    %1656 = vmatpush2.msra.mxu0 0.0
    %1657 = vmatprep.subr.mxu0 0.0
    %1658 = vmatpush2.msra.mxu0 0.0
    %1659 = vmatprep.subr.mxu0 0.0
    %1660 = vmatpush2.msra.mxu0 0.0
    %1661 = vmatprep.subr.mxu0 0.0
    %1662 = vmatpush2.msra.mxu0 0.0
    %1663 = vmatprep.subr.mxu0 0.0
    %1664 = vmatpush2.msra.mxu0 0.0
    %1665 = vmatprep.subr.mxu0 0.0
    %1666 = vmatpush2.msra.mxu0 0.0
    %1667 = vmatprep.subr.mxu0 0.0
    %1668 = vmatpush2.msra.mxu0 0.0
    %1669 = vmatprep.subr.mxu0 0.0
    %1670 = vmatpush2.msra.mxu0 0.0
    %1671 = vmatprep.subr.mxu0 0.0
    %1672 = vmatpush2.msra.mxu0 0.0
    %1673 = vmatprep.subr.mxu0 0.0
    %1674 = vmatpush2.msra.mxu0 0.0
    %1675 = vmatprep.subr.mxu0 0.0
    %1676 = vmatpush2.msra.mxu0 0.0
    %1677 = vmatprep.subr.mxu0 0.0
    %1678 = vmatpush2.msra.mxu0 0.0
    %1679 = vmatprep.subr.mxu0 0.0
    %1680 = vmatpush2.msra.mxu0 0.0
    %1681 = vmatprep.mubr.f32.mxu0 0.0
    %1682 = vmatmul.mubr.f32.gmra.mxu0 %v1615
    %v1683 = vpop.f32.mrf.mxu0
    %v1684 = vadd.f32 0.0, %v1683
    %v1685 = vpop.f32.mrf.mxu0
    %1686 = vdwg.mxu0
    %v1688 = vsel %vm357, %v1611, 0
    %1690 = vmatprep.subr.mxu0 0.0
    %1691 = vmatpush1.msra.mxu0 0.0
    %1692 = vmatprep.subr.mxu0 0.0
    %1693 = vmatpush1.msra.mxu0 0.0
    %1694 = vmatprep.subr.mxu0 0.0
    %1695 = vmatpush1.msra.mxu0 0.0
    %1696 = vmatprep.subr.mxu0 0.0
    %1697 = vmatpush1.msra.mxu0 0.0
    %1698 = vmatprep.subr.mxu0 0.0
    %1699 = vmatpush1.msra.mxu0 0.0
    %1700 = vmatprep.subr.mxu0 0.0
    %1701 = vmatpush1.msra.mxu0 0.0
    %1702 = vmatprep.subr.mxu0 0.0
    %1703 = vmatpush1.msra.mxu0 0.0
    %1704 = vmatprep.subr.mxu0 0.0
    %1705 = vmatpush1.msra.mxu0 0.0
    %1706 = vmatprep.subr.mxu0 0.0
    %1707 = vmatpush1.msra.mxu0 0.0
    %1708 = vmatprep.subr.mxu0 0.0
    %1709 = vmatpush1.msra.mxu0 0.0
    %1710 = vmatprep.subr.mxu0 0.0
    %1711 = vmatpush1.msra.mxu0 0.0
    %1712 = vmatprep.subr.mxu0 0.0
    %1713 = vmatpush1.msra.mxu0 0.0
    %1714 = vmatprep.subr.mxu0 0.0
    %1715 = vmatpush1.msra.mxu0 0.0
    %1716 = vmatprep.subr.mxu0 0.0
    %1717 = vmatpush1.msra.mxu0 0.0
    %1718 = vmatprep.subr.mxu0 0.0
    %1719 = vmatpush1.msra.mxu0 0.0
    %1720 = vmatprep.subr.mxu0 0.0
    %1721 = vmatpush1.msra.mxu0 %v1684
    %1722 = vmatprep.subr.mxu0 0.0
    %1723 = vmatpush2.msra.mxu0 0.0
    %1724 = vmatprep.subr.mxu0 0.0
    %1725 = vmatpush2.msra.mxu0 0.0
    %1726 = vmatprep.subr.mxu0 0.0
    %1727 = vmatpush2.msra.mxu0 0.0
    %1728 = vmatprep.subr.mxu0 0.0
    %1729 = vmatpush2.msra.mxu0 0.0
    %1730 = vmatprep.subr.mxu0 0.0
    %1731 = vmatpush2.msra.mxu0 0.0
    %1732 = vmatprep.subr.mxu0 0.0
    %1733 = vmatpush2.msra.mxu0 0.0
    %1734 = vmatprep.subr.mxu0 0.0
    %1735 = vmatpush2.msra.mxu0 0.0
    %1736 = vmatprep.subr.mxu0 0.0
    %1737 = vmatpush2.msra.mxu0 0.0
    %1738 = vmatprep.subr.mxu0 0.0
    %1739 = vmatpush2.msra.mxu0 0.0
    %1740 = vmatprep.subr.mxu0 0.0
    %1741 = vmatpush2.msra.mxu0 0.0
    %1742 = vmatprep.subr.mxu0 0.0
    %1743 = vmatpush2.msra.mxu0 0.0
    %1744 = vmatprep.subr.mxu0 0.0
    %1745 = vmatpush2.msra.mxu0 0.0
    %1746 = vmatprep.subr.mxu0 0.0
    %1747 = vmatpush2.msra.mxu0 0.0
    %1748 = vmatprep.subr.mxu0 0.0
    %1749 = vmatpush2.msra.mxu0 0.0
    %1750 = vmatprep.subr.mxu0 0.0
    %1751 = vmatpush2.msra.mxu0 0.0
    %1752 = vmatprep.subr.mxu0 0.0
    %1753 = vmatpush2.msra.mxu0 0.0
    %1754 = vmatprep.mubr.f32.mxu0 0.0
    %1755 = vmatmul.mubr.f32.gmra.mxu0 %v1688
    %v1756 = vpop.f32.mrf.mxu0
    %v1757 = vadd.f32 %v865, %v1756
    %v1758 = vpop.f32.mrf.mxu0
    %1759 = vdwg.mxu0
    %v1760 = vmax.f32 %v1757, 0.0
    %1761 = vst.msk [vmem:[#allocation2 + $0x1] sm:$0x1] %vm941, %v1760
    %v1764 = vunpack.c.l.s4 1983009808
    %v1765 = vunpack.c.0.s8 %v1764
    %v1766 = vlaneseq
    %v1767 = vshrl.u32 %v1766, 7
    %v1768 = vsub.s32 %v1765, %v1767
    %v1769 = vrot.slane %v1760, %v1768
    %v1770 = vrot.slane %v1769, 7
    %v1771 = vrot.slane %v1770, 2
    %1772 = vrot.lane.b32.xlu0 %v1771, 32
    %v1773 = vpop.permute.xlu0 %1772
    %1775 = vst.msk [vmem:[#allocation2 + $0x1] sm:$0x1] %vm956, %v1773
    %v1776 = vcombine.high %v1769, %v1769
    %1777 = vrot.lane.b32.xlu0 %v1776, 64
    %v1778 = vpop.permute.xlu0 %1777
    %1780 = vst.msk [vmem:[#allocation2 + $0x1] sm:$0x1] %vm962, %v1778
    %v1781 = vrot.slane %v1776, 7
    %v1782 = vrot.slane %v1781, 2
    %1783 = vrot.lane.b32.xlu0 %v1782, 96
    %v1784 = vpop.permute.xlu0 %1783
    %1786 = vst.msk [vmem:[#allocation2 + $0x1] sm:$0x1] %vm969, %v1784
    %v1787 = vcombine.high %v1760, %v1760
    %v1789 = vunpack.c.l.s4 1983009808
    %v1790 = vunpack.c.0.s8 %v1789
    %v1791 = vlaneseq
    %v1792 = vshrl.u32 %v1791, 7
    %v1793 = vsub.s32 %v1790, %v1792
    %v1794 = vrot.slane %v1787, %v1793
    %1796 = vst.msk [vmem:[#allocation2 + $0x3] sm:$0x1] %vm941, %v1794
    %v1797 = vrot.slane %v1794, 7
    %v1798 = vrot.slane %v1797, 2
    %1799 = vrot.lane.b32.xlu0 %v1798, 32
    %v1800 = vpop.permute.xlu0 %1799
    %1802 = vst.msk [vmem:[#allocation2 + $0x3] sm:$0x1] %vm956, %v1800
    %v1803 = vcombine.high %v1794, %v1794
    %1804 = vrot.lane.b32.xlu0 %v1803, 64
    %v1805 = vpop.permute.xlu0 %1804
    %1807 = vst.msk [vmem:[#allocation2 + $0x3] sm:$0x1] %vm962, %v1805
    %v1808 = vrot.slane %v1803, 7
    %v1809 = vrot.slane %v1808, 2
    %1810 = vrot.lane.b32.xlu0 %v1809, 96
    %v1811 = vpop.permute.xlu0 %1810
    %1813 = vst.msk [vmem:[#allocation2 + $0x3] sm:$0x1] %vm969, %v1811
    %v1814 = vld [vmem:[#allocation2] sm:$0xf]
    %v1815 = vld [vmem:[#allocation3] sm:$0xff]
    %v1816 = vld [vmem:[#allocation3 + $0x8] sm:$0xff]
    %v1817 = vld [vmem:[#allocation3 + $0x10] sm:$0xff]
    %v1818 = vld [vmem:[#allocation3 + $0x18] sm:$0xff]
    %v1819 = vld [vmem:[#allocation3 + $0x20] sm:$0xff]
    %v1820 = vld [vmem:[#allocation3 + $0x28] sm:$0xff]
    %v1821 = vld [vmem:[#allocation3 + $0x30] sm:$0xff]
    %v1822 = vld [vmem:[#allocation3 + $0x38] sm:$0xff]
    %v1823 = vld [vmem:[#allocation3 + $0x40] sm:$0xff]
    %v1824 = vld [vmem:[#allocation3 + $0x48] sm:$0xff]
    %v1825 = vld [vmem:[#allocation3 + $0x50] sm:$0xff]
    %v1826 = vld [vmem:[#allocation3 + $0x58] sm:$0xff]
    %v1827 = vld [vmem:[#allocation3 + $0x60] sm:$0xff]
    %v1828 = vld [vmem:[#allocation3 + $0x68] sm:$0xff]
    %v1829 = vld [vmem:[#allocation3 + $0x70] sm:$0xff]
    %v1830 = vld [vmem:[#allocation3 + $0x78] sm:$0xff]
    %v1831 = vld [vmem:[#allocation3 + $0x80] sm:$0xff]
    %v1832 = vld [vmem:[#allocation3 + $0x88] sm:$0xff]
    %v1833 = vld [vmem:[#allocation3 + $0x90] sm:$0xff]
    %v1834 = vld [vmem:[#allocation3 + $0x98] sm:$0xff]
    %v1835 = vld [vmem:[#allocation3 + $0xa0] sm:$0xff]
    %v1836 = vld [vmem:[#allocation3 + $0xa8] sm:$0xff]
    %v1837 = vld [vmem:[#allocation3 + $0xb0] sm:$0xff]
    %v1838 = vld [vmem:[#allocation3 + $0xb8] sm:$0xff]
    %v1839 = vld [vmem:[#allocation3 + $0xc0] sm:$0xff]
    %v1840 = vld [vmem:[#allocation3 + $0xc8] sm:$0xff]
    %v1841 = vld [vmem:[#allocation3 + $0xd0] sm:$0xff]
    %v1842 = vld [vmem:[#allocation3 + $0xd8] sm:$0xff]
    %v1843 = vld [vmem:[#allocation3 + $0xe0] sm:$0xff]
    %v1844 = vld [vmem:[#allocation3 + $0xe8] sm:$0xff]
    %v1845 = vld [vmem:[#allocation3 + $0xf0] sm:$0xff]
    %v1846 = vld [vmem:[#allocation3 + $0xf8] sm:$0xff]
    %v1847 = vld [vmem:[#allocation3 + $0x100] sm:$0xff]
    %v1848 = vld [vmem:[#allocation3 + $0x108] sm:$0xff]
    %v1849 = vld [vmem:[#allocation3 + $0x110] sm:$0xff]
    %v1850 = vld [vmem:[#allocation3 + $0x118] sm:$0xff]
    %v1851 = vld [vmem:[#allocation3 + $0x120] sm:$0xff]
    %v1852 = vld [vmem:[#allocation3 + $0x128] sm:$0xff]
    %v1853 = vld [vmem:[#allocation3 + $0x130] sm:$0xff]
    %v1854 = vld [vmem:[#allocation3 + $0x138] sm:$0xff]
    %v1855 = vld [vmem:[#allocation3 + $0x140] sm:$0xff]
    %v1856 = vld [vmem:[#allocation3 + $0x148] sm:$0xff]
    %v1857 = vld [vmem:[#allocation3 + $0x150] sm:$0xff]
    %v1858 = vld [vmem:[#allocation3 + $0x158] sm:$0xff]
    %v1859 = vld [vmem:[#allocation3 + $0x160] sm:$0xff]
    %v1860 = vld [vmem:[#allocation3 + $0x168] sm:$0xff]
    %v1861 = vld [vmem:[#allocation3 + $0x170] sm:$0xff]
    %v1862 = vld [vmem:[#allocation3 + $0x178] sm:$0xff]
    %v1863 = vld [vmem:[#allocation3 + $0x180] sm:$0xff]
    %v1864 = vld [vmem:[#allocation3 + $0x188] sm:$0xff]
    %v1865 = vld [vmem:[#allocation3 + $0x190] sm:$0xff]
    %v1866 = vld [vmem:[#allocation3 + $0x198] sm:$0xff]
    %v1867 = vld [vmem:[#allocation3 + $0x1a0] sm:$0xff]
    %v1868 = vld [vmem:[#allocation3 + $0x1a8] sm:$0xff]
    %v1869 = vld [vmem:[#allocation3 + $0x1b0] sm:$0xff]
    %v1870 = vld [vmem:[#allocation3 + $0x1b8] sm:$0xff]
    %v1871 = vld [vmem:[#allocation3 + $0x1c0] sm:$0xff]
    %v1872 = vld [vmem:[#allocation3 + $0x1c8] sm:$0xff]
    %v1873 = vld [vmem:[#allocation3 + $0x1d0] sm:$0xff]
    %v1874 = vld [vmem:[#allocation3 + $0x1d8] sm:$0xff]
    %v1875 = vld [vmem:[#allocation3 + $0x1e0] sm:$0xff]
    %v1876 = vld [vmem:[#allocation3 + $0x1e8] sm:$0xff]
    %v1877 = vld [vmem:[#allocation3 + $0x1f0] sm:$0xff]
    %v1878 = vld [vmem:[#allocation3 + $0x1f8] sm:$0xff]
    %v1879 = vld [vmem:[#allocation3 + $0x200] sm:$0xff]
    %v1880 = vld [vmem:[#allocation3 + $0x208] sm:$0xff]
    %v1881 = vld [vmem:[#allocation3 + $0x210] sm:$0xff]
    %v1882 = vld [vmem:[#allocation3 + $0x218] sm:$0xff]
    %v1883 = vld [vmem:[#allocation3 + $0x220] sm:$0xff]
    %v1884 = vld [vmem:[#allocation3 + $0x228] sm:$0xff]
    %v1885 = vld [vmem:[#allocation3 + $0x230] sm:$0xff]
    %v1886 = vld [vmem:[#allocation3 + $0x238] sm:$0xff]
    %v1887 = vld [vmem:[#allocation3 + $0x240] sm:$0xff]
    %v1888 = vld [vmem:[#allocation3 + $0x248] sm:$0xff]
    %v1889 = vld [vmem:[#allocation3 + $0x250] sm:$0xff]
    %v1890 = vld [vmem:[#allocation3 + $0x258] sm:$0xff]
    %v1891 = vld [vmem:[#allocation3 + $0x260] sm:$0xff]
    %v1892 = vld [vmem:[#allocation3 + $0x268] sm:$0xff]
    %v1893 = vld [vmem:[#allocation3 + $0x270] sm:$0xff]
    %v1894 = vld [vmem:[#allocation3 + $0x278] sm:$0xff]
    %v1895 = vld [vmem:[#allocation3 + $0x280] sm:$0xff]
    %v1896 = vld [vmem:[#allocation3 + $0x288] sm:$0xff]
    %v1897 = vld [vmem:[#allocation3 + $0x290] sm:$0xff]
    %v1898 = vld [vmem:[#allocation3 + $0x298] sm:$0xff]
    %v1899 = vld [vmem:[#allocation3 + $0x2a0] sm:$0xff]
    %v1900 = vld [vmem:[#allocation3 + $0x2a8] sm:$0xff]
    %v1901 = vld [vmem:[#allocation3 + $0x2b0] sm:$0xff]
    %v1902 = vld [vmem:[#allocation3 + $0x2b8] sm:$0xff]
    %v1903 = vld [vmem:[#allocation3 + $0x2c0] sm:$0xff]
    %v1904 = vld [vmem:[#allocation3 + $0x2c8] sm:$0xff]
    %v1905 = vld [vmem:[#allocation3 + $0x2d0] sm:$0xff]
    %v1906 = vld [vmem:[#allocation3 + $0x2d8] sm:$0xff]
    %v1907 = vld [vmem:[#allocation3 + $0x2e0] sm:$0xff]
    %v1908 = vld [vmem:[#allocation3 + $0x2e8] sm:$0xff]
    %v1909 = vld [vmem:[#allocation3 + $0x2f0] sm:$0xff]
    %v1910 = vld [vmem:[#allocation3 + $0x2f8] sm:$0xff]
    %v1911 = vld [vmem:[#allocation3 + $0x300] sm:$0xff]
    %v1912 = vld [vmem:[#allocation3 + $0x308] sm:$0xff]
    %v1913 = vld [vmem:[#allocation3 + $0x310] sm:$0xff]
    %v1914 = vld [vmem:[#allocation3 + $0x318] sm:$0xff]
    %v1915 = vld [vmem:[#allocation3 + $0x320] sm:$0xff]
    %v1916 = vld [vmem:[#allocation3 + $0x328] sm:$0xff]
    %v1917 = vld [vmem:[#allocation3 + $0x330] sm:$0xff]
    %v1918 = vld [vmem:[#allocation3 + $0x338] sm:$0xff]
    %v1919 = vld [vmem:[#allocation3 + $0x340] sm:$0xff]
    %v1920 = vld [vmem:[#allocation3 + $0x348] sm:$0xff]
    %v1921 = vld [vmem:[#allocation3 + $0x350] sm:$0xff]
    %v1922 = vld [vmem:[#allocation3 + $0x358] sm:$0xff]
    %v1923 = vld [vmem:[#allocation3 + $0x360] sm:$0xff]
    %v1924 = vld [vmem:[#allocation3 + $0x368] sm:$0xff]
    %v1925 = vld [vmem:[#allocation3 + $0x370] sm:$0xff]
    %v1926 = vld [vmem:[#allocation3 + $0x378] sm:$0xff]
    %v1927 = vld [vmem:[#allocation3 + $0x380] sm:$0xff]
    %v1928 = vld [vmem:[#allocation3 + $0x388] sm:$0xff]
    %v1929 = vld [vmem:[#allocation3 + $0x390] sm:$0xff]
    %v1930 = vld [vmem:[#allocation3 + $0x398] sm:$0xff]
    %v1931 = vld [vmem:[#allocation3 + $0x3a0] sm:$0xff]
    %v1932 = vld [vmem:[#allocation3 + $0x3a8] sm:$0xff]
    %v1933 = vld [vmem:[#allocation3 + $0x3b0] sm:$0xff]
    %v1934 = vld [vmem:[#allocation3 + $0x3b8] sm:$0xff]
    %v1935 = vld [vmem:[#allocation3 + $0x3c0] sm:$0xff]
    %v1936 = vld [vmem:[#allocation3 + $0x3c8] sm:$0xff]
    %v1937 = vld [vmem:[#allocation3 + $0x3d0] sm:$0xff]
    %v1938 = vld [vmem:[#allocation3 + $0x3d8] sm:$0xff]
    %v1939 = vld [vmem:[#allocation3 + $0x3e0] sm:$0xff]
    %v1940 = vld [vmem:[#allocation3 + $0x3e8] sm:$0xff]
    %v1941 = vld [vmem:[#allocation3 + $0x3f0] sm:$0xff]
    %v1942 = vld [vmem:[#allocation3 + $0x3f8] sm:$0xff]
    %v1943 = vld [vmem:[#allocation3 + $0x400] sm:$0xff]
    %v1944 = vld [vmem:[#allocation3 + $0x408] sm:$0xff]
    %v1945 = vld [vmem:[#allocation3 + $0x410] sm:$0xff]
    %v1946 = vld [vmem:[#allocation3 + $0x418] sm:$0xff]
    %v1947 = vld [vmem:[#allocation3 + $0x420] sm:$0xff]
    %v1948 = vld [vmem:[#allocation3 + $0x428] sm:$0xff]
    %v1949 = vld [vmem:[#allocation3 + $0x430] sm:$0xff]
    %v1950 = vld [vmem:[#allocation3 + $0x438] sm:$0xff]
    %v1951 = vld [vmem:[#allocation3 + $0x440] sm:$0xff]
    %v1952 = vld [vmem:[#allocation3 + $0x448] sm:$0xff]
    %v1953 = vld [vmem:[#allocation3 + $0x450] sm:$0xff]
    %v1954 = vld [vmem:[#allocation3 + $0x458] sm:$0xff]
    %v1955 = vld [vmem:[#allocation3 + $0x460] sm:$0xff]
    %v1956 = vld [vmem:[#allocation3 + $0x468] sm:$0xff]
    %v1957 = vld [vmem:[#allocation3 + $0x470] sm:$0xff]
    %v1958 = vld [vmem:[#allocation3 + $0x478] sm:$0xff]
    %v1959 = vld [vmem:[#allocation3 + $0x480] sm:$0xff]
    %v1960 = vld [vmem:[#allocation3 + $0x488] sm:$0xff]
    %v1961 = vld [vmem:[#allocation3 + $0x490] sm:$0xff]
    %v1962 = vld [vmem:[#allocation3 + $0x498] sm:$0xff]
    %v1963 = vld [vmem:[#allocation3 + $0x4a0] sm:$0xff]
    %v1964 = vld [vmem:[#allocation3 + $0x4a8] sm:$0xff]
    %v1965 = vld [vmem:[#allocation3 + $0x4b0] sm:$0xff]
    %v1966 = vld [vmem:[#allocation3 + $0x4b8] sm:$0xff]
    %v1967 = vld [vmem:[#allocation3 + $0x4c0] sm:$0xff]
    %v1968 = vld [vmem:[#allocation3 + $0x4c8] sm:$0xff]
    %v1969 = vld [vmem:[#allocation3 + $0x4d0] sm:$0xff]
    %v1970 = vld [vmem:[#allocation3 + $0x4d8] sm:$0xff]
    %v1971 = vld [vmem:[#allocation3 + $0x4e0] sm:$0xff]
    %v1972 = vld [vmem:[#allocation3 + $0x4e8] sm:$0xff]
    %v1973 = vld [vmem:[#allocation3 + $0x4f0] sm:$0xff]
    %v1974 = vld [vmem:[#allocation3 + $0x4f8] sm:$0xff]
    %v1975 = vld [vmem:[#allocation3 + $0x500] sm:$0xff]
    %v1976 = vld [vmem:[#allocation3 + $0x508] sm:$0xff]
    %v1977 = vld [vmem:[#allocation3 + $0x510] sm:$0xff]
    %v1978 = vld [vmem:[#allocation3 + $0x518] sm:$0xff]
    %v1979 = vld [vmem:[#allocation3 + $0x520] sm:$0xff]
    %v1980 = vld [vmem:[#allocation3 + $0x528] sm:$0xff]
    %v1981 = vld [vmem:[#allocation3 + $0x530] sm:$0xff]
    %v1982 = vld [vmem:[#allocation3 + $0x538] sm:$0xff]
    %v1983 = vld [vmem:[#allocation3 + $0x540] sm:$0xff]
    %v1984 = vld [vmem:[#allocation3 + $0x548] sm:$0xff]
    %v1985 = vld [vmem:[#allocation3 + $0x550] sm:$0xff]
    %v1986 = vld [vmem:[#allocation3 + $0x558] sm:$0xff]
    %v1987 = vld [vmem:[#allocation3 + $0x560] sm:$0xff]
    %v1988 = vld [vmem:[#allocation3 + $0x568] sm:$0xff]
    %v1989 = vld [vmem:[#allocation3 + $0x570] sm:$0xff]
    %v1990 = vld [vmem:[#allocation3 + $0x578] sm:$0xff]
    %v1991 = vld [vmem:[#allocation3 + $0x580] sm:$0xff]
    %v1992 = vld [vmem:[#allocation3 + $0x588] sm:$0xff]
    %v1993 = vld [vmem:[#allocation3 + $0x590] sm:$0xff]
    %v1994 = vld [vmem:[#allocation3 + $0x598] sm:$0xff]
    %v1995 = vld [vmem:[#allocation3 + $0x5a0] sm:$0xff]
    %v1996 = vld [vmem:[#allocation3 + $0x5a8] sm:$0xff]
    %v1997 = vld [vmem:[#allocation3 + $0x5b0] sm:$0xff]
    %v1998 = vld [vmem:[#allocation3 + $0x5b8] sm:$0xff]
    %v1999 = vld [vmem:[#allocation3 + $0x5c0] sm:$0xff]
    %v2000 = vld [vmem:[#allocation3 + $0x5c8] sm:$0xff]
    %v2001 = vld [vmem:[#allocation3 + $0x5d0] sm:$0xff]
    %v2002 = vld [vmem:[#allocation3 + $0x5d8] sm:$0xff]
    %v2003 = vld [vmem:[#allocation3 + $0x5e0] sm:$0xff]
    %v2004 = vld [vmem:[#allocation3 + $0x5e8] sm:$0xff]
    %v2005 = vld [vmem:[#allocation3 + $0x5f0] sm:$0xff]
    %v2006 = vld [vmem:[#allocation3 + $0x5f8] sm:$0xff]
    %v2007 = vld [vmem:[#allocation3 + $0x600] sm:$0xff]
    %v2008 = vld [vmem:[#allocation3 + $0x608] sm:$0xff]
    %v2009 = vld [vmem:[#allocation3 + $0x610] sm:$0xff]
    %v2010 = vld [vmem:[#allocation3 + $0x618] sm:$0xff]
    %v2011 = vld [vmem:[#allocation3 + $0x620] sm:$0xff]
    %v2012 = vld [vmem:[#allocation3 + $0x628] sm:$0xff]
    %v2013 = vld [vmem:[#allocation3 + $0x630] sm:$0xff]
    %v2014 = vld [vmem:[#allocation3 + $0x638] sm:$0xff]
    %v2015 = vld [vmem:[#allocation3 + $0x640] sm:$0xff]
    %v2016 = vld [vmem:[#allocation3 + $0x648] sm:$0xff]
    %v2017 = vld [vmem:[#allocation3 + $0x650] sm:$0xff]
    %v2018 = vld [vmem:[#allocation3 + $0x658] sm:$0xff]
    %v2019 = vld [vmem:[#allocation3 + $0x660] sm:$0xff]
    %v2020 = vld [vmem:[#allocation3 + $0x668] sm:$0xff]
    %v2021 = vld [vmem:[#allocation3 + $0x670] sm:$0xff]
    %v2022 = vld [vmem:[#allocation3 + $0x678] sm:$0xff]
    %v2023 = vld [vmem:[#allocation3 + $0x680] sm:$0xff]
    %v2024 = vld [vmem:[#allocation3 + $0x688] sm:$0xff]
    %v2025 = vld [vmem:[#allocation3 + $0x690] sm:$0xff]
    %v2026 = vld [vmem:[#allocation3 + $0x698] sm:$0xff]
    %v2027 = vld [vmem:[#allocation3 + $0x6a0] sm:$0xff]
    %v2028 = vld [vmem:[#allocation3 + $0x6a8] sm:$0xff]
    %v2029 = vld [vmem:[#allocation3 + $0x6b0] sm:$0xff]
    %v2030 = vld [vmem:[#allocation3 + $0x6b8] sm:$0xff]
    %v2031 = vld [vmem:[#allocation3 + $0x6c0] sm:$0xff]
    %v2032 = vld [vmem:[#allocation3 + $0x6c8] sm:$0xff]
    %v2033 = vld [vmem:[#allocation3 + $0x6d0] sm:$0xff]
    %v2034 = vld [vmem:[#allocation3 + $0x6d8] sm:$0xff]
    %v2035 = vld [vmem:[#allocation3 + $0x6e0] sm:$0xff]
    %v2036 = vld [vmem:[#allocation3 + $0x6e8] sm:$0xff]
    %v2037 = vld [vmem:[#allocation3 + $0x6f0] sm:$0xff]
    %v2038 = vld [vmem:[#allocation3 + $0x6f8] sm:$0xff]
    %v2039 = vld [vmem:[#allocation3 + $0x700] sm:$0xff]
    %v2040 = vld [vmem:[#allocation3 + $0x708] sm:$0xff]
    %v2041 = vld [vmem:[#allocation3 + $0x710] sm:$0xff]
    %v2042 = vld [vmem:[#allocation3 + $0x718] sm:$0xff]
    %v2043 = vld [vmem:[#allocation3 + $0x720] sm:$0xff]
    %v2044 = vld [vmem:[#allocation3 + $0x728] sm:$0xff]
    %v2045 = vld [vmem:[#allocation3 + $0x730] sm:$0xff]
    %v2046 = vld [vmem:[#allocation3 + $0x738] sm:$0xff]
    %v2047 = vld [vmem:[#allocation3 + $0x740] sm:$0xff]
    %v2048 = vld [vmem:[#allocation3 + $0x748] sm:$0xff]
    %v2049 = vld [vmem:[#allocation3 + $0x750] sm:$0xff]
    %v2050 = vld [vmem:[#allocation3 + $0x758] sm:$0xff]
    %v2051 = vld [vmem:[#allocation3 + $0x760] sm:$0xff]
    %v2052 = vld [vmem:[#allocation3 + $0x768] sm:$0xff]
    %v2053 = vld [vmem:[#allocation3 + $0x770] sm:$0xff]
    %v2054 = vld [vmem:[#allocation3 + $0x778] sm:$0xff]
    %v2055 = vld [vmem:[#allocation3 + $0x780] sm:$0xff]
    %v2056 = vld [vmem:[#allocation3 + $0x788] sm:$0xff]
    %v2057 = vld [vmem:[#allocation3 + $0x790] sm:$0xff]
    %v2058 = vld [vmem:[#allocation3 + $0x798] sm:$0xff]
    %v2059 = vld [vmem:[#allocation3 + $0x7a0] sm:$0xff]
    %v2060 = vld [vmem:[#allocation3 + $0x7a8] sm:$0xff]
    %v2061 = vld [vmem:[#allocation3 + $0x7b0] sm:$0xff]
    %v2062 = vld [vmem:[#allocation3 + $0x7b8] sm:$0xff]
    %v2063 = vld [vmem:[#allocation3 + $0x7c0] sm:$0xff]
    %v2064 = vld [vmem:[#allocation3 + $0x7c8] sm:$0xff]
    %v2065 = vld [vmem:[#allocation3 + $0x7d0] sm:$0xff]
    %v2066 = vld [vmem:[#allocation3 + $0x7d8] sm:$0xff]
    %v2067 = vld [vmem:[#allocation3 + $0x7e0] sm:$0xff]
    %v2068 = vld [vmem:[#allocation3 + $0x7e8] sm:$0xff]
    %v2069 = vld [vmem:[#allocation3 + $0x7f0] sm:$0xff]
    %v2070 = vld [vmem:[#allocation3 + $0x7f8] sm:$0xff]
    %v2071 = vld [vmem:[%s10] sm:$0xff]
    %v2073 = vlaneseq
    %v2074 = vshrl.u32 %v2073, 7
    %v2075 = vsub.s32 0, %v2074
    %v2076 = vrot.slane %v2071, %v2075
    %v2077 = vlaneseq
    %v2078 = vshrl.u32 %v2077, 7
    %v2079 = vsub.s32 1, %v2078
    %v2080 = vrot.slane %v2071, %v2079
    %v2081 = vlaneseq
    %v2082 = vshrl.u32 %v2081, 7
    %v2083 = vsub.s32 2, %v2082
    %v2084 = vrot.slane %v2071, %v2083
    %v2085 = vlaneseq
    %v2086 = vshrl.u32 %v2085, 7
    %v2087 = vsub.s32 3, %v2086
    %v2088 = vrot.slane %v2071, %v2087
    %v2089 = vlaneseq
    %v2090 = vshrl.u32 %v2089, 7
    %v2091 = vsub.s32 4, %v2090
    %v2092 = vrot.slane %v2071, %v2091
    %v2093 = vlaneseq
    %v2094 = vshrl.u32 %v2093, 7
    %v2095 = vsub.s32 5, %v2094
    %v2096 = vrot.slane %v2071, %v2095
    %v2097 = vlaneseq
    %v2098 = vshrl.u32 %v2097, 7
    %v2099 = vsub.s32 6, %v2098
    %v2100 = vrot.slane %v2071, %v2099
    %v2101 = vlaneseq
    %v2102 = vshrl.u32 %v2101, 7
    %v2103 = vsub.s32 7, %v2102
    %v2104 = vrot.slane %v2071, %v2103
    %v2115 = vunpack.c.l.s4 1983009808
    %v2116 = vunpack.c.0.s8 %v2115
    %v2117 = vlaneseq
    %v2118 = vshrl.u32 %v2117, 7
    %v2119 = vsub.s32 %v2116, %v2118
    %v2120 = vrot.slane %v1814, %v2119
    %v2121 = vcombine.high %v2120, %v2120
    %2124 = vmatprep.subr.mxu0 %v1936
    %2125 = vmatpush1.msra.mxu0 %v1935
    %2126 = vmatprep.subr.mxu0 %v1928
    %2127 = vmatpush1.msra.mxu0 %v1927
    %2128 = vmatprep.subr.mxu0 %v1920
    %2129 = vmatpush1.msra.mxu0 %v1919
    %2130 = vmatprep.subr.mxu0 %v1912
    %2131 = vmatpush1.msra.mxu0 %v1911
    %2132 = vmatprep.subr.mxu0 %v1904
    %2133 = vmatpush1.msra.mxu0 %v1903
    %2134 = vmatprep.subr.mxu0 %v1896
    %2135 = vmatpush1.msra.mxu0 %v1895
    %2136 = vmatprep.subr.mxu0 %v1888
    %2137 = vmatpush1.msra.mxu0 %v1887
    %2138 = vmatprep.subr.mxu0 %v1880
    %2139 = vmatpush1.msra.mxu0 %v1879
    %2140 = vmatprep.subr.mxu0 %v1872
    %2141 = vmatpush1.msra.mxu0 %v1871
    %2142 = vmatprep.subr.mxu0 %v1864
    %2143 = vmatpush1.msra.mxu0 %v1863
    %2144 = vmatprep.subr.mxu0 %v1856
    %2145 = vmatpush1.msra.mxu0 %v1855
    %2146 = vmatprep.subr.mxu0 %v1848
    %2147 = vmatpush1.msra.mxu0 %v1847
    %2148 = vmatprep.subr.mxu0 %v1840
    %2149 = vmatpush1.msra.mxu0 %v1839
    %2150 = vmatprep.subr.mxu0 %v1832
    %2151 = vmatpush1.msra.mxu0 %v1831
    %2152 = vmatprep.subr.mxu0 %v1824
    %2153 = vmatpush1.msra.mxu0 %v1823
    %2154 = vmatprep.subr.mxu0 %v1816
    %2155 = vmatpush1.msra.mxu0 %v1815
    %2156 = vmatprep.subr.mxu0 %v2064
    %2157 = vmatpush2.msra.mxu0 %v2063
    %2158 = vmatprep.subr.mxu0 %v2056
    %2159 = vmatpush2.msra.mxu0 %v2055
    %2160 = vmatprep.subr.mxu0 %v2048
    %2161 = vmatpush2.msra.mxu0 %v2047
    %2162 = vmatprep.subr.mxu0 %v2040
    %2163 = vmatpush2.msra.mxu0 %v2039
    %2164 = vmatprep.subr.mxu0 %v2032
    %2165 = vmatpush2.msra.mxu0 %v2031
    %2166 = vmatprep.subr.mxu0 %v2024
    %2167 = vmatpush2.msra.mxu0 %v2023
    %2168 = vmatprep.subr.mxu0 %v2016
    %2169 = vmatpush2.msra.mxu0 %v2015
    %2170 = vmatprep.subr.mxu0 %v2008
    %2171 = vmatpush2.msra.mxu0 %v2007
    %2172 = vmatprep.subr.mxu0 %v2000
    %2173 = vmatpush2.msra.mxu0 %v1999
    %2174 = vmatprep.subr.mxu0 %v1992
    %2175 = vmatpush2.msra.mxu0 %v1991
    %2176 = vmatprep.subr.mxu0 %v1984
    %2177 = vmatpush2.msra.mxu0 %v1983
    %2178 = vmatprep.subr.mxu0 %v1976
    %2179 = vmatpush2.msra.mxu0 %v1975
    %2180 = vmatprep.subr.mxu0 %v1968
    %2181 = vmatpush2.msra.mxu0 %v1967
    %2182 = vmatprep.subr.mxu0 %v1960
    %2183 = vmatpush2.msra.mxu0 %v1959
    %2184 = vmatprep.subr.mxu0 %v1952
    %2185 = vmatpush2.msra.mxu0 %v1951
    %2186 = vmatprep.subr.mxu0 %v1944
    %2187 = vmatpush2.msra.mxu0 %v1943
    %2188 = vmatprep.mubr.f32.mxu0 %v2121
    %2189 = vmatmul.mubr.f32.gmra.mxu0 %v2120
    %v2190 = vpop.f32.mrf.mxu0
    %v2191 = vadd.f32 %v2076, %v2190
    %v2192 = vpop.f32.mrf.mxu0
    %v2193 = vadd.f32 %v2080, %v2192
    %2194 = vdwg.mxu0
    %2195 = vmatprep.subr.mxu0 %v1938
    %2196 = vmatpush1.msra.mxu0 %v1937
    %2197 = vmatprep.subr.mxu0 %v1930
    %2198 = vmatpush1.msra.mxu0 %v1929
    %2199 = vmatprep.subr.mxu0 %v1922
    %2200 = vmatpush1.msra.mxu0 %v1921
    %2201 = vmatprep.subr.mxu0 %v1914
    %2202 = vmatpush1.msra.mxu0 %v1913
    %2203 = vmatprep.subr.mxu0 %v1906
    %2204 = vmatpush1.msra.mxu0 %v1905
    %2205 = vmatprep.subr.mxu0 %v1898
    %2206 = vmatpush1.msra.mxu0 %v1897
    %2207 = vmatprep.subr.mxu0 %v1890
    %2208 = vmatpush1.msra.mxu0 %v1889
    %2209 = vmatprep.subr.mxu0 %v1882
    %2210 = vmatpush1.msra.mxu0 %v1881
    %2211 = vmatprep.subr.mxu0 %v1874
    %2212 = vmatpush1.msra.mxu0 %v1873
    %2213 = vmatprep.subr.mxu0 %v1866
    %2214 = vmatpush1.msra.mxu0 %v1865
    %2215 = vmatprep.subr.mxu0 %v1858
    %2216 = vmatpush1.msra.mxu0 %v1857
    %2217 = vmatprep.subr.mxu0 %v1850
    %2218 = vmatpush1.msra.mxu0 %v1849
    %2219 = vmatprep.subr.mxu0 %v1842
    %2220 = vmatpush1.msra.mxu0 %v1841
    %2221 = vmatprep.subr.mxu0 %v1834
    %2222 = vmatpush1.msra.mxu0 %v1833
    %2223 = vmatprep.subr.mxu0 %v1826
    %2224 = vmatpush1.msra.mxu0 %v1825
    %2225 = vmatprep.subr.mxu0 %v1818
    %2226 = vmatpush1.msra.mxu0 %v1817
    %2227 = vmatprep.subr.mxu0 %v2066
    %2228 = vmatpush2.msra.mxu0 %v2065
    %2229 = vmatprep.subr.mxu0 %v2058
    %2230 = vmatpush2.msra.mxu0 %v2057
    %2231 = vmatprep.subr.mxu0 %v2050
    %2232 = vmatpush2.msra.mxu0 %v2049
    %2233 = vmatprep.subr.mxu0 %v2042
    %2234 = vmatpush2.msra.mxu0 %v2041
    %2235 = vmatprep.subr.mxu0 %v2034
    %2236 = vmatpush2.msra.mxu0 %v2033
    %2237 = vmatprep.subr.mxu0 %v2026
    %2238 = vmatpush2.msra.mxu0 %v2025
    %2239 = vmatprep.subr.mxu0 %v2018
    %2240 = vmatpush2.msra.mxu0 %v2017
    %2241 = vmatprep.subr.mxu0 %v2010
    %2242 = vmatpush2.msra.mxu0 %v2009
    %2243 = vmatprep.subr.mxu0 %v2002
    %2244 = vmatpush2.msra.mxu0 %v2001
    %2245 = vmatprep.subr.mxu0 %v1994
    %2246 = vmatpush2.msra.mxu0 %v1993
    %2247 = vmatprep.subr.mxu0 %v1986
    %2248 = vmatpush2.msra.mxu0 %v1985
    %2249 = vmatprep.subr.mxu0 %v1978
    %2250 = vmatpush2.msra.mxu0 %v1977
    %2251 = vmatprep.subr.mxu0 %v1970
    %2252 = vmatpush2.msra.mxu0 %v1969
    %2253 = vmatprep.subr.mxu0 %v1962
    %2254 = vmatpush2.msra.mxu0 %v1961
    %2255 = vmatprep.subr.mxu0 %v1954
    %2256 = vmatpush2.msra.mxu0 %v1953
    %2257 = vmatprep.subr.mxu0 %v1946
    %2258 = vmatpush2.msra.mxu0 %v1945
    %2259 = vmatprep.mubr.f32.mxu0 %v2121
    %2260 = vmatmul.mubr.f32.gmra.mxu0 %v2120
    %v2261 = vpop.f32.mrf.mxu0
    %v2262 = vadd.f32 %v2084, %v2261
    %v2263 = vpop.f32.mrf.mxu0
    %v2264 = vadd.f32 %v2088, %v2263
    %2265 = vdwg.mxu0
    %2266 = vmatprep.subr.mxu0 %v1940
    %2267 = vmatpush1.msra.mxu0 %v1939
    %2268 = vmatprep.subr.mxu0 %v1932
    %2269 = vmatpush1.msra.mxu0 %v1931
    %2270 = vmatprep.subr.mxu0 %v1924
    %2271 = vmatpush1.msra.mxu0 %v1923
    %2272 = vmatprep.subr.mxu0 %v1916
    %2273 = vmatpush1.msra.mxu0 %v1915
    %2274 = vmatprep.subr.mxu0 %v1908
    %2275 = vmatpush1.msra.mxu0 %v1907
    %2276 = vmatprep.subr.mxu0 %v1900
    %2277 = vmatpush1.msra.mxu0 %v1899
    %2278 = vmatprep.subr.mxu0 %v1892
    %2279 = vmatpush1.msra.mxu0 %v1891
    %2280 = vmatprep.subr.mxu0 %v1884
    %2281 = vmatpush1.msra.mxu0 %v1883
    %2282 = vmatprep.subr.mxu0 %v1876
    %2283 = vmatpush1.msra.mxu0 %v1875
    %2284 = vmatprep.subr.mxu0 %v1868
    %2285 = vmatpush1.msra.mxu0 %v1867
    %2286 = vmatprep.subr.mxu0 %v1860
    %2287 = vmatpush1.msra.mxu0 %v1859
    %2288 = vmatprep.subr.mxu0 %v1852
    %2289 = vmatpush1.msra.mxu0 %v1851
    %2290 = vmatprep.subr.mxu0 %v1844
    %2291 = vmatpush1.msra.mxu0 %v1843
    %2292 = vmatprep.subr.mxu0 %v1836
    %2293 = vmatpush1.msra.mxu0 %v1835
    %2294 = vmatprep.subr.mxu0 %v1828
    %2295 = vmatpush1.msra.mxu0 %v1827
    %2296 = vmatprep.subr.mxu0 %v1820
    %2297 = vmatpush1.msra.mxu0 %v1819
    %2298 = vmatprep.subr.mxu0 %v2068
    %2299 = vmatpush2.msra.mxu0 %v2067
    %2300 = vmatprep.subr.mxu0 %v2060
    %2301 = vmatpush2.msra.mxu0 %v2059
    %2302 = vmatprep.subr.mxu0 %v2052
    %2303 = vmatpush2.msra.mxu0 %v2051
    %2304 = vmatprep.subr.mxu0 %v2044
    %2305 = vmatpush2.msra.mxu0 %v2043
    %2306 = vmatprep.subr.mxu0 %v2036
    %2307 = vmatpush2.msra.mxu0 %v2035
    %2308 = vmatprep.subr.mxu0 %v2028
    %2309 = vmatpush2.msra.mxu0 %v2027
    %2310 = vmatprep.subr.mxu0 %v2020
    %2311 = vmatpush2.msra.mxu0 %v2019
    %2312 = vmatprep.subr.mxu0 %v2012
    %2313 = vmatpush2.msra.mxu0 %v2011
    %2314 = vmatprep.subr.mxu0 %v2004
    %2315 = vmatpush2.msra.mxu0 %v2003
    %2316 = vmatprep.subr.mxu0 %v1996
    %2317 = vmatpush2.msra.mxu0 %v1995
    %2318 = vmatprep.subr.mxu0 %v1988
    %2319 = vmatpush2.msra.mxu0 %v1987
    %2320 = vmatprep.subr.mxu0 %v1980
    %2321 = vmatpush2.msra.mxu0 %v1979
    %2322 = vmatprep.subr.mxu0 %v1972
    %2323 = vmatpush2.msra.mxu0 %v1971
    %2324 = vmatprep.subr.mxu0 %v1964
    %2325 = vmatpush2.msra.mxu0 %v1963
    %2326 = vmatprep.subr.mxu0 %v1956
    %2327 = vmatpush2.msra.mxu0 %v1955
    %2328 = vmatprep.subr.mxu0 %v1948
    %2329 = vmatpush2.msra.mxu0 %v1947
    %2330 = vmatprep.mubr.f32.mxu0 %v2121
    %2331 = vmatmul.mubr.f32.gmra.mxu0 %v2120
    %v2332 = vpop.f32.mrf.mxu0
    %v2333 = vadd.f32 %v2092, %v2332
    %v2334 = vpop.f32.mrf.mxu0
    %v2335 = vadd.f32 %v2096, %v2334
    %2336 = vdwg.mxu0
    %2337 = vmatprep.subr.mxu0 %v1942
    %2338 = vmatpush1.msra.mxu0 %v1941
    %2339 = vmatprep.subr.mxu0 %v1934
    %2340 = vmatpush1.msra.mxu0 %v1933
    %2341 = vmatprep.subr.mxu0 %v1926
    %2342 = vmatpush1.msra.mxu0 %v1925
    %2343 = vmatprep.subr.mxu0 %v1918
    %2344 = vmatpush1.msra.mxu0 %v1917
    %2345 = vmatprep.subr.mxu0 %v1910
    %2346 = vmatpush1.msra.mxu0 %v1909
    %2347 = vmatprep.subr.mxu0 %v1902
    %2348 = vmatpush1.msra.mxu0 %v1901
    %2349 = vmatprep.subr.mxu0 %v1894
    %2350 = vmatpush1.msra.mxu0 %v1893
    %2351 = vmatprep.subr.mxu0 %v1886
    %2352 = vmatpush1.msra.mxu0 %v1885
    %2353 = vmatprep.subr.mxu0 %v1878
    %2354 = vmatpush1.msra.mxu0 %v1877
    %2355 = vmatprep.subr.mxu0 %v1870
    %2356 = vmatpush1.msra.mxu0 %v1869
    %2357 = vmatprep.subr.mxu0 %v1862
    %2358 = vmatpush1.msra.mxu0 %v1861
    %2359 = vmatprep.subr.mxu0 %v1854
    %2360 = vmatpush1.msra.mxu0 %v1853
    %2361 = vmatprep.subr.mxu0 %v1846
    %2362 = vmatpush1.msra.mxu0 %v1845
    %2363 = vmatprep.subr.mxu0 %v1838
    %2364 = vmatpush1.msra.mxu0 %v1837
    %2365 = vmatprep.subr.mxu0 %v1830
    %2366 = vmatpush1.msra.mxu0 %v1829
    %2367 = vmatprep.subr.mxu0 %v1822
    %2368 = vmatpush1.msra.mxu0 %v1821
    %2369 = vmatprep.subr.mxu0 %v2070
    %2370 = vmatpush2.msra.mxu0 %v2069
    %2371 = vmatprep.subr.mxu0 %v2062
    %2372 = vmatpush2.msra.mxu0 %v2061
    %2373 = vmatprep.subr.mxu0 %v2054
    %2374 = vmatpush2.msra.mxu0 %v2053
    %2375 = vmatprep.subr.mxu0 %v2046
    %2376 = vmatpush2.msra.mxu0 %v2045
    %2377 = vmatprep.subr.mxu0 %v2038
    %2378 = vmatpush2.msra.mxu0 %v2037
    %2379 = vmatprep.subr.mxu0 %v2030
    %2380 = vmatpush2.msra.mxu0 %v2029
    %2381 = vmatprep.subr.mxu0 %v2022
    %2382 = vmatpush2.msra.mxu0 %v2021
    %2383 = vmatprep.subr.mxu0 %v2014
    %2384 = vmatpush2.msra.mxu0 %v2013
    %2385 = vmatprep.subr.mxu0 %v2006
    %2386 = vmatpush2.msra.mxu0 %v2005
    %2387 = vmatprep.subr.mxu0 %v1998
    %2388 = vmatpush2.msra.mxu0 %v1997
    %2389 = vmatprep.subr.mxu0 %v1990
    %2390 = vmatpush2.msra.mxu0 %v1989
    %2391 = vmatprep.subr.mxu0 %v1982
    %2392 = vmatpush2.msra.mxu0 %v1981
    %2393 = vmatprep.subr.mxu0 %v1974
    %2394 = vmatpush2.msra.mxu0 %v1973
    %2395 = vmatprep.subr.mxu0 %v1966
    %2396 = vmatpush2.msra.mxu0 %v1965
    %2397 = vmatprep.subr.mxu0 %v1958
    %2398 = vmatpush2.msra.mxu0 %v1957
    %2399 = vmatprep.subr.mxu0 %v1950
    %2400 = vmatpush2.msra.mxu0 %v1949
    %2401 = vmatprep.mubr.f32.mxu0 %v2121
    %2402 = vmatmul.mubr.f32.gmra.mxu0 %v2120
    %v2403 = vpop.f32.mrf.mxu0
    %v2404 = vadd.f32 %v2100, %v2403
    %v2405 = vpop.f32.mrf.mxu0
    %v2406 = vadd.f32 %v2104, %v2405
    %2407 = vdwg.mxu0
    %v2408 = vmax.f32 %v2191, 0.0
    %v2409 = vmax.f32 %v2193, 0.0
    %v2410 = vmax.f32 %v2262, 0.0
    %v2411 = vmax.f32 %v2264, 0.0
    %v2412 = vmax.f32 %v2333, 0.0
    %v2413 = vmax.f32 %v2335, 0.0
    %v2414 = vmax.f32 %v2404, 0.0
    %v2415 = vmax.f32 %v2406, 0.0
    %v2416 = vld [vmem:[%s11] sm:$0xff]
    %v2417 = vld [vmem:[%s11 + $0x8] sm:$0xff]
    %v2418 = vld [vmem:[%s11 + $0x10] sm:$0xff]
    %v2419 = vld [vmem:[%s11 + $0x18] sm:$0xff]
    %v2420 = vld [vmem:[%s11 + $0x20] sm:$0xff]
    %v2421 = vld [vmem:[%s11 + $0x28] sm:$0xff]
    %v2422 = vld [vmem:[%s11 + $0x30] sm:$0xff]
    %v2423 = vld [vmem:[%s11 + $0x38] sm:$0xff]
    %v2424 = vld [vmem:[%s11 + $0x40] sm:$0xff]
    %v2425 = vld [vmem:[%s11 + $0x48] sm:$0xff]
    %v2426 = vld [vmem:[%s11 + $0x50] sm:$0xff]
    %v2427 = vld [vmem:[%s11 + $0x58] sm:$0xff]
    %v2428 = vld [vmem:[%s11 + $0x60] sm:$0xff]
    %v2429 = vld [vmem:[%s11 + $0x68] sm:$0xff]
    %v2430 = vld [vmem:[%s11 + $0x70] sm:$0xff]
    %v2431 = vld [vmem:[%s11 + $0x78] sm:$0xff]
    %v2432 = vld [vmem:[%s11 + $0x80] sm:$0xff]
    %v2433 = vld [vmem:[%s11 + $0x88] sm:$0xff]
    %v2434 = vld [vmem:[%s11 + $0x90] sm:$0xff]
    %v2435 = vld [vmem:[%s11 + $0x98] sm:$0xff]
    %v2436 = vld [vmem:[%s11 + $0xa0] sm:$0xff]
    %v2437 = vld [vmem:[%s11 + $0xa8] sm:$0xff]
    %v2438 = vld [vmem:[%s11 + $0xb0] sm:$0xff]
    %v2439 = vld [vmem:[%s11 + $0xb8] sm:$0xff]
    %v2440 = vld [vmem:[%s11 + $0xc0] sm:$0xff]
    %v2441 = vld [vmem:[%s11 + $0xc8] sm:$0xff]
    %v2442 = vld [vmem:[%s11 + $0xd0] sm:$0xff]
    %v2443 = vld [vmem:[%s11 + $0xd8] sm:$0xff]
    %v2444 = vld [vmem:[%s11 + $0xe0] sm:$0xff]
    %v2445 = vld [vmem:[%s11 + $0xe8] sm:$0xff]
    %v2446 = vld [vmem:[%s11 + $0xf0] sm:$0xff]
    %v2447 = vld [vmem:[%s11 + $0xf8] sm:$0xff]
    %v2448 = vld [vmem:[%s11 + $0x100] sm:$0xff]
    %v2449 = vld [vmem:[%s11 + $0x108] sm:$0xff]
    %v2450 = vld [vmem:[%s11 + $0x110] sm:$0xff]
    %v2451 = vld [vmem:[%s11 + $0x118] sm:$0xff]
    %v2452 = vld [vmem:[%s11 + $0x120] sm:$0xff]
    %v2453 = vld [vmem:[%s11 + $0x128] sm:$0xff]
    %v2454 = vld [vmem:[%s11 + $0x130] sm:$0xff]
    %v2455 = vld [vmem:[%s11 + $0x138] sm:$0xff]
    %v2456 = vld [vmem:[%s11 + $0x140] sm:$0xff]
    %v2457 = vld [vmem:[%s11 + $0x148] sm:$0xff]
    %v2458 = vld [vmem:[%s11 + $0x150] sm:$0xff]
    %v2459 = vld [vmem:[%s11 + $0x158] sm:$0xff]
    %v2460 = vld [vmem:[%s11 + $0x160] sm:$0xff]
    %v2461 = vld [vmem:[%s11 + $0x168] sm:$0xff]
    %v2462 = vld [vmem:[%s11 + $0x170] sm:$0xff]
    %v2463 = vld [vmem:[%s11 + $0x178] sm:$0xff]
    %v2464 = vld [vmem:[%s11 + $0x180] sm:$0xff]
    %v2465 = vld [vmem:[%s11 + $0x188] sm:$0xff]
    %v2466 = vld [vmem:[%s11 + $0x190] sm:$0xff]
    %v2467 = vld [vmem:[%s11 + $0x198] sm:$0xff]
    %v2468 = vld [vmem:[%s11 + $0x1a0] sm:$0xff]
    %v2469 = vld [vmem:[%s11 + $0x1a8] sm:$0xff]
    %v2470 = vld [vmem:[%s11 + $0x1b0] sm:$0xff]
    %v2471 = vld [vmem:[%s11 + $0x1b8] sm:$0xff]
    %v2472 = vld [vmem:[%s11 + $0x1c0] sm:$0xff]
    %v2473 = vld [vmem:[%s11 + $0x1c8] sm:$0xff]
    %v2474 = vld [vmem:[%s11 + $0x1d0] sm:$0xff]
    %v2475 = vld [vmem:[%s11 + $0x1d8] sm:$0xff]
    %v2476 = vld [vmem:[%s11 + $0x1e0] sm:$0xff]
    %v2477 = vld [vmem:[%s11 + $0x1e8] sm:$0xff]
    %v2478 = vld [vmem:[%s11 + $0x1f0] sm:$0xff]
    %v2479 = vld [vmem:[%s11 + $0x1f8] sm:$0xff]
    %v2480 = vld [vmem:[%s11 + $0x200] sm:$0xff]
    %v2481 = vld [vmem:[%s11 + $0x208] sm:$0xff]
    %v2482 = vld [vmem:[%s11 + $0x210] sm:$0xff]
    %v2483 = vld [vmem:[%s11 + $0x218] sm:$0xff]
    %v2484 = vld [vmem:[%s11 + $0x220] sm:$0xff]
    %v2485 = vld [vmem:[%s11 + $0x228] sm:$0xff]
    %v2486 = vld [vmem:[%s11 + $0x230] sm:$0xff]
    %v2487 = vld [vmem:[%s11 + $0x238] sm:$0xff]
    %v2488 = vld [vmem:[%s11 + $0x240] sm:$0xff]
    %v2489 = vld [vmem:[%s11 + $0x248] sm:$0xff]
    %v2490 = vld [vmem:[%s11 + $0x250] sm:$0xff]
    %v2491 = vld [vmem:[%s11 + $0x258] sm:$0xff]
    %v2492 = vld [vmem:[%s11 + $0x260] sm:$0xff]
    %v2493 = vld [vmem:[%s11 + $0x268] sm:$0xff]
    %v2494 = vld [vmem:[%s11 + $0x270] sm:$0xff]
    %v2495 = vld [vmem:[%s11 + $0x278] sm:$0xff]
    %v2496 = vld [vmem:[%s11 + $0x280] sm:$0xff]
    %v2497 = vld [vmem:[%s11 + $0x288] sm:$0xff]
    %v2498 = vld [vmem:[%s11 + $0x290] sm:$0xff]
    %v2499 = vld [vmem:[%s11 + $0x298] sm:$0xff]
    %v2500 = vld [vmem:[%s11 + $0x2a0] sm:$0xff]
    %v2501 = vld [vmem:[%s11 + $0x2a8] sm:$0xff]
    %v2502 = vld [vmem:[%s11 + $0x2b0] sm:$0xff]
    %v2503 = vld [vmem:[%s11 + $0x2b8] sm:$0xff]
    %v2504 = vld [vmem:[%s11 + $0x2c0] sm:$0xff]
    %v2505 = vld [vmem:[%s11 + $0x2c8] sm:$0xff]
    %v2506 = vld [vmem:[%s11 + $0x2d0] sm:$0xff]
    %v2507 = vld [vmem:[%s11 + $0x2d8] sm:$0xff]
    %v2508 = vld [vmem:[%s11 + $0x2e0] sm:$0xff]
    %v2509 = vld [vmem:[%s11 + $0x2e8] sm:$0xff]
    %v2510 = vld [vmem:[%s11 + $0x2f0] sm:$0xff]
    %v2511 = vld [vmem:[%s11 + $0x2f8] sm:$0xff]
    %v2512 = vld [vmem:[%s11 + $0x300] sm:$0xff]
    %v2513 = vld [vmem:[%s11 + $0x308] sm:$0xff]
    %v2514 = vld [vmem:[%s11 + $0x310] sm:$0xff]
    %v2515 = vld [vmem:[%s11 + $0x318] sm:$0xff]
    %v2516 = vld [vmem:[%s11 + $0x320] sm:$0xff]
    %v2517 = vld [vmem:[%s11 + $0x328] sm:$0xff]
    %v2518 = vld [vmem:[%s11 + $0x330] sm:$0xff]
    %v2519 = vld [vmem:[%s11 + $0x338] sm:$0xff]
    %v2520 = vld [vmem:[%s11 + $0x340] sm:$0xff]
    %v2521 = vld [vmem:[%s11 + $0x348] sm:$0xff]
    %v2522 = vld [vmem:[%s11 + $0x350] sm:$0xff]
    %v2523 = vld [vmem:[%s11 + $0x358] sm:$0xff]
    %v2524 = vld [vmem:[%s11 + $0x360] sm:$0xff]
    %v2525 = vld [vmem:[%s11 + $0x368] sm:$0xff]
    %v2526 = vld [vmem:[%s11 + $0x370] sm:$0xff]
    %v2527 = vld [vmem:[%s11 + $0x378] sm:$0xff]
    %v2528 = vld [vmem:[%s11 + $0x380] sm:$0xff]
    %v2529 = vld [vmem:[%s11 + $0x388] sm:$0xff]
    %v2530 = vld [vmem:[%s11 + $0x390] sm:$0xff]
    %v2531 = vld [vmem:[%s11 + $0x398] sm:$0xff]
    %v2532 = vld [vmem:[%s11 + $0x3a0] sm:$0xff]
    %v2533 = vld [vmem:[%s11 + $0x3a8] sm:$0xff]
    %v2534 = vld [vmem:[%s11 + $0x3b0] sm:$0xff]
    %v2535 = vld [vmem:[%s11 + $0x3b8] sm:$0xff]
    %v2536 = vld [vmem:[%s11 + $0x3c0] sm:$0xff]
    %v2537 = vld [vmem:[%s11 + $0x3c8] sm:$0xff]
    %v2538 = vld [vmem:[%s11 + $0x3d0] sm:$0xff]
    %v2539 = vld [vmem:[%s11 + $0x3d8] sm:$0xff]
    %v2540 = vld [vmem:[%s11 + $0x3e0] sm:$0xff]
    %v2541 = vld [vmem:[%s11 + $0x3e8] sm:$0xff]
    %v2542 = vld [vmem:[%s11 + $0x3f0] sm:$0xff]
    %v2543 = vld [vmem:[%s11 + $0x3f8] sm:$0xff]
    %v2544 = vld [vmem:[%s12] sm:$0x1]
    %v2546 = vlaneseq
    %v2547 = vshrl.u32 %v2546, 7
    %v2548 = vsub.s32 0, %v2547
    %v2549 = vrot.slane %v2544, %v2548
    %2551 = vmatprep.subr.mxu0 0.0
    %2552 = vmatpush1.msra.mxu0 %v2431
    %2553 = vmatprep.subr.mxu0 0.0
    %2554 = vmatpush1.msra.mxu0 %v2430
    %2555 = vmatprep.subr.mxu0 0.0
    %2556 = vmatpush1.msra.mxu0 %v2429
    %2557 = vmatprep.subr.mxu0 0.0
    %2558 = vmatpush1.msra.mxu0 %v2428
    %2559 = vmatprep.subr.mxu0 0.0
    %2560 = vmatpush1.msra.mxu0 %v2427
    %2561 = vmatprep.subr.mxu0 0.0
    %2562 = vmatpush1.msra.mxu0 %v2426
    %2563 = vmatprep.subr.mxu0 0.0
    %2564 = vmatpush1.msra.mxu0 %v2425
    %2565 = vmatprep.subr.mxu0 0.0
    %2566 = vmatpush1.msra.mxu0 %v2424
    %2567 = vmatprep.subr.mxu0 0.0
    %2568 = vmatpush1.msra.mxu0 %v2423
    %2569 = vmatprep.subr.mxu0 0.0
    %2570 = vmatpush1.msra.mxu0 %v2422
    %2571 = vmatprep.subr.mxu0 0.0
    %2572 = vmatpush1.msra.mxu0 %v2421
    %2573 = vmatprep.subr.mxu0 0.0
    %2574 = vmatpush1.msra.mxu0 %v2420
    %2575 = vmatprep.subr.mxu0 0.0
    %2576 = vmatpush1.msra.mxu0 %v2419
    %2577 = vmatprep.subr.mxu0 0.0
    %2578 = vmatpush1.msra.mxu0 %v2418
    %2579 = vmatprep.subr.mxu0 0.0
    %2580 = vmatpush1.msra.mxu0 %v2417
    %2581 = vmatprep.subr.mxu0 0.0
    %2582 = vmatpush1.msra.mxu0 %v2416
    %2583 = vmatprep.subr.mxu0 0.0
    %2584 = vmatpush2.msra.mxu0 %v2447
    %2585 = vmatprep.subr.mxu0 0.0
    %2586 = vmatpush2.msra.mxu0 %v2446
    %2587 = vmatprep.subr.mxu0 0.0
    %2588 = vmatpush2.msra.mxu0 %v2445
    %2589 = vmatprep.subr.mxu0 0.0
    %2590 = vmatpush2.msra.mxu0 %v2444
    %2591 = vmatprep.subr.mxu0 0.0
    %2592 = vmatpush2.msra.mxu0 %v2443
    %2593 = vmatprep.subr.mxu0 0.0
    %2594 = vmatpush2.msra.mxu0 %v2442
    %2595 = vmatprep.subr.mxu0 0.0
    %2596 = vmatpush2.msra.mxu0 %v2441
    %2597 = vmatprep.subr.mxu0 0.0
    %2598 = vmatpush2.msra.mxu0 %v2440
    %2599 = vmatprep.subr.mxu0 0.0
    %2600 = vmatpush2.msra.mxu0 %v2439
    %2601 = vmatprep.subr.mxu0 0.0
    %2602 = vmatpush2.msra.mxu0 %v2438
    %2603 = vmatprep.subr.mxu0 0.0
    %2604 = vmatpush2.msra.mxu0 %v2437
    %2605 = vmatprep.subr.mxu0 0.0
    %2606 = vmatpush2.msra.mxu0 %v2436
    %2607 = vmatprep.subr.mxu0 0.0
    %2608 = vmatpush2.msra.mxu0 %v2435
    %2609 = vmatprep.subr.mxu0 0.0
    %2610 = vmatpush2.msra.mxu0 %v2434
    %2611 = vmatprep.subr.mxu0 0.0
    %2612 = vmatpush2.msra.mxu0 %v2433
    %2613 = vmatprep.subr.mxu0 0.0
    %2614 = vmatpush2.msra.mxu0 %v2432
    %2615 = vmatprep.mubr.f32.mxu0 %v2409
    %2616 = vmatmul.mubr.f32.gmra.mxu0 %v2408
    %v2617 = vpop.f32.mrf.mxu0
    %v2618 = vadd.f32 %v2549, %v2617
    %v2619 = vpop.f32.mrf.mxu0
    %2620 = vdwg.mxu0
    %2621 = vmatprep.subr.mxu0 0.0
    %2622 = vmatpush1.msra.mxu0 %v2463
    %2623 = vmatprep.subr.mxu0 0.0
    %2624 = vmatpush1.msra.mxu0 %v2462
    %2625 = vmatprep.subr.mxu0 0.0
    %2626 = vmatpush1.msra.mxu0 %v2461
    %2627 = vmatprep.subr.mxu0 0.0
    %2628 = vmatpush1.msra.mxu0 %v2460
    %2629 = vmatprep.subr.mxu0 0.0
    %2630 = vmatpush1.msra.mxu0 %v2459
    %2631 = vmatprep.subr.mxu0 0.0
    %2632 = vmatpush1.msra.mxu0 %v2458
    %2633 = vmatprep.subr.mxu0 0.0
    %2634 = vmatpush1.msra.mxu0 %v2457
    %2635 = vmatprep.subr.mxu0 0.0
    %2636 = vmatpush1.msra.mxu0 %v2456
    %2637 = vmatprep.subr.mxu0 0.0
    %2638 = vmatpush1.msra.mxu0 %v2455
    %2639 = vmatprep.subr.mxu0 0.0
    %2640 = vmatpush1.msra.mxu0 %v2454
    %2641 = vmatprep.subr.mxu0 0.0
    %2642 = vmatpush1.msra.mxu0 %v2453
    %2643 = vmatprep.subr.mxu0 0.0
    %2644 = vmatpush1.msra.mxu0 %v2452
    %2645 = vmatprep.subr.mxu0 0.0
    %2646 = vmatpush1.msra.mxu0 %v2451
    %2647 = vmatprep.subr.mxu0 0.0
    %2648 = vmatpush1.msra.mxu0 %v2450
    %2649 = vmatprep.subr.mxu0 0.0
    %2650 = vmatpush1.msra.mxu0 %v2449
    %2651 = vmatprep.subr.mxu0 0.0
    %2652 = vmatpush1.msra.mxu0 %v2448
    %2653 = vmatprep.subr.mxu0 0.0
    %2654 = vmatpush2.msra.mxu0 %v2479
    %2655 = vmatprep.subr.mxu0 0.0
    %2656 = vmatpush2.msra.mxu0 %v2478
    %2657 = vmatprep.subr.mxu0 0.0
    %2658 = vmatpush2.msra.mxu0 %v2477
    %2659 = vmatprep.subr.mxu0 0.0
    %2660 = vmatpush2.msra.mxu0 %v2476
    %2661 = vmatprep.subr.mxu0 0.0
    %2662 = vmatpush2.msra.mxu0 %v2475
    %2663 = vmatprep.subr.mxu0 0.0
    %2664 = vmatpush2.msra.mxu0 %v2474
    %2665 = vmatprep.subr.mxu0 0.0
    %2666 = vmatpush2.msra.mxu0 %v2473
    %2667 = vmatprep.subr.mxu0 0.0
    %2668 = vmatpush2.msra.mxu0 %v2472
    %2669 = vmatprep.subr.mxu0 0.0
    %2670 = vmatpush2.msra.mxu0 %v2471
    %2671 = vmatprep.subr.mxu0 0.0
    %2672 = vmatpush2.msra.mxu0 %v2470
    %2673 = vmatprep.subr.mxu0 0.0
    %2674 = vmatpush2.msra.mxu0 %v2469
    %2675 = vmatprep.subr.mxu0 0.0
    %2676 = vmatpush2.msra.mxu0 %v2468
    %2677 = vmatprep.subr.mxu0 0.0
    %2678 = vmatpush2.msra.mxu0 %v2467
    %2679 = vmatprep.subr.mxu0 0.0
    %2680 = vmatpush2.msra.mxu0 %v2466
    %2681 = vmatprep.subr.mxu0 0.0
    %2682 = vmatpush2.msra.mxu0 %v2465
    %2683 = vmatprep.subr.mxu0 0.0
    %2684 = vmatpush2.msra.mxu0 %v2464
    %2685 = vmatprep.mubr.f32.mxu0 %v2411
    %2686 = vmatmul.mubr.f32.gmra.mxu0 %v2410
    %v2687 = vpop.f32.mrf.mxu0
    %v2688 = vadd.f32 %v2618, %v2687
    %v2689 = vpop.f32.mrf.mxu0
    %2690 = vdwg.mxu0
    %2691 = vmatprep.subr.mxu0 0.0
    %2692 = vmatpush1.msra.mxu0 %v2495
    %2693 = vmatprep.subr.mxu0 0.0
    %2694 = vmatpush1.msra.mxu0 %v2494
    %2695 = vmatprep.subr.mxu0 0.0
    %2696 = vmatpush1.msra.mxu0 %v2493
    %2697 = vmatprep.subr.mxu0 0.0
    %2698 = vmatpush1.msra.mxu0 %v2492
    %2699 = vmatprep.subr.mxu0 0.0
    %2700 = vmatpush1.msra.mxu0 %v2491
    %2701 = vmatprep.subr.mxu0 0.0
    %2702 = vmatpush1.msra.mxu0 %v2490
    %2703 = vmatprep.subr.mxu0 0.0
    %2704 = vmatpush1.msra.mxu0 %v2489
    %2705 = vmatprep.subr.mxu0 0.0
    %2706 = vmatpush1.msra.mxu0 %v2488
    %2707 = vmatprep.subr.mxu0 0.0
    %2708 = vmatpush1.msra.mxu0 %v2487
    %2709 = vmatprep.subr.mxu0 0.0
    %2710 = vmatpush1.msra.mxu0 %v2486
    %2711 = vmatprep.subr.mxu0 0.0
    %2712 = vmatpush1.msra.mxu0 %v2485
    %2713 = vmatprep.subr.mxu0 0.0
    %2714 = vmatpush1.msra.mxu0 %v2484
    %2715 = vmatprep.subr.mxu0 0.0
    %2716 = vmatpush1.msra.mxu0 %v2483
    %2717 = vmatprep.subr.mxu0 0.0
    %2718 = vmatpush1.msra.mxu0 %v2482
    %2719 = vmatprep.subr.mxu0 0.0
    %2720 = vmatpush1.msra.mxu0 %v2481
    %2721 = vmatprep.subr.mxu0 0.0
    %2722 = vmatpush1.msra.mxu0 %v2480
    %2723 = vmatprep.subr.mxu0 0.0
    %2724 = vmatpush2.msra.mxu0 %v2511
    %2725 = vmatprep.subr.mxu0 0.0
    %2726 = vmatpush2.msra.mxu0 %v2510
    %2727 = vmatprep.subr.mxu0 0.0
    %2728 = vmatpush2.msra.mxu0 %v2509
    %2729 = vmatprep.subr.mxu0 0.0
    %2730 = vmatpush2.msra.mxu0 %v2508
    %2731 = vmatprep.subr.mxu0 0.0
    %2732 = vmatpush2.msra.mxu0 %v2507
    %2733 = vmatprep.subr.mxu0 0.0
    %2734 = vmatpush2.msra.mxu0 %v2506
    %2735 = vmatprep.subr.mxu0 0.0
    %2736 = vmatpush2.msra.mxu0 %v2505
    %2737 = vmatprep.subr.mxu0 0.0
    %2738 = vmatpush2.msra.mxu0 %v2504
    %2739 = vmatprep.subr.mxu0 0.0
    %2740 = vmatpush2.msra.mxu0 %v2503
    %2741 = vmatprep.subr.mxu0 0.0
    %2742 = vmatpush2.msra.mxu0 %v2502
    %2743 = vmatprep.subr.mxu0 0.0
    %2744 = vmatpush2.msra.mxu0 %v2501
    %2745 = vmatprep.subr.mxu0 0.0
    %2746 = vmatpush2.msra.mxu0 %v2500
    %2747 = vmatprep.subr.mxu0 0.0
    %2748 = vmatpush2.msra.mxu0 %v2499
    %2749 = vmatprep.subr.mxu0 0.0
    %2750 = vmatpush2.msra.mxu0 %v2498
    %2751 = vmatprep.subr.mxu0 0.0
    %2752 = vmatpush2.msra.mxu0 %v2497
    %2753 = vmatprep.subr.mxu0 0.0
    %2754 = vmatpush2.msra.mxu0 %v2496
    %2755 = vmatprep.mubr.f32.mxu0 %v2413
    %2756 = vmatmul.mubr.f32.gmra.mxu0 %v2412
    %v2757 = vpop.f32.mrf.mxu0
    %v2758 = vadd.f32 %v2688, %v2757
    %v2759 = vpop.f32.mrf.mxu0
    %2760 = vdwg.mxu0
    %2761 = vmatprep.subr.mxu0 0.0
    %2762 = vmatpush1.msra.mxu0 %v2527
    %2763 = vmatprep.subr.mxu0 0.0
    %2764 = vmatpush1.msra.mxu0 %v2526
    %2765 = vmatprep.subr.mxu0 0.0
    %2766 = vmatpush1.msra.mxu0 %v2525
    %2767 = vmatprep.subr.mxu0 0.0
    %2768 = vmatpush1.msra.mxu0 %v2524
    %2769 = vmatprep.subr.mxu0 0.0
    %2770 = vmatpush1.msra.mxu0 %v2523
    %2771 = vmatprep.subr.mxu0 0.0
    %2772 = vmatpush1.msra.mxu0 %v2522
    %2773 = vmatprep.subr.mxu0 0.0
    %2774 = vmatpush1.msra.mxu0 %v2521
    %2775 = vmatprep.subr.mxu0 0.0
    %2776 = vmatpush1.msra.mxu0 %v2520
    %2777 = vmatprep.subr.mxu0 0.0
    %2778 = vmatpush1.msra.mxu0 %v2519
    %2779 = vmatprep.subr.mxu0 0.0
    %2780 = vmatpush1.msra.mxu0 %v2518
    %2781 = vmatprep.subr.mxu0 0.0
    %2782 = vmatpush1.msra.mxu0 %v2517
    %2783 = vmatprep.subr.mxu0 0.0
    %2784 = vmatpush1.msra.mxu0 %v2516
    %2785 = vmatprep.subr.mxu0 0.0
    %2786 = vmatpush1.msra.mxu0 %v2515
    %2787 = vmatprep.subr.mxu0 0.0
    %2788 = vmatpush1.msra.mxu0 %v2514
    %2789 = vmatprep.subr.mxu0 0.0
    %2790 = vmatpush1.msra.mxu0 %v2513
    %2791 = vmatprep.subr.mxu0 0.0
    %2792 = vmatpush1.msra.mxu0 %v2512
    %2793 = vmatprep.subr.mxu0 0.0
    %2794 = vmatpush2.msra.mxu0 %v2543
    %2795 = vmatprep.subr.mxu0 0.0
    %2796 = vmatpush2.msra.mxu0 %v2542
    %2797 = vmatprep.subr.mxu0 0.0
    %2798 = vmatpush2.msra.mxu0 %v2541
    %2799 = vmatprep.subr.mxu0 0.0
    %2800 = vmatpush2.msra.mxu0 %v2540
    %2801 = vmatprep.subr.mxu0 0.0
    %2802 = vmatpush2.msra.mxu0 %v2539
    %2803 = vmatprep.subr.mxu0 0.0
    %2804 = vmatpush2.msra.mxu0 %v2538
    %2805 = vmatprep.subr.mxu0 0.0
    %2806 = vmatpush2.msra.mxu0 %v2537
    %2807 = vmatprep.subr.mxu0 0.0
    %2808 = vmatpush2.msra.mxu0 %v2536
    %2809 = vmatprep.subr.mxu0 0.0
    %2810 = vmatpush2.msra.mxu0 %v2535
    %2811 = vmatprep.subr.mxu0 0.0
    %2812 = vmatpush2.msra.mxu0 %v2534
    %2813 = vmatprep.subr.mxu0 0.0
    %2814 = vmatpush2.msra.mxu0 %v2533
    %2815 = vmatprep.subr.mxu0 0.0
    %2816 = vmatpush2.msra.mxu0 %v2532
    %2817 = vmatprep.subr.mxu0 0.0
    %2818 = vmatpush2.msra.mxu0 %v2531
    %2819 = vmatprep.subr.mxu0 0.0
    %2820 = vmatpush2.msra.mxu0 %v2530
    %2821 = vmatprep.subr.mxu0 0.0
    %2822 = vmatpush2.msra.mxu0 %v2529
    %2823 = vmatprep.subr.mxu0 0.0
    %2824 = vmatpush2.msra.mxu0 %v2528
    %2825 = vmatprep.mubr.f32.mxu0 %v2415
    %2826 = vmatmul.mubr.f32.gmra.mxu0 %v2414
    %v2827 = vpop.f32.mrf.mxu0
    %v2828 = vadd.f32 %v2758, %v2827
    %v2829 = vpop.f32.mrf.mxu0
    %2830 = vdwg.mxu0
    %v2831 = vmax.f32 %v2828, 0.0
    %v2832 = vmin.f32 %v2831, 110.0
    %vm2833 = vcmask 25600
    %2834 = vst.msk [vmem:[#allocation6] sm:$0x3] %vm2833, %v2832
    // Predicated region
    $region58: #{tpu_custom_call.1} parent=1 // pred_check
      _
    $region59: #{tpu_custom_call.1} parent=1 // pred_check_branch
      %2836 = sbr.rel (0) target = $region61
    $region60: #{tpu_custom_call.1} parent=1 // pred_region
      %s2838 = ssub.s32 32, 32
      %2839 = vsyncadd [#allocation5], %s2838
      %s2841 = sshll.u32 [#allocation6], 4
      %s2842 = int_to_ptr.vmem [resolvable:$true] %s2841
      %2844 = dma.vmem_to_hbm [thread:$0]  %s2842, 32, %s13, [#allocation5]
    $region61: #{tpu_custom_call.1} parent=1 // pred_fallthru
      _
    // Predicated region
    $region62: #{tpu_custom_call.1} parent=1 // pred_check
      _
    $region63: #{tpu_custom_call.1} parent=1 // pred_check_branch
      %2846 = sbr.rel (0) target = $region65
    $region64: #{tpu_custom_call.1} parent=1 // pred_region
      %2847 = dma.done [#allocation5], 32
    $region65: #{tpu_custom_call.1} parent=1 // pred_fallthru
      _
    %2848 = vsyncpa [#allocation4], 1
    %2849 = vsyncpa [#allocation5], 1

</llo_original>
